<compile_context>
chip_gen: v7x
topology: tpu7x:2x2x1
jax: 0.10.0
libtpu: 0.0.40
codegen_flags: <defaults>
</compile_context>

<pallas_src>
import functools

import jax
import jax.numpy as jnp
from jax.experimental import pallas as pl
from jax.experimental.pallas import tpu as pltpu


def autopad(k, p=None):
    if p is None:
        p = k // 2 if isinstance(k, int) else [x // 2 for x in k]
    return p


def _conv_bn_act_kernel(x_ref, w_ref, scale_ref, bias_ref, o_ref, *,
                        kh, kw, stride, oh, ow, c_in, c_out, act):
    # x_ref:     (1, Hp, Wp, C_in)   zero-padded NHWC input, one batch element
    # w_ref:     (kh, kw, C_in, C_out)
    # scale_ref: (1, C_out)          fused BN scale = gamma / sqrt(var + eps)
    # bias_ref:  (1, C_out)          fused BN bias  = beta - mean * scale
    # o_ref:     (1, OH, OW, C_out)
    x = x_ref[0]                                          # (Hp, Wp, C_in)

    acc = jnp.zeros((oh * ow, c_out), jnp.float32)
    for ki in range(kh):                                  # static, small
        for kj in range(kw):
            patch = jax.lax.slice(
                x,
                (ki, kj, 0),
                (ki + (oh - 1) * stride + 1,
                 kj + (ow - 1) * stride + 1,
                 c_in),
                (stride, stride, 1))                      # (OH, OW, C_in)
            acc = acc + jnp.dot(patch.reshape(oh * ow, c_in),
                                w_ref[ki, kj],
                                preferred_element_type=jnp.float32)

    # Fused BatchNorm (per-output-channel affine) + Hardswish.
    y = acc * scale_ref[...] + bias_ref[...]              # (OH*OW, C_out)
    if act:
        # Hardswish: y * relu6(y + 3) / 6
        y = y * jnp.clip(y + 3.0, 0.0, 6.0) * (1.0 / 6.0)

    o_ref[0] = y.reshape(oh, ow, c_out).astype(o_ref.dtype)


def conv_bn_hswish(x, weight, gamma, beta, running_mean, running_var, *,
                   stride=1, padding=None, groups=1, eps=1e-5, act=True):
    """Pallas equivalent of Conv.forward (Conv2d + eval-mode BN + Hardswish)."""
    # TODO(synk): grouped / depthwise convolution (groups > 1) not implemented.
    assert groups == 1, "only groups=1 is supported"
    n, c_in, h, w = x.shape
    c_out, c_in_w, kh, kw = weight.shape
    assert c_in_w == c_in
    p = autopad(kh, padding)
    oh = (h + 2 * p - kh) // stride + 1
    ow = (w + 2 * p - kw) // stride + 1
    hp, wp = h + 2 * p, w + 2 * p

    # Fold BatchNorm (eval mode, running statistics) into per-channel scale/bias.
    scale = (gamma / jnp.sqrt(running_var + eps)).astype(jnp.float32)
    bias = (beta - running_mean * scale).astype(jnp.float32)

    # Layout plumbing outside the kernel: NCHW -> padded NHWC, OIHW -> HWIO.
    x_nhwc = jnp.transpose(x, (0, 2, 3, 1))
    x_pad = jnp.pad(x_nhwc, ((0, 0), (p, p), (p, p), (0, 0)))
    w_hwio = jnp.transpose(weight, (2, 3, 1, 0)).astype(x.dtype)
    scale2 = scale.reshape(1, c_out)
    bias2 = bias.reshape(1, c_out)

    kernel = functools.partial(
        _conv_bn_act_kernel,
        kh=kh, kw=kw, stride=stride, oh=oh, ow=ow,
        c_in=c_in, c_out=c_out, act=act)

    flops = 2 * n * oh * ow * c_in * c_out * kh * kw
    bytes_accessed = 4 * (x_pad.size + w_hwio.size + n * oh * ow * c_out + 2 * c_out)

    out_nhwc = pl.pallas_call(
        kernel,
        out_shape=jax.ShapeDtypeStruct((n, oh, ow, c_out), x.dtype),
        grid_spec=pltpu.PrefetchScalarGridSpec(
            num_scalar_prefetch=0,
            grid=(n,),
            in_specs=[
                pl.BlockSpec((1, hp, wp, c_in), lambda b: (b, 0, 0, 0)),
                pl.BlockSpec((kh, kw, c_in, c_out), lambda b: (0, 0, 0, 0)),
                pl.BlockSpec((1, c_out), lambda b: (0, 0)),
                pl.BlockSpec((1, c_out), lambda b: (0, 0)),
            ],
            out_specs=pl.BlockSpec((1, oh, ow, c_out), lambda b: (b, 0, 0, 0)),
        ),
        compiler_params=pltpu.CompilerParams(
            dimension_semantics=("parallel",),
            vmem_limit_bytes=32 * 1024 * 1024,
        ),
        cost_estimate=pl.CostEstimate(
            flops=flops, transcendentals=0, bytes_accessed=bytes_accessed),
    )(x_pad, w_hwio, scale2, bias2)

    # Back to NCHW to match the PyTorch module's output layout.
    return jnp.transpose(out_nhwc, (0, 3, 1, 2))


if __name__ == "__main__":
    key = jax.random.PRNGKey(0)
    kx, kw_, kg, kb, km, kv = jax.random.split(key, 6)

    # Small shapes consistent with Conv(c1=16, c2=32, k=3, s=1): NCHW input.
    n, c1, c2, h, w, k, s = 2, 16, 32, 16, 16, 3, 1
    eps = 1e-5

    x = jax.random.normal(kx, (n, c1, h, w), dtype=jnp.float32)
    weight = jax.random.normal(kw_, (c2, c1, k, k), dtype=jnp.float32) * 0.1
    gamma = jax.random.uniform(kg, (c2,), minval=0.5, maxval=1.5, dtype=jnp.float32)
    beta = jax.random.normal(kb, (c2,), dtype=jnp.float32) * 0.1
    running_mean = jax.random.normal(km, (c2,), dtype=jnp.float32) * 0.1
    running_var = jax.random.uniform(kv, (c2,), minval=0.5, maxval=1.5,
                                     dtype=jnp.float32)

    out = conv_bn_hswish(x, weight, gamma, beta, running_mean, running_var,
                         stride=s, padding=None, groups=1, eps=eps, act=True)
    out = jax.block_until_ready(out)

    # Pure-JAX reference: Conv2d (no bias) + eval-mode BatchNorm + Hardswish.
    ref = jax.lax.conv_general_dilated(
        x, weight, window_strides=(s, s),
        padding=((k // 2, k // 2), (k // 2, k // 2)),
        dimension_numbers=("NCHW", "OIHW", "NCHW"))
    sc = gamma / jnp.sqrt(running_var + eps)
    bs = beta - running_mean * sc
    ref = ref * sc[None, :, None, None] + bs[None, :, None, None]
    ref = ref * jnp.clip(ref + 3.0, 0.0, 6.0) / 6.0

    assert out.shape == (n, c2, h, w)
    assert jnp.allclose(out, ref, atol=1e-4, rtol=1e-4), \
        float(jnp.max(jnp.abs(out - ref)))

    print("KERNEL_OK")
</pallas_src>

<mosaic_0001>
module attributes {stable_mosaic.version = 11 : i64} {
  func.func @_conv_bn_act_kernel(%arg0: i32, %arg1: memref<1x18x18x16xf32, #tpu.memory_space<vmem>>, %arg2: memref<3x3x16x32xf32, #tpu.memory_space<vmem>>, %arg3: memref<1x32xf32, #tpu.memory_space<vmem>>, %arg4: memref<1x32xf32, #tpu.memory_space<vmem>>, %arg5: memref<1x16x16x32xf32, #tpu.memory_space<vmem>>) attributes {dimension_semantics = [#tpu.dimension_semantics<parallel>], iteration_bounds = array<i64: 2>, scalar_prefetch = 0 : i64, scratch_operands = 0 : i64, tpu.core_type = #tpu.core_type<tc>, window_params = [{transform_indices = @transform_0, window_bounds = array<i64: 1, 18, 18, 16>}, {pipeline_mode = #tpu.pipeline_mode<synchronous>, transform_indices = @transform_1, window_bounds = array<i64: 3, 3, 16, 32>}, {pipeline_mode = #tpu.pipeline_mode<synchronous>, transform_indices = @transform_2, window_bounds = array<i64: 1, 32>}, {pipeline_mode = #tpu.pipeline_mode<synchronous>, transform_indices = @transform_3, window_bounds = array<i64: 1, 32>}, {transform_indices = @transform_4, window_bounds = array<i64: 1, 16, 16, 32>}]} {
    %c0 = arith.constant 0 : index
    %c0_0 = arith.constant 0 : index
    %c0_1 = arith.constant 0 : index
    %c0_2 = arith.constant 0 : index
    %0 = vector.load %arg1[%c0, %c0_0, %c0_1, %c0_2] : memref<1x18x18x16xf32, #tpu.memory_space<vmem>>, vector<1x18x18x16xf32>
    %1 = vector.shape_cast %0 : vector<1x18x18x16xf32> to vector<18x18x16xf32>
    %cst = arith.constant 0.000000e+00 : f32
    %2 = vector.broadcast %cst : f32 to vector<256x32xf32>
    %3 = vector.extract_strided_slice %1 {offsets = [0, 0, 0], sizes = [16, 16, 16], strides = [1, 1, 1]} : vector<18x18x16xf32> to vector<16x16x16xf32>
    %4 = vector.shape_cast %3 : vector<16x16x16xf32> to vector<256x16xf32>
    %c0_3 = arith.constant 0 : index
    %c0_4 = arith.constant 0 : index
    %c0_5 = arith.constant 0 : index
    %c0_6 = arith.constant 0 : index
    %5 = vector.load %arg2[%c0_3, %c0_4, %c0_5, %c0_6] : memref<3x3x16x32xf32, #tpu.memory_space<vmem>>, vector<1x1x16x32xf32>
    %6 = vector.shape_cast %5 : vector<1x1x16x32xf32> to vector<16x32xf32>
    %cst_7 = arith.constant dense<0.000000e+00> : vector<256x32xf32>
    %7 = tpu.matmul %4, %6, %cst_7 {dimension_numbers = #tpu.dot_dimension_numbers<[1], [0], [0], [1], [0, 0, 1, 1], [], []>} : vector<256x16xf32>, vector<16x32xf32>, vector<256x32xf32> -> vector<256x32xf32>
    %8 = arith.addf %2, %7 : vector<256x32xf32>
    %9 = vector.extract_strided_slice %1 {offsets = [0, 1, 0], sizes = [16, 16, 16], strides = [1, 1, 1]} : vector<18x18x16xf32> to vector<16x16x16xf32>
    %10 = vector.shape_cast %9 : vector<16x16x16xf32> to vector<256x16xf32>
    %c0_8 = arith.constant 0 : index
    %c1 = arith.constant 1 : index
    %c0_9 = arith.constant 0 : index
    %c0_10 = arith.constant 0 : index
    %11 = vector.load %arg2[%c0_8, %c1, %c0_9, %c0_10] : memref<3x3x16x32xf32, #tpu.memory_space<vmem>>, vector<1x1x16x32xf32>
    %12 = vector.shape_cast %11 : vector<1x1x16x32xf32> to vector<16x32xf32>
    %cst_11 = arith.constant dense<0.000000e+00> : vector<256x32xf32>
    %13 = tpu.matmul %10, %12, %cst_11 {dimension_numbers = #tpu.dot_dimension_numbers<[1], [0], [0], [1], [0, 0, 1, 1], [], []>} : vector<256x16xf32>, vector<16x32xf32>, vector<256x32xf32> -> vector<256x32xf32>
    %14 = arith.addf %8, %13 : vector<256x32xf32>
    %15 = vector.extract_strided_slice %1 {offsets = [0, 2, 0], sizes = [16, 16, 16], strides = [1, 1, 1]} : vector<18x18x16xf32> to vector<16x16x16xf32>
    %16 = vector.shape_cast %15 : vector<16x16x16xf32> to vector<256x16xf32>
    %c0_12 = arith.constant 0 : index
    %c2 = arith.constant 2 : index
    %c0_13 = arith.constant 0 : index
    %c0_14 = arith.constant 0 : index
    %17 = vector.load %arg2[%c0_12, %c2, %c0_13, %c0_14] : memref<3x3x16x32xf32, #tpu.memory_space<vmem>>, vector<1x1x16x32xf32>
    %18 = vector.shape_cast %17 : vector<1x1x16x32xf32> to vector<16x32xf32>
    %cst_15 = arith.constant dense<0.000000e+00> : vector<256x32xf32>
    %19 = tpu.matmul %16, %18, %cst_15 {dimension_numbers = #tpu.dot_dimension_numbers<[1], [0], [0], [1], [0, 0, 1, 1], [], []>} : vector<256x16xf32>, vector<16x32xf32>, vector<256x32xf32> -> vector<256x32xf32>
    %20 = arith.addf %14, %19 : vector<256x32xf32>
    %21 = vector.extract_strided_slice %1 {offsets = [1, 0, 0], sizes = [16, 16, 16], strides = [1, 1, 1]} : vector<18x18x16xf32> to vector<16x16x16xf32>
    %22 = vector.shape_cast %21 : vector<16x16x16xf32> to vector<256x16xf32>
    %c1_16 = arith.constant 1 : index
    %c0_17 = arith.constant 0 : index
    %c0_18 = arith.constant 0 : index
    %c0_19 = arith.constant 0 : index
    %23 = vector.load %arg2[%c1_16, %c0_17, %c0_18, %c0_19] : memref<3x3x16x32xf32, #tpu.memory_space<vmem>>, vector<1x1x16x32xf32>
    %24 = vector.shape_cast %23 : vector<1x1x16x32xf32> to vector<16x32xf32>
    %cst_20 = arith.constant dense<0.000000e+00> : vector<256x32xf32>
    %25 = tpu.matmul %22, %24, %cst_20 {dimension_numbers = #tpu.dot_dimension_numbers<[1], [0], [0], [1], [0, 0, 1, 1], [], []>} : vector<256x16xf32>, vector<16x32xf32>, vector<256x32xf32> -> vector<256x32xf32>
    %26 = arith.addf %20, %25 : vector<256x32xf32>
    %27 = vector.extract_strided_slice %1 {offsets = [1, 1, 0], sizes = [16, 16, 16], strides = [1, 1, 1]} : vector<18x18x16xf32> to vector<16x16x16xf32>
    %28 = vector.shape_cast %27 : vector<16x16x16xf32> to vector<256x16xf32>
    %c1_21 = arith.constant 1 : index
    %c1_22 = arith.constant 1 : index
    %c0_23 = arith.constant 0 : index
    %c0_24 = arith.constant 0 : index
    %29 = vector.load %arg2[%c1_21, %c1_22, %c0_23, %c0_24] : memref<3x3x16x32xf32, #tpu.memory_space<vmem>>, vector<1x1x16x32xf32>
    %30 = vector.shape_cast %29 : vector<1x1x16x32xf32> to vector<16x32xf32>
    %cst_25 = arith.constant dense<0.000000e+00> : vector<256x32xf32>
    %31 = tpu.matmul %28, %30, %cst_25 {dimension_numbers = #tpu.dot_dimension_numbers<[1], [0], [0], [1], [0, 0, 1, 1], [], []>} : vector<256x16xf32>, vector<16x32xf32>, vector<256x32xf32> -> vector<256x32xf32>
    %32 = arith.addf %26, %31 : vector<256x32xf32>
    %33 = vector.extract_strided_slice %1 {offsets = [1, 2, 0], sizes = [16, 16, 16], strides = [1, 1, 1]} : vector<18x18x16xf32> to vector<16x16x16xf32>
    %34 = vector.shape_cast %33 : vector<16x16x16xf32> to vector<256x16xf32>
    %c1_26 = arith.constant 1 : index
    %c2_27 = arith.constant 2 : index
    %c0_28 = arith.constant 0 : index
    %c0_29 = arith.constant 0 : index
    %35 = vector.load %arg2[%c1_26, %c2_27, %c0_28, %c0_29] : memref<3x3x16x32xf32, #tpu.memory_space<vmem>>, vector<1x1x16x32xf32>
    %36 = vector.shape_cast %35 : vector<1x1x16x32xf32> to vector<16x32xf32>
    %cst_30 = arith.constant dense<0.000000e+00> : vector<256x32xf32>
    %37 = tpu.matmul %34, %36, %cst_30 {dimension_numbers = #tpu.dot_dimension_numbers<[1], [0], [0], [1], [0, 0, 1, 1], [], []>} : vector<256x16xf32>, vector<16x32xf32>, vector<256x32xf32> -> vector<256x32xf32>
    %38 = arith.addf %32, %37 : vector<256x32xf32>
    %39 = vector.extract_strided_slice %1 {offsets = [2, 0, 0], sizes = [16, 16, 16], strides = [1, 1, 1]} : vector<18x18x16xf32> to vector<16x16x16xf32>
    %40 = vector.shape_cast %39 : vector<16x16x16xf32> to vector<256x16xf32>
    %c2_31 = arith.constant 2 : index
    %c0_32 = arith.constant 0 : index
    %c0_33 = arith.constant 0 : index
    %c0_34 = arith.constant 0 : index
    %41 = vector.load %arg2[%c2_31, %c0_32, %c0_33, %c0_34] : memref<3x3x16x32xf32, #tpu.memory_space<vmem>>, vector<1x1x16x32xf32>
    %42 = vector.shape_cast %41 : vector<1x1x16x32xf32> to vector<16x32xf32>
    %cst_35 = arith.constant dense<0.000000e+00> : vector<256x32xf32>
    %43 = tpu.matmul %40, %42, %cst_35 {dimension_numbers = #tpu.dot_dimension_numbers<[1], [0], [0], [1], [0, 0, 1, 1], [], []>} : vector<256x16xf32>, vector<16x32xf32>, vector<256x32xf32> -> vector<256x32xf32>
    %44 = arith.addf %38, %43 : vector<256x32xf32>
    %45 = vector.extract_strided_slice %1 {offsets = [2, 1, 0], sizes = [16, 16, 16], strides = [1, 1, 1]} : vector<18x18x16xf32> to vector<16x16x16xf32>
    %46 = vector.shape_cast %45 : vector<16x16x16xf32> to vector<256x16xf32>
    %c2_36 = arith.constant 2 : index
    %c1_37 = arith.constant 1 : index
    %c0_38 = arith.constant 0 : index
    %c0_39 = arith.constant 0 : index
    %47 = vector.load %arg2[%c2_36, %c1_37, %c0_38, %c0_39] : memref<3x3x16x32xf32, #tpu.memory_space<vmem>>, vector<1x1x16x32xf32>
    %48 = vector.shape_cast %47 : vector<1x1x16x32xf32> to vector<16x32xf32>
    %cst_40 = arith.constant dense<0.000000e+00> : vector<256x32xf32>
    %49 = tpu.matmul %46, %48, %cst_40 {dimension_numbers = #tpu.dot_dimension_numbers<[1], [0], [0], [1], [0, 0, 1, 1], [], []>} : vector<256x16xf32>, vector<16x32xf32>, vector<256x32xf32> -> vector<256x32xf32>
    %50 = arith.addf %44, %49 : vector<256x32xf32>
    %51 = vector.extract_strided_slice %1 {offsets = [2, 2, 0], sizes = [16, 16, 16], strides = [1, 1, 1]} : vector<18x18x16xf32> to vector<16x16x16xf32>
    %52 = vector.shape_cast %51 : vector<16x16x16xf32> to vector<256x16xf32>
    %c2_41 = arith.constant 2 : index
    %c2_42 = arith.constant 2 : index
    %c0_43 = arith.constant 0 : index
    %c0_44 = arith.constant 0 : index
    %53 = vector.load %arg2[%c2_41, %c2_42, %c0_43, %c0_44] : memref<3x3x16x32xf32, #tpu.memory_space<vmem>>, vector<1x1x16x32xf32>
    %54 = vector.shape_cast %53 : vector<1x1x16x32xf32> to vector<16x32xf32>
    %cst_45 = arith.constant dense<0.000000e+00> : vector<256x32xf32>
    %55 = tpu.matmul %52, %54, %cst_45 {dimension_numbers = #tpu.dot_dimension_numbers<[1], [0], [0], [1], [0, 0, 1, 1], [], []>} : vector<256x16xf32>, vector<16x32xf32>, vector<256x32xf32> -> vector<256x32xf32>
    %56 = arith.addf %50, %55 : vector<256x32xf32>
    %c0_46 = arith.constant 0 : index
    %c0_47 = arith.constant 0 : index
    %57 = vector.load %arg3[%c0_46, %c0_47] : memref<1x32xf32, #tpu.memory_space<vmem>>, vector<1x32xf32>
    %58 = vector.broadcast %57 : vector<1x32xf32> to vector<256x32xf32>
    %59 = arith.mulf %56, %58 : vector<256x32xf32>
    %c0_48 = arith.constant 0 : index
    %c0_49 = arith.constant 0 : index
    %60 = vector.load %arg4[%c0_48, %c0_49] : memref<1x32xf32, #tpu.memory_space<vmem>>, vector<1x32xf32>
    %61 = vector.broadcast %60 : vector<1x32xf32> to vector<256x32xf32>
    %62 = arith.addf %59, %61 : vector<256x32xf32>
    %cst_50 = arith.constant 3.000000e+00 : f32
    %63 = vector.broadcast %cst_50 : f32 to vector<256x32xf32>
    %64 = arith.addf %62, %63 : vector<256x32xf32>
    %cst_51 = arith.constant 0.000000e+00 : f32
    %cst_52 = arith.constant 6.000000e+00 : f32
    %65 = vector.broadcast %cst_51 : f32 to vector<256x32xf32>
    %66 = arith.maximumf %65, %64 : vector<256x32xf32>
    %67 = vector.broadcast %cst_52 : f32 to vector<256x32xf32>
    %68 = arith.minimumf %67, %66 : vector<256x32xf32>
    %69 = arith.mulf %62, %68 : vector<256x32xf32>
    %cst_53 = arith.constant 0.166666672 : f32
    %70 = vector.broadcast %cst_53 : f32 to vector<256x32xf32>
    %71 = arith.mulf %69, %70 : vector<256x32xf32>
    %72 = vector.shape_cast %71 : vector<256x32xf32> to vector<16x16x32xf32>
    %c0_54 = arith.constant 0 : index
    %c0_55 = arith.constant 0 : index
    %c0_56 = arith.constant 0 : index
    %c0_57 = arith.constant 0 : index
    %73 = vector.load %arg5[%c0_54, %c0_55, %c0_56, %c0_57] : memref<1x16x16x32xf32, #tpu.memory_space<vmem>>, vector<1x16x16x32xf32>
    %74 = vector.shape_cast %73 : vector<1x16x16x32xf32> to vector<16x16x32xf32>
    %75 = vector.shape_cast %72 : vector<16x16x32xf32> to vector<1x16x16x32xf32>
    tpu.vector_store %arg5[%c0_54, %c0_55, %c0_56, %c0_57], %75 {strides = array<i32>} : memref<1x16x16x32xf32, #tpu.memory_space<vmem>>, vector<1x16x16x32xf32>,
    return
  }
  func.func @transform_0(%arg0: i32) -> (i32, i32, i32, i32) {
    %c0_i32 = arith.constant 0 : i32
    %c0_i32_0 = arith.constant 0 : i32
    %c0_i32_1 = arith.constant 0 : i32
    %c0_i32_2 = arith.constant 0 : i32
    return %arg0, %c0_i32, %c0_i32_0, %c0_i32_1 : i32, i32, i32, i32
  }
  func.func @transform_1(%arg0: i32) -> (i32, i32, i32, i32) {
    %c0_i32 = arith.constant 0 : i32
    %c0_i32_0 = arith.constant 0 : i32
    %c0_i32_1 = arith.constant 0 : i32
    %c0_i32_2 = arith.constant 0 : i32
    %c0_i32_3 = arith.constant 0 : i32
    return %c0_i32, %c0_i32_0, %c0_i32_1, %c0_i32_2 : i32, i32, i32, i32
  }
  func.func @transform_2(%arg0: i32) -> (i32, i32) {
    %c0_i32 = arith.constant 0 : i32
    %c0_i32_0 = arith.constant 0 : i32
    %c0_i32_1 = arith.constant 0 : i32
    return %c0_i32, %c0_i32_0 : i32, i32
  }
  func.func @transform_3(%arg0: i32) -> (i32, i32) {
    %c0_i32 = arith.constant 0 : i32
    %c0_i32_0 = arith.constant 0 : i32
    %c0_i32_1 = arith.constant 0 : i32
    return %c0_i32, %c0_i32_0 : i32, i32
  }
  func.func @transform_4(%arg0: i32) -> (i32, i32, i32, i32) {
    %c0_i32 = arith.constant 0 : i32
    %c0_i32_0 = arith.constant 0 : i32
    %c0_i32_1 = arith.constant 0 : i32
    %c0_i32_2 = arith.constant 0 : i32
    return %arg0, %c0_i32, %c0_i32_0, %c0_i32_1 : i32, i32, i32, i32
  }
}

</mosaic_0001>

<llo_original>
// kernel: tpu_custom_call.1
$region0: #{tpu_custom_call.1}
  #allocation0 [shape = 'u32[]', space=smem, size = 0x4, offset = 0x4, fixed_abs, tag = 'smem constant byte address 0x4 - core index']
  #allocation1 [shape = 'u32[144,128]{1,0:T(1,128)}', space=vmem, size = 0x12000, scoped, tag = 'internal scratch']
  %s0 = inlined_call_operand.vmem [shape: f32[2,18,18,16], index: 0, kind: input, shape index: {}]
  %s1 = inlined_call_operand.vmem [shape: f32[3,3,16,32], index: 1, kind: input, shape index: {}]
  %s2 = inlined_call_operand.vmem [shape: f32[1,32], index: 2, kind: input, shape index: {}]
  %s3 = inlined_call_operand.vmem [shape: f32[1,32], index: 3, kind: input, shape index: {}]
  %s4 = inlined_call_operand.hbm [shape: f32[2,16,16,32], index: 4, kind: output, shape index: {}]
  %s5 = sld [smem:[#allocation0]]
  $region49: #{tpu_custom_call.1} parent=0
    _
  %s7 = ssub.s32 1, %s5
  %s8 = scalar_select 0, %s7, %s5
  $region1: #{tpu_custom_call.1} parent=0
    #allocation2 [shape = 'u8[262144]{0}', space=vmem, size = 0x40000, scoped, tag = 'output window, operand 0']
    #allocation3 [shape = 's32[2]{0}', space=sflag, size = 0x8, scoped, tag = 'scoped memory for tpu_custom_call.1']
    %9 = vsyncpa [#allocation3], 0
    %s10 = scalar_lea.sflag [#allocation3], 1
    %11 = vsyncpa %s10, 0
    loop: start=0, step=1, limit=4
    $region2: #{tpu_custom_call.1} parent=1 // loop_pre_header
      _
    $region3: #{tpu_custom_call.1} parent=1 // loop_header
      %s13 = sphi 0, %s17
      %p14 = scmp.ge.s32.totalorder %s13, 4
      %s23 = sphi 0, %s25
      %s26 = sphi 0, %s23
      %s27 = sphi 0, %s26
      %s43 = sphi 0, %s27
      %s47 = sphi 0, %s47
      %s49 = sphi 0, %s47
      %s50 = sphi 0, %s49
      %s64 = sphi 0, %s50
      %s68 = sphi 0, %s68
      %s70 = sphi 0, %s68
      %s71 = sphi 0, %s70
      %s85 = sphi 0, %s71
      %s89 = sphi 0, %s89
      %s91 = sphi 0, %s89
      %s92 = sphi 0, %s91
      %s106 = sphi 0, %s92
      %s112 = sphi 0, %s114
      %s115 = sphi 0, %s112
      %s116 = sphi 0, %s115
      %s132 = sphi 0, %s116
    $region4: #{tpu_custom_call.1} parent=1 // loop_header_branch
      %16 = sbr.rel (%p14) target = $region8
    $region5: #{tpu_custom_call.1} parent=1 // loop_body
      %s18 = ssub.s32 %s13, 1
      %s19 = ssub.s32 %s13, 2
      %s20 = sadd.s32 %s13, 1
      %s21 = ssub.s32 %s13, %s20
      %p22 = scmp.eq.s32.totalorder %s21, 0
      %s24 = sadd.s32 %s23, 1
      %s25 = scalar_select %p22, %s23, %s24
      %p28 = pneg %p22
      %p29 = scmp.eq.s32.totalorder %s13, 1
      %p30 = por %p28, %p29
      %p31 = scmp.ne.s32.totalorder %s23, %s26
      %p32 = scmp.eq.s32.totalorder %s13, 0
      %p33 = por %p31, %p32
      %p34 = scmp.ne.s32.totalorder %s23, %s26
      %p35 = scmp.eq.s32.totalorder %s18, 1
      %p36 = por %p34, %p35
      %p37 = scmp.ne.s32.totalorder %s26, %s27
      %p38 = scmp.eq.s32.totalorder %s18, 0
      %p39 = por %p37, %p38
      %p40 = scmp.ne.s32.totalorder %s26, %s27
      %p41 = scmp.eq.s32.totalorder %s19, 1
      %p42 = por %p40, %p41
      %p44 = scmp.ne.s32.totalorder %s27, %s43
      %p45 = scmp.eq.s32.totalorder %s19, 0
      %p46 = por %p44, %p45
      %s48 = sadd.s32 %s47, 1
      %p51 = scmp.eq.s32.totalorder %s13, 1
      %p52 = scmp.ne.s32.totalorder %s47, %s49
      %p53 = scmp.eq.s32.totalorder %s13, 0
      %p54 = por %p52, %p53
      %p55 = scmp.ne.s32.totalorder %s47, %s49
      %p56 = scmp.eq.s32.totalorder %s18, 1
      %p57 = por %p55, %p56
      %p58 = scmp.ne.s32.totalorder %s49, %s50
      %p59 = scmp.eq.s32.totalorder %s18, 0
      %p60 = por %p58, %p59
      %p61 = scmp.ne.s32.totalorder %s49, %s50
      %p62 = scmp.eq.s32.totalorder %s19, 1
      %p63 = por %p61, %p62
      %p65 = scmp.ne.s32.totalorder %s50, %s64
      %p66 = scmp.eq.s32.totalorder %s19, 0
      %p67 = por %p65, %p66
      %s69 = sadd.s32 %s68, 1
      %p72 = scmp.eq.s32.totalorder %s13, 1
      %p73 = scmp.ne.s32.totalorder %s68, %s70
      %p74 = scmp.eq.s32.totalorder %s13, 0
      %p75 = por %p73, %p74
      %p76 = scmp.ne.s32.totalorder %s68, %s70
      %p77 = scmp.eq.s32.totalorder %s18, 1
      %p78 = por %p76, %p77
      %p79 = scmp.ne.s32.totalorder %s70, %s71
      %p80 = scmp.eq.s32.totalorder %s18, 0
      %p81 = por %p79, %p80
      %p82 = scmp.ne.s32.totalorder %s70, %s71
      %p83 = scmp.eq.s32.totalorder %s19, 1
      %p84 = por %p82, %p83
      %p86 = scmp.ne.s32.totalorder %s71, %s85
      %p87 = scmp.eq.s32.totalorder %s19, 0
      %p88 = por %p86, %p87
      %s90 = sadd.s32 %s89, 1
      %p93 = scmp.eq.s32.totalorder %s13, 1
      %p94 = scmp.ne.s32.totalorder %s89, %s91
      %p95 = scmp.eq.s32.totalorder %s13, 0
      %p96 = por %p94, %p95
      %p97 = scmp.ne.s32.totalorder %s89, %s91
      %p98 = scmp.eq.s32.totalorder %s18, 1
      %p99 = por %p97, %p98
      %p100 = scmp.ne.s32.totalorder %s91, %s92
      %p101 = scmp.eq.s32.totalorder %s18, 0
      %p102 = por %p100, %p101
      %p103 = scmp.ne.s32.totalorder %s91, %s92
      %p104 = scmp.eq.s32.totalorder %s19, 1
      %p105 = por %p103, %p104
      %p107 = scmp.ne.s32.totalorder %s92, %s106
      %p108 = scmp.eq.s32.totalorder %s19, 0
      %p109 = por %p107, %p108
      %s110 = ssub.s32 %s13, %s20
      %p111 = scmp.eq.s32.totalorder %s110, 0
      %s113 = sadd.s32 %s112, 1
      %s114 = scalar_select %p111, %s112, %s113
      %p117 = pneg %p111
      %p118 = scmp.eq.s32.totalorder %s13, 1
      %p119 = por %p117, %p118
      %p120 = scmp.ne.s32.totalorder %s112, %s115
      %p121 = scmp.eq.s32.totalorder %s13, 0
      %p122 = por %p120, %p121
      %p123 = scmp.ne.s32.totalorder %s112, %s115
      %p124 = scmp.eq.s32.totalorder %s18, 1
      %p125 = por %p123, %p124
      %p126 = scmp.ne.s32.totalorder %s115, %s116
      %p127 = scmp.eq.s32.totalorder %s18, 0
      %p128 = por %p126, %p127
      %p129 = scmp.ne.s32.totalorder %s115, %s116
      %p130 = scmp.eq.s32.totalorder %s19, 1
      %p131 = por %p129, %p130
      %p133 = scmp.ne.s32.totalorder %s116, %s132
      %p134 = scmp.eq.s32.totalorder %s19, 0
      %p135 = por %p133, %p134
      %p136 = scmp.le.s32.totalorder 1, %s13
      %p137 = scmp.lt.s32.totalorder %s13, 3
      %p138 = pnand %p136, %p137
      %p139 = pneg %p138
      // Predicated region
      $region9: #{tpu_custom_call.1} parent=5 // pred_check
        _
      $region10: #{tpu_custom_call.1} parent=5 // pred_check_branch
        %141 = sbr.rel (%p138) target = $region12
      $region11: #{tpu_custom_call.1} parent=5 // pred_region
        %s142 = ssub.s32 %s13, 1
        // Predicated region
        $region13: #{tpu_custom_call.1} parent=11 // pred_check
          %p143 = pneg %p60
        $region14: #{tpu_custom_call.1} parent=11 // pred_check_branch
          %145 = sbr.rel (%p143) target = $region16
        $region15: #{tpu_custom_call.1} parent=11 // pred_region
          _
        $region16: #{tpu_custom_call.1} parent=11 // pred_fallthru
          _
        // Predicated region
        $region17: #{tpu_custom_call.1} parent=11 // pred_check
          %p146 = pneg %p81
        $region18: #{tpu_custom_call.1} parent=11 // pred_check_branch
          %148 = sbr.rel (%p146) target = $region20
        $region19: #{tpu_custom_call.1} parent=11 // pred_region
          _
        $region20: #{tpu_custom_call.1} parent=11 // pred_fallthru
          _
        // Predicated region
        $region21: #{tpu_custom_call.1} parent=11 // pred_check
          %p149 = pneg %p102
        $region22: #{tpu_custom_call.1} parent=11 // pred_check_branch
          %151 = sbr.rel (%p149) target = $region24
        $region23: #{tpu_custom_call.1} parent=11 // pred_region
          _
        $region24: #{tpu_custom_call.1} parent=11 // pred_fallthru
          _
      $region12: #{tpu_custom_call.1} parent=5 // pred_fallthru
        _
      %p152 = scmp.lt.s32.totalorder %s13, 2
      // Predicated region
      $region25: #{tpu_custom_call.1} parent=5 // pred_check
        %p153 = pneg %p152
      $region26: #{tpu_custom_call.1} parent=5 // pred_check_branch
        %155 = sbr.rel (%p153) target = $region28
      $region27: #{tpu_custom_call.1} parent=5 // pred_region
        // Predicated region
        $region29: #{tpu_custom_call.1} parent=27 // pred_check
          %p156 = pneg %p33
        $region30: #{tpu_custom_call.1} parent=27 // pred_check_branch
          %158 = sbr.rel (%p156) target = $region32
        $region31: #{tpu_custom_call.1} parent=27 // pred_region
          %p159 = scmp.lt.s32.totalorder %s13, 1
          %s160 = scalar_select %p159, %s13, 1
          %s161 = smul.addr %s160, 54
          %s162 = smul.addr %s161, 8
          %s163 = scalar_lea.vmem %s0, %s162
        $region32: #{tpu_custom_call.1} parent=27 // pred_fallthru
          _
      $region28: #{tpu_custom_call.1} parent=5 // pred_fallthru
        _
      %p164 = scmp.le.s32.totalorder 1, %s13
      %p165 = scmp.lt.s32.totalorder %s13, 3
      %p166 = pnand %p164, %p165
      %p167 = pneg %p166
      // Predicated region
      $region33: #{tpu_custom_call.1} parent=5 // pred_check
        _
      $region34: #{tpu_custom_call.1} parent=5 // pred_check_branch
        %169 = sbr.rel (%p166) target = $region36
      $region35: #{tpu_custom_call.1} parent=5 // pred_region
        %s170 = ssub.s32 %s13, 1
        %p171 = scmp.lt.s32.totalorder %s18, 1
        %s172 = scalar_select %p171, %s18, 1
        %s173 = smul.addr %s172, 54
        %s174 = smul.addr %s173, 8
        %s175 = scalar_lea.vmem %s0, %s174
        %p176 = pneg %p39
        %p177 = pneg %p36
        %p178 = pneg %p60
        %p179 = pneg %p57
        %p180 = pneg %p81
        %p181 = pneg %p78
        %p182 = pneg %p102
        %p183 = pneg %p99
        %p184 = pneg %p128
        %p185 = pneg %p125
        %s186 = sand.u32 %s115, 1
        %s187 = scalar_lea.sflag [#allocation3], %s186
        %s188 = sand.u32 %s115, 1
        %s189 = smul.addr %s188, 256
        %s190 = scalar_lea.vmem [#allocation2], %s189
        %p191 = scmp.lt.s32.totalorder %s18, 1
        %s192 = scalar_select %p191, %s18, 1
        %s193 = smul.addr %s192, 54
        %s194 = smul.addr %s193, 8
        %s195 = scalar_lea.vmem %s0, %s194
        %v196 = vld [vmem:[%s195] sm:$0xff]
        %v197 = vld [vmem:[%s195 + $0x8] sm:$0xff]
        %v198 = vld [vmem:[%s195 + $0x10] sm:$0x3]
        %v199 = vld [vmem:[%s195 + $0x18] sm:$0xff]
        %v200 = vld [vmem:[%s195 + $0x20] sm:$0xff]
        %v201 = vld [vmem:[%s195 + $0x28] sm:$0x3]
        %v202 = vld [vmem:[%s195 + $0x30] sm:$0xff]
        %v203 = vld [vmem:[%s195 + $0x38] sm:$0xff]
        %v204 = vld [vmem:[%s195 + $0x40] sm:$0x3]
        %v205 = vld [vmem:[%s195 + $0x48] sm:$0xff]
        %v206 = vld [vmem:[%s195 + $0x50] sm:$0xff]
        %v207 = vld [vmem:[%s195 + $0x58] sm:$0x3]
        %v208 = vld [vmem:[%s195 + $0x60] sm:$0xff]
        %v209 = vld [vmem:[%s195 + $0x68] sm:$0xff]
        %v210 = vld [vmem:[%s195 + $0x70] sm:$0x3]
        %v211 = vld [vmem:[%s195 + $0x78] sm:$0xff]
        %v212 = vld [vmem:[%s195 + $0x80] sm:$0xff]
        %v213 = vld [vmem:[%s195 + $0x88] sm:$0x3]
        %v214 = vld [vmem:[%s195 + $0x90] sm:$0xff]
        %v215 = vld [vmem:[%s195 + $0x98] sm:$0xff]
        %v216 = vld [vmem:[%s195 + $0xa0] sm:$0x3]
        %v217 = vld [vmem:[%s195 + $0xa8] sm:$0xff]
        %v218 = vld [vmem:[%s195 + $0xb0] sm:$0xff]
        %v219 = vld [vmem:[%s195 + $0xb8] sm:$0x3]
        %v220 = vld [vmem:[%s195 + $0xc0] sm:$0xff]
        %v221 = vld [vmem:[%s195 + $0xc8] sm:$0xff]
        %v222 = vld [vmem:[%s195 + $0xd0] sm:$0x3]
        %v223 = vld [vmem:[%s195 + $0xd8] sm:$0xff]
        %v224 = vld [vmem:[%s195 + $0xe0] sm:$0xff]
        %v225 = vld [vmem:[%s195 + $0xe8] sm:$0x3]
        %v226 = vld [vmem:[%s195 + $0xf0] sm:$0xff]
        %v227 = vld [vmem:[%s195 + $0xf8] sm:$0xff]
        %v228 = vld [vmem:[%s195 + $0x100] sm:$0x3]
        %v229 = vld [vmem:[%s195 + $0x108] sm:$0xff]
        %v230 = vld [vmem:[%s195 + $0x110] sm:$0xff]
        %v231 = vld [vmem:[%s195 + $0x118] sm:$0x3]
        %v232 = vld [vmem:[%s195 + $0x120] sm:$0xff]
        %v233 = vld [vmem:[%s195 + $0x128] sm:$0xff]
        %v234 = vld [vmem:[%s195 + $0x130] sm:$0x3]
        %v235 = vld [vmem:[%s195 + $0x138] sm:$0xff]
        %v236 = vld [vmem:[%s195 + $0x140] sm:$0xff]
        %v237 = vld [vmem:[%s195 + $0x148] sm:$0x3]
        %v238 = vld [vmem:[%s195 + $0x150] sm:$0xff]
        %v239 = vld [vmem:[%s195 + $0x158] sm:$0xff]
        %v240 = vld [vmem:[%s195 + $0x160] sm:$0x3]
        %v241 = vld [vmem:[%s195 + $0x168] sm:$0xff]
        %v242 = vld [vmem:[%s195 + $0x170] sm:$0xff]
        %v243 = vld [vmem:[%s195 + $0x178] sm:$0x3]
        %v244 = vld [vmem:[%s195 + $0x180] sm:$0xff]
        %v245 = vld [vmem:[%s195 + $0x188] sm:$0xff]
        %v246 = vld [vmem:[%s195 + $0x190] sm:$0x3]
        %v247 = vld [vmem:[%s195 + $0x198] sm:$0xff]
        %v248 = vld [vmem:[%s195 + $0x1a0] sm:$0xff]
        %v249 = vld [vmem:[%s195 + $0x1a8] sm:$0x3]
        %v250 = vld [vmem:[%s1] sm:$0xff]
        %v251 = vld [vmem:[%s1 + $0x8] sm:$0xff]
        %vm300 = vcmask 1046528
        %v301 = vrot.slane %v196, 1
        %v302 = vrot.slane %v197, 1
        %v303 = vsel %vm300, %v301, %v302
        %v304 = vrot.slane %v198, 1
        %v305 = vsel %vm300, %v302, %v304
        %v306 = vrot.slane %v199, 1
        %v307 = vrot.slane %v200, 1
        %v308 = vsel %vm300, %v306, %v307
        %v309 = vrot.slane %v201, 1
        %v310 = vsel %vm300, %v307, %v309
        %v311 = vrot.slane %v202, 1
        %v312 = vrot.slane %v203, 1
        %v313 = vsel %vm300, %v311, %v312
        %v314 = vrot.slane %v204, 1
        %v315 = vsel %vm300, %v312, %v314
        %v316 = vrot.slane %v205, 1
        %v317 = vrot.slane %v206, 1
        %v318 = vsel %vm300, %v316, %v317
        %v319 = vrot.slane %v207, 1
        %v320 = vsel %vm300, %v317, %v319
        %v321 = vrot.slane %v208, 1
        %v322 = vrot.slane %v209, 1
        %v323 = vsel %vm300, %v321, %v322
        %v324 = vrot.slane %v210, 1
        %v325 = vsel %vm300, %v322, %v324
        %v326 = vrot.slane %v211, 1
        %v327 = vrot.slane %v212, 1
        %v328 = vsel %vm300, %v326, %v327
        %v329 = vrot.slane %v213, 1
        %v330 = vsel %vm300, %v327, %v329
        %v331 = vrot.slane %v214, 1
        %v332 = vrot.slane %v215, 1
        %v333 = vsel %vm300, %v331, %v332
        %v334 = vrot.slane %v216, 1
        %v335 = vsel %vm300, %v332, %v334
        %v336 = vrot.slane %v217, 1
        %v337 = vrot.slane %v218, 1
        %v338 = vsel %vm300, %v336, %v337
        %v339 = vrot.slane %v219, 1
        %v340 = vsel %vm300, %v337, %v339
        %v341 = vrot.slane %v220, 1
        %v342 = vrot.slane %v221, 1
        %v343 = vsel %vm300, %v341, %v342
        %v344 = vrot.slane %v222, 1
        %v345 = vsel %vm300, %v342, %v344
        %v346 = vrot.slane %v223, 1
        %v347 = vrot.slane %v224, 1
        %v348 = vsel %vm300, %v346, %v347
        %v349 = vrot.slane %v225, 1
        %v350 = vsel %vm300, %v347, %v349
        %v351 = vrot.slane %v226, 1
        %v352 = vrot.slane %v227, 1
        %v353 = vsel %vm300, %v351, %v352
        %v354 = vrot.slane %v228, 1
        %v355 = vsel %vm300, %v352, %v354
        %v356 = vrot.slane %v229, 1
        %v357 = vrot.slane %v230, 1
        %v358 = vsel %vm300, %v356, %v357
        %v359 = vrot.slane %v231, 1
        %v360 = vsel %vm300, %v357, %v359
        %v361 = vrot.slane %v232, 1
        %v362 = vrot.slane %v233, 1
        %v363 = vsel %vm300, %v361, %v362
        %v364 = vrot.slane %v234, 1
        %v365 = vsel %vm300, %v362, %v364
        %v366 = vrot.slane %v235, 1
        %v367 = vrot.slane %v236, 1
        %v368 = vsel %vm300, %v366, %v367
        %v369 = vrot.slane %v237, 1
        %v370 = vsel %vm300, %v367, %v369
        %v371 = vrot.slane %v238, 1
        %v372 = vrot.slane %v239, 1
        %v373 = vsel %vm300, %v371, %v372
        %v374 = vrot.slane %v240, 1
        %v375 = vsel %vm300, %v372, %v374
        %v376 = vrot.slane %v241, 1
        %v377 = vrot.slane %v242, 1
        %v378 = vsel %vm300, %v376, %v377
        %v379 = vrot.slane %v243, 1
        %v380 = vsel %vm300, %v377, %v379
        %s381 = scalar_lea.vmem %s1, 16
        %v382 = vld [vmem:[%s381] sm:$0xff]
        %v383 = vld [vmem:[%s381 + $0x8] sm:$0xff]
        %vm384 = vcmask 130048
        %v385 = vsel %vm384, %v303, 0
        %v387 = vsel %vm384, %v305, 0
        %v389 = vsel %vm384, %v308, 0
        %v391 = vsel %vm384, %v310, 0
        %v393 = vsel %vm384, %v313, 0
        %v395 = vsel %vm384, %v315, 0
        %v397 = vsel %vm384, %v318, 0
        %v399 = vsel %vm384, %v320, 0
        %v401 = vsel %vm384, %v323, 0
        %v403 = vsel %vm384, %v325, 0
        %v405 = vsel %vm384, %v328, 0
        %v407 = vsel %vm384, %v330, 0
        %v409 = vsel %vm384, %v333, 0
        %v411 = vsel %vm384, %v335, 0
        %v413 = vsel %vm384, %v338, 0
        %v415 = vsel %vm384, %v340, 0
        %v417 = vsel %vm384, %v343, 0
        %v419 = vsel %vm384, %v345, 0
        %v421 = vsel %vm384, %v348, 0
        %v423 = vsel %vm384, %v350, 0
        %v425 = vsel %vm384, %v353, 0
        %v427 = vsel %vm384, %v355, 0
        %v429 = vsel %vm384, %v358, 0
        %v431 = vsel %vm384, %v360, 0
        %v433 = vsel %vm384, %v363, 0
        %v435 = vsel %vm384, %v365, 0
        %v437 = vsel %vm384, %v368, 0
        %v439 = vsel %vm384, %v370, 0
        %v441 = vsel %vm384, %v373, 0
        %v443 = vsel %vm384, %v375, 0
        %v445 = vsel %vm384, %v378, 0
        %v447 = vsel %vm384, %v380, 0
        %449 = vmatprep.subr.mxu0 0.0
        %450 = vmatpush1.msra.mxu0 %v382
        %451 = vmatprep.subr.mxu0 0.0
        %452 = vmatpush1.msra.mxu0 %v383
        %453 = vmatprep.subr.mxu0 0.0
        %454 = vmatpush1.msra.mxu0 0.0
        %455 = vmatprep.subr.mxu0 0.0
        %456 = vmatpush1.msra.mxu0 0.0
        %457 = vmatprep.subr.mxu0 0.0
        %458 = vmatpush1.msra.mxu0 0.0
        %459 = vmatprep.subr.mxu0 0.0
        %460 = vmatpush1.msra.mxu0 0.0
        %461 = vmatprep.subr.mxu0 0.0
        %462 = vmatpush1.msra.mxu0 0.0
        %463 = vmatprep.subr.mxu0 0.0
        %464 = vmatpush1.msra.mxu0 0.0
        %465 = vmatprep.subr.mxu0 0.0
        %466 = vmatpush1.msra.mxu0 0.0
        %467 = vmatprep.subr.mxu0 0.0
        %468 = vmatpush1.msra.mxu0 0.0
        %469 = vmatprep.subr.mxu0 0.0
        %470 = vmatpush1.msra.mxu0 0.0
        %471 = vmatprep.subr.mxu0 0.0
        %472 = vmatpush1.msra.mxu0 0.0
        %473 = vmatprep.subr.mxu0 0.0
        %474 = vmatpush1.msra.mxu0 0.0
        %475 = vmatprep.subr.mxu0 0.0
        %476 = vmatpush1.msra.mxu0 0.0
        %477 = vmatprep.subr.mxu0 0.0
        %478 = vmatpush1.msra.mxu0 0.0
        %479 = vmatprep.subr.mxu0 0.0
        %480 = vmatpush1.msra.mxu0 0.0
        %481 = vmatprep.subr.mxu0 0.0
        %482 = vmatpush1.msra.mxu0 0.0
        %483 = vmatprep.subr.mxu0 0.0
        %484 = vmatpush1.msra.mxu0 0.0
        %485 = vmatprep.subr.mxu0 0.0
        %486 = vmatpush1.msra.mxu0 0.0
        %487 = vmatprep.subr.mxu0 0.0
        %488 = vmatpush1.msra.mxu0 0.0
        %489 = vmatprep.subr.mxu0 0.0
        %490 = vmatpush1.msra.mxu0 0.0
        %491 = vmatprep.subr.mxu0 0.0
        %492 = vmatpush1.msra.mxu0 0.0
        %493 = vmatprep.subr.mxu0 0.0
        %494 = vmatpush1.msra.mxu0 0.0
        %495 = vmatprep.subr.mxu0 0.0
        %496 = vmatpush1.msra.mxu0 0.0
        %497 = vmatprep.subr.mxu0 0.0
        %498 = vmatpush1.msra.mxu0 0.0
        %499 = vmatprep.subr.mxu0 0.0
        %500 = vmatpush1.msra.mxu0 0.0
        %501 = vmatprep.subr.mxu0 0.0
        %502 = vmatpush1.msra.mxu0 0.0
        %503 = vmatprep.subr.mxu0 0.0
        %504 = vmatpush1.msra.mxu0 0.0
        %505 = vmatprep.subr.mxu0 0.0
        %506 = vmatpush1.msra.mxu0 0.0
        %507 = vmatprep.subr.mxu0 0.0
        %508 = vmatpush1.msra.mxu0 0.0
        %509 = vmatprep.subr.mxu0 0.0
        %510 = vmatpush1.msra.mxu0 0.0
        %511 = vmatprep.subr.mxu0 0.0
        %512 = vmatpush1.msra.mxu0 0.0
        %513 = vmatprep.mubr.f32.mxu0 0.0
        %514 = vmatmul.mubr.f32.gmra.mrb[0].mxu0 %v385
        %v515 = vpop.f32.mrb[0].mxu0
        %v516 = vadd.f32 0.0, %v515
        %v517 = vpop.f32.mrb[0].mxu0
        %518 = vmatprep.mubr.f32.mxu0 0.0
        %519 = vmatmul.mubr.f32.gmra.mrb[0].mxu0 %v387
        %v520 = vpop.f32.mrb[0].mxu0
        %v521 = vadd.f32 0.0, %v520
        %v522 = vpop.f32.mrb[0].mxu0
        %523 = vmatprep.mubr.f32.mxu0 0.0
        %524 = vmatmul.mubr.f32.gmra.mrb[0].mxu0 %v389
        %v525 = vpop.f32.mrb[0].mxu0
        %v526 = vadd.f32 0.0, %v525
        %v527 = vpop.f32.mrb[0].mxu0
        %528 = vmatprep.mubr.f32.mxu0 0.0
        %529 = vmatmul.mubr.f32.gmra.mrb[0].mxu0 %v391
        %v530 = vpop.f32.mrb[0].mxu0
        %v531 = vadd.f32 0.0, %v530
        %v532 = vpop.f32.mrb[0].mxu0
        %533 = vmatprep.mubr.f32.mxu0 0.0
        %534 = vmatmul.mubr.f32.gmra.mrb[0].mxu0 %v393
        %v535 = vpop.f32.mrb[0].mxu0
        %v536 = vadd.f32 0.0, %v535
        %v537 = vpop.f32.mrb[0].mxu0
        %538 = vmatprep.mubr.f32.mxu0 0.0
        %539 = vmatmul.mubr.f32.gmra.mrb[0].mxu0 %v395
        %v540 = vpop.f32.mrb[0].mxu0
        %v541 = vadd.f32 0.0, %v540
        %v542 = vpop.f32.mrb[0].mxu0
        %543 = vmatprep.mubr.f32.mxu0 0.0
        %544 = vmatmul.mubr.f32.gmra.mrb[0].mxu0 %v397
        %v545 = vpop.f32.mrb[0].mxu0
        %v546 = vadd.f32 0.0, %v545
        %v547 = vpop.f32.mrb[0].mxu0
        %548 = vmatprep.mubr.f32.mxu0 0.0
        %549 = vmatmul.mubr.f32.gmra.mrb[0].mxu0 %v399
        %v550 = vpop.f32.mrb[0].mxu0
        %v551 = vadd.f32 0.0, %v550
        %v552 = vpop.f32.mrb[0].mxu0
        %553 = vmatprep.mubr.f32.mxu0 0.0
        %554 = vmatmul.mubr.f32.gmra.mrb[0].mxu0 %v401
        %v555 = vpop.f32.mrb[0].mxu0
        %v556 = vadd.f32 0.0, %v555
        %v557 = vpop.f32.mrb[0].mxu0
        %558 = vmatprep.mubr.f32.mxu0 0.0
        %559 = vmatmul.mubr.f32.gmra.mrb[0].mxu0 %v403
        %v560 = vpop.f32.mrb[0].mxu0
        %v561 = vadd.f32 0.0, %v560
        %v562 = vpop.f32.mrb[0].mxu0
        %563 = vmatprep.mubr.f32.mxu0 0.0
        %564 = vmatmul.mubr.f32.gmra.mrb[0].mxu0 %v405
        %v565 = vpop.f32.mrb[0].mxu0
        %v566 = vadd.f32 0.0, %v565
        %v567 = vpop.f32.mrb[0].mxu0
        %568 = vmatprep.mubr.f32.mxu0 0.0
        %569 = vmatmul.mubr.f32.gmra.mrb[0].mxu0 %v407
        %v570 = vpop.f32.mrb[0].mxu0
        %v571 = vadd.f32 0.0, %v570
        %v572 = vpop.f32.mrb[0].mxu0
        %573 = vmatprep.mubr.f32.mxu0 0.0
        %574 = vmatmul.mubr.f32.gmra.mrb[0].mxu0 %v409
        %v575 = vpop.f32.mrb[0].mxu0
        %v576 = vadd.f32 0.0, %v575
        %v577 = vpop.f32.mrb[0].mxu0
        %578 = vmatprep.mubr.f32.mxu0 0.0
        %579 = vmatmul.mubr.f32.gmra.mrb[0].mxu0 %v411
        %v580 = vpop.f32.mrb[0].mxu0
        %v581 = vadd.f32 0.0, %v580
        %v582 = vpop.f32.mrb[0].mxu0
        %583 = vmatprep.mubr.f32.mxu0 0.0
        %584 = vmatmul.mubr.f32.gmra.mrb[0].mxu0 %v413
        %v585 = vpop.f32.mrb[0].mxu0
        %v586 = vadd.f32 0.0, %v585
        %v587 = vpop.f32.mrb[0].mxu0
        %588 = vmatprep.mubr.f32.mxu0 0.0
        %589 = vmatmul.mubr.f32.gmra.mrb[0].mxu0 %v415
        %v590 = vpop.f32.mrb[0].mxu0
        %v591 = vadd.f32 0.0, %v590
        %v592 = vpop.f32.mrb[0].mxu0
        %593 = vmatprep.mubr.f32.mxu0 0.0
        %594 = vmatmul.mubr.f32.gmra.mrb[0].mxu0 %v417
        %v595 = vpop.f32.mrb[0].mxu0
        %v596 = vadd.f32 0.0, %v595
        %v597 = vpop.f32.mrb[0].mxu0
        %598 = vmatprep.mubr.f32.mxu0 0.0
        %599 = vmatmul.mubr.f32.gmra.mrb[0].mxu0 %v419
        %v600 = vpop.f32.mrb[0].mxu0
        %v601 = vadd.f32 0.0, %v600
        %v602 = vpop.f32.mrb[0].mxu0
        %603 = vmatprep.mubr.f32.mxu0 0.0
        %604 = vmatmul.mubr.f32.gmra.mrb[0].mxu0 %v421
        %v605 = vpop.f32.mrb[0].mxu0
        %v606 = vadd.f32 0.0, %v605
        %v607 = vpop.f32.mrb[0].mxu0
        %608 = vmatprep.mubr.f32.mxu0 0.0
        %609 = vmatmul.mubr.f32.gmra.mrb[0].mxu0 %v423
        %v610 = vpop.f32.mrb[0].mxu0
        %v611 = vadd.f32 0.0, %v610
        %v612 = vpop.f32.mrb[0].mxu0
        %613 = vmatprep.mubr.f32.mxu0 0.0
        %614 = vmatmul.mubr.f32.gmra.mrb[0].mxu0 %v425
        %v615 = vpop.f32.mrb[0].mxu0
        %v616 = vadd.f32 0.0, %v615
        %v617 = vpop.f32.mrb[0].mxu0
        %618 = vmatprep.mubr.f32.mxu0 0.0
        %619 = vmatmul.mubr.f32.gmra.mrb[0].mxu0 %v427
        %v620 = vpop.f32.mrb[0].mxu0
        %v621 = vadd.f32 0.0, %v620
        %v622 = vpop.f32.mrb[0].mxu0
        %623 = vmatprep.mubr.f32.mxu0 0.0
        %624 = vmatmul.mubr.f32.gmra.mrb[0].mxu0 %v429
        %v625 = vpop.f32.mrb[0].mxu0
        %v626 = vadd.f32 0.0, %v625
        %v627 = vpop.f32.mrb[0].mxu0
        %628 = vmatprep.mubr.f32.mxu0 0.0
        %629 = vmatmul.mubr.f32.gmra.mrb[0].mxu0 %v431
        %v630 = vpop.f32.mrb[0].mxu0
        %v631 = vadd.f32 0.0, %v630
        %v632 = vpop.f32.mrb[0].mxu0
        %633 = vmatprep.mubr.f32.mxu0 0.0
        %634 = vmatmul.mubr.f32.gmra.mrb[0].mxu0 %v433
        %v635 = vpop.f32.mrb[0].mxu0
        %v636 = vadd.f32 0.0, %v635
        %v637 = vpop.f32.mrb[0].mxu0
        %638 = vmatprep.mubr.f32.mxu0 0.0
        %639 = vmatmul.mubr.f32.gmra.mrb[0].mxu0 %v435
        %v640 = vpop.f32.mrb[0].mxu0
        %v641 = vadd.f32 0.0, %v640
        %v642 = vpop.f32.mrb[0].mxu0
        %643 = vmatprep.mubr.f32.mxu0 0.0
        %644 = vmatmul.mubr.f32.gmra.mrb[0].mxu0 %v437
        %v645 = vpop.f32.mrb[0].mxu0
        %v646 = vadd.f32 0.0, %v645
        %v647 = vpop.f32.mrb[0].mxu0
        %648 = vmatprep.mubr.f32.mxu0 0.0
        %649 = vmatmul.mubr.f32.gmra.mrb[0].mxu0 %v439
        %v650 = vpop.f32.mrb[0].mxu0
        %v651 = vadd.f32 0.0, %v650
        %v652 = vpop.f32.mrb[0].mxu0
        %653 = vmatprep.mubr.f32.mxu0 0.0
        %654 = vmatmul.mubr.f32.gmra.mrb[0].mxu0 %v441
        %v655 = vpop.f32.mrb[0].mxu0
        %v656 = vadd.f32 0.0, %v655
        %v657 = vpop.f32.mrb[0].mxu0
        %658 = vmatprep.mubr.f32.mxu0 0.0
        %659 = vmatmul.mubr.f32.gmra.mrb[0].mxu0 %v443
        %v660 = vpop.f32.mrb[0].mxu0
        %v661 = vadd.f32 0.0, %v660
        %v662 = vpop.f32.mrb[0].mxu0
        %663 = vmatprep.mubr.f32.mxu0 0.0
        %664 = vmatmul.mubr.f32.gmra.mrb[0].mxu0 %v445
        %v665 = vpop.f32.mrb[0].mxu0
        %v666 = vadd.f32 0.0, %v665
        %v667 = vpop.f32.mrb[0].mxu0
        %668 = vmatprep.mubr.f32.mxu0 0.0
        %669 = vmatmul.mubr.f32.gmra.mrb[0].mxu0 %v447
        %v670 = vpop.f32.mrb[0].mxu0
        %v671 = vadd.f32 0.0, %v670
        %v672 = vpop.f32.mrb[0].mxu0
        %673 = vdwg.mxu0
        %v674 = vsel %vm384, %v196, 0
        %v676 = vsel %vm384, %v197, 0
        %v678 = vsel %vm384, %v199, 0
        %v680 = vsel %vm384, %v200, 0
        %v682 = vsel %vm384, %v202, 0
        %v684 = vsel %vm384, %v203, 0
        %v686 = vsel %vm384, %v205, 0
        %v688 = vsel %vm384, %v206, 0
        %v690 = vsel %vm384, %v208, 0
        %v692 = vsel %vm384, %v209, 0
        %v694 = vsel %vm384, %v211, 0
        %v696 = vsel %vm384, %v212, 0
        %v698 = vsel %vm384, %v214, 0
        %v700 = vsel %vm384, %v215, 0
        %v702 = vsel %vm384, %v217, 0
        %v704 = vsel %vm384, %v218, 0
        %v706 = vsel %vm384, %v220, 0
        %v708 = vsel %vm384, %v221, 0
        %v710 = vsel %vm384, %v223, 0
        %v712 = vsel %vm384, %v224, 0
        %v714 = vsel %vm384, %v226, 0
        %v716 = vsel %vm384, %v227, 0
        %v718 = vsel %vm384, %v229, 0
        %v720 = vsel %vm384, %v230, 0
        %v722 = vsel %vm384, %v232, 0
        %v724 = vsel %vm384, %v233, 0
        %v726 = vsel %vm384, %v235, 0
        %v728 = vsel %vm384, %v236, 0
        %v730 = vsel %vm384, %v238, 0
        %v732 = vsel %vm384, %v239, 0
        %v734 = vsel %vm384, %v241, 0
        %v736 = vsel %vm384, %v242, 0
        %738 = vmatprep.subr.mxu0 0.0
        %739 = vmatpush1.msra.mxu0 %v250
        %740 = vmatprep.subr.mxu0 0.0
        %741 = vmatpush1.msra.mxu0 %v251
        %742 = vmatprep.subr.mxu0 0.0
        %743 = vmatpush1.msra.mxu0 0.0
        %744 = vmatprep.subr.mxu0 0.0
        %745 = vmatpush1.msra.mxu0 0.0
        %746 = vmatprep.subr.mxu0 0.0
        %747 = vmatpush1.msra.mxu0 0.0
        %748 = vmatprep.subr.mxu0 0.0
        %749 = vmatpush1.msra.mxu0 0.0
        %750 = vmatprep.subr.mxu0 0.0
        %751 = vmatpush1.msra.mxu0 0.0
        %752 = vmatprep.subr.mxu0 0.0
        %753 = vmatpush1.msra.mxu0 0.0
        %754 = vmatprep.subr.mxu0 0.0
        %755 = vmatpush1.msra.mxu0 0.0
        %756 = vmatprep.subr.mxu0 0.0
        %757 = vmatpush1.msra.mxu0 0.0
        %758 = vmatprep.subr.mxu0 0.0
        %759 = vmatpush1.msra.mxu0 0.0
        %760 = vmatprep.subr.mxu0 0.0
        %761 = vmatpush1.msra.mxu0 0.0
        %762 = vmatprep.subr.mxu0 0.0
        %763 = vmatpush1.msra.mxu0 0.0
        %764 = vmatprep.subr.mxu0 0.0
        %765 = vmatpush1.msra.mxu0 0.0
        %766 = vmatprep.subr.mxu0 0.0
        %767 = vmatpush1.msra.mxu0 0.0
        %768 = vmatprep.subr.mxu0 0.0
        %769 = vmatpush1.msra.mxu0 0.0
        %770 = vmatprep.subr.mxu0 0.0
        %771 = vmatpush1.msra.mxu0 0.0
        %772 = vmatprep.subr.mxu0 0.0
        %773 = vmatpush1.msra.mxu0 0.0
        %774 = vmatprep.subr.mxu0 0.0
        %775 = vmatpush1.msra.mxu0 0.0
        %776 = vmatprep.subr.mxu0 0.0
        %777 = vmatpush1.msra.mxu0 0.0
        %778 = vmatprep.subr.mxu0 0.0
        %779 = vmatpush1.msra.mxu0 0.0
        %780 = vmatprep.subr.mxu0 0.0
        %781 = vmatpush1.msra.mxu0 0.0
        %782 = vmatprep.subr.mxu0 0.0
        %783 = vmatpush1.msra.mxu0 0.0
        %784 = vmatprep.subr.mxu0 0.0
        %785 = vmatpush1.msra.mxu0 0.0
        %786 = vmatprep.subr.mxu0 0.0
        %787 = vmatpush1.msra.mxu0 0.0
        %788 = vmatprep.subr.mxu0 0.0
        %789 = vmatpush1.msra.mxu0 0.0
        %790 = vmatprep.subr.mxu0 0.0
        %791 = vmatpush1.msra.mxu0 0.0
        %792 = vmatprep.subr.mxu0 0.0
        %793 = vmatpush1.msra.mxu0 0.0
        %794 = vmatprep.subr.mxu0 0.0
        %795 = vmatpush1.msra.mxu0 0.0
        %796 = vmatprep.subr.mxu0 0.0
        %797 = vmatpush1.msra.mxu0 0.0
        %798 = vmatprep.subr.mxu0 0.0
        %799 = vmatpush1.msra.mxu0 0.0
        %800 = vmatprep.subr.mxu0 0.0
        %801 = vmatpush1.msra.mxu0 0.0
        %802 = vmatprep.mubr.f32.mxu0 0.0
        %803 = vmatmul.mubr.f32.gmra.mrb[0].mxu0 %v674
        %v804 = vpop.f32.mrb[0].mxu0
        %v805 = vadd.f32 %v516, %v804
        %v806 = vpop.f32.mrb[0].mxu0
        %807 = vmatprep.mubr.f32.mxu0 0.0
        %808 = vmatmul.mubr.f32.gmra.mrb[0].mxu0 %v676
        %v809 = vpop.f32.mrb[0].mxu0
        %v810 = vadd.f32 %v521, %v809
        %v811 = vpop.f32.mrb[0].mxu0
        %812 = vmatprep.mubr.f32.mxu0 0.0
        %813 = vmatmul.mubr.f32.gmra.mrb[0].mxu0 %v678
        %v814 = vpop.f32.mrb[0].mxu0
        %v815 = vadd.f32 %v526, %v814
        %v816 = vpop.f32.mrb[0].mxu0
        %817 = vmatprep.mubr.f32.mxu0 0.0
        %818 = vmatmul.mubr.f32.gmra.mrb[0].mxu0 %v680
        %v819 = vpop.f32.mrb[0].mxu0
        %v820 = vadd.f32 %v531, %v819
        %v821 = vpop.f32.mrb[0].mxu0
        %822 = vmatprep.mubr.f32.mxu0 0.0
        %823 = vmatmul.mubr.f32.gmra.mrb[0].mxu0 %v682
        %v824 = vpop.f32.mrb[0].mxu0
        %v825 = vadd.f32 %v536, %v824
        %v826 = vpop.f32.mrb[0].mxu0
        %827 = vmatprep.mubr.f32.mxu0 0.0
        %828 = vmatmul.mubr.f32.gmra.mrb[0].mxu0 %v684
        %v829 = vpop.f32.mrb[0].mxu0
        %v830 = vadd.f32 %v541, %v829
        %v831 = vpop.f32.mrb[0].mxu0
        %832 = vmatprep.mubr.f32.mxu0 0.0
        %833 = vmatmul.mubr.f32.gmra.mrb[0].mxu0 %v686
        %v834 = vpop.f32.mrb[0].mxu0
        %v835 = vadd.f32 %v546, %v834
        %v836 = vpop.f32.mrb[0].mxu0
        %837 = vmatprep.mubr.f32.mxu0 0.0
        %838 = vmatmul.mubr.f32.gmra.mrb[0].mxu0 %v688
        %v839 = vpop.f32.mrb[0].mxu0
        %v840 = vadd.f32 %v551, %v839
        %v841 = vpop.f32.mrb[0].mxu0
        %842 = vmatprep.mubr.f32.mxu0 0.0
        %843 = vmatmul.mubr.f32.gmra.mrb[0].mxu0 %v690
        %v844 = vpop.f32.mrb[0].mxu0
        %v845 = vadd.f32 %v556, %v844
        %v846 = vpop.f32.mrb[0].mxu0
        %847 = vmatprep.mubr.f32.mxu0 0.0
        %848 = vmatmul.mubr.f32.gmra.mrb[0].mxu0 %v692
        %v849 = vpop.f32.mrb[0].mxu0
        %v850 = vadd.f32 %v561, %v849
        %v851 = vpop.f32.mrb[0].mxu0
        %852 = vmatprep.mubr.f32.mxu0 0.0
        %853 = vmatmul.mubr.f32.gmra.mrb[0].mxu0 %v694
        %v854 = vpop.f32.mrb[0].mxu0
        %v855 = vadd.f32 %v566, %v854
        %v856 = vpop.f32.mrb[0].mxu0
        %857 = vmatprep.mubr.f32.mxu0 0.0
        %858 = vmatmul.mubr.f32.gmra.mrb[0].mxu0 %v696
        %v859 = vpop.f32.mrb[0].mxu0
        %v860 = vadd.f32 %v571, %v859
        %v861 = vpop.f32.mrb[0].mxu0
        %862 = vmatprep.mubr.f32.mxu0 0.0
        %863 = vmatmul.mubr.f32.gmra.mrb[0].mxu0 %v698
        %v864 = vpop.f32.mrb[0].mxu0
        %v865 = vadd.f32 %v576, %v864
        %v866 = vpop.f32.mrb[0].mxu0
        %867 = vmatprep.mubr.f32.mxu0 0.0
        %868 = vmatmul.mubr.f32.gmra.mrb[0].mxu0 %v700
        %v869 = vpop.f32.mrb[0].mxu0
        %v870 = vadd.f32 %v581, %v869
        %v871 = vpop.f32.mrb[0].mxu0
        %872 = vmatprep.mubr.f32.mxu0 0.0
        %873 = vmatmul.mubr.f32.gmra.mrb[0].mxu0 %v702
        %v874 = vpop.f32.mrb[0].mxu0
        %v875 = vadd.f32 %v586, %v874
        %v876 = vpop.f32.mrb[0].mxu0
        %877 = vmatprep.mubr.f32.mxu0 0.0
        %878 = vmatmul.mubr.f32.gmra.mrb[0].mxu0 %v704
        %v879 = vpop.f32.mrb[0].mxu0
        %v880 = vadd.f32 %v591, %v879
        %v881 = vpop.f32.mrb[0].mxu0
        %882 = vmatprep.mubr.f32.mxu0 0.0
        %883 = vmatmul.mubr.f32.gmra.mrb[0].mxu0 %v706
        %v884 = vpop.f32.mrb[0].mxu0
        %v885 = vadd.f32 %v596, %v884
        %v886 = vpop.f32.mrb[0].mxu0
        %887 = vmatprep.mubr.f32.mxu0 0.0
        %888 = vmatmul.mubr.f32.gmra.mrb[0].mxu0 %v708
        %v889 = vpop.f32.mrb[0].mxu0
        %v890 = vadd.f32 %v601, %v889
        %v891 = vpop.f32.mrb[0].mxu0
        %892 = vmatprep.mubr.f32.mxu0 0.0
        %893 = vmatmul.mubr.f32.gmra.mrb[0].mxu0 %v710
        %v894 = vpop.f32.mrb[0].mxu0
        %v895 = vadd.f32 %v606, %v894
        %v896 = vpop.f32.mrb[0].mxu0
        %897 = vmatprep.mubr.f32.mxu0 0.0
        %898 = vmatmul.mubr.f32.gmra.mrb[0].mxu0 %v712
        %v899 = vpop.f32.mrb[0].mxu0
        %v900 = vadd.f32 %v611, %v899
        %v901 = vpop.f32.mrb[0].mxu0
        %902 = vmatprep.mubr.f32.mxu0 0.0
        %903 = vmatmul.mubr.f32.gmra.mrb[0].mxu0 %v714
        %v904 = vpop.f32.mrb[0].mxu0
        %v905 = vadd.f32 %v616, %v904
        %v906 = vpop.f32.mrb[0].mxu0
        %907 = vmatprep.mubr.f32.mxu0 0.0
        %908 = vmatmul.mubr.f32.gmra.mrb[0].mxu0 %v716
        %v909 = vpop.f32.mrb[0].mxu0
        %v910 = vadd.f32 %v621, %v909
        %v911 = vpop.f32.mrb[0].mxu0
        %912 = vmatprep.mubr.f32.mxu0 0.0
        %913 = vmatmul.mubr.f32.gmra.mrb[0].mxu0 %v718
        %v914 = vpop.f32.mrb[0].mxu0
        %v915 = vadd.f32 %v626, %v914
        %v916 = vpop.f32.mrb[0].mxu0
        %917 = vmatprep.mubr.f32.mxu0 0.0
        %918 = vmatmul.mubr.f32.gmra.mrb[0].mxu0 %v720
        %v919 = vpop.f32.mrb[0].mxu0
        %v920 = vadd.f32 %v631, %v919
        %v921 = vpop.f32.mrb[0].mxu0
        %922 = vmatprep.mubr.f32.mxu0 0.0
        %923 = vmatmul.mubr.f32.gmra.mrb[0].mxu0 %v722
        %v924 = vpop.f32.mrb[0].mxu0
        %v925 = vadd.f32 %v636, %v924
        %v926 = vpop.f32.mrb[0].mxu0
        %927 = vmatprep.mubr.f32.mxu0 0.0
        %928 = vmatmul.mubr.f32.gmra.mrb[0].mxu0 %v724
        %v929 = vpop.f32.mrb[0].mxu0
        %v930 = vadd.f32 %v641, %v929
        %v931 = vpop.f32.mrb[0].mxu0
        %932 = vmatprep.mubr.f32.mxu0 0.0
        %933 = vmatmul.mubr.f32.gmra.mrb[0].mxu0 %v726
        %v934 = vpop.f32.mrb[0].mxu0
        %v935 = vadd.f32 %v646, %v934
        %v936 = vpop.f32.mrb[0].mxu0
        %937 = vmatprep.mubr.f32.mxu0 0.0
        %938 = vmatmul.mubr.f32.gmra.mrb[0].mxu0 %v728
        %v939 = vpop.f32.mrb[0].mxu0
        %v940 = vadd.f32 %v651, %v939
        %v941 = vpop.f32.mrb[0].mxu0
        %942 = vmatprep.mubr.f32.mxu0 0.0
        %943 = vmatmul.mubr.f32.gmra.mrb[0].mxu0 %v730
        %v944 = vpop.f32.mrb[0].mxu0
        %v945 = vadd.f32 %v656, %v944
        %v946 = vpop.f32.mrb[0].mxu0
        %947 = vmatprep.mubr.f32.mxu0 0.0
        %948 = vmatmul.mubr.f32.gmra.mrb[0].mxu0 %v732
        %v949 = vpop.f32.mrb[0].mxu0
        %v950 = vadd.f32 %v661, %v949
        %v951 = vpop.f32.mrb[0].mxu0
        %952 = vmatprep.mubr.f32.mxu0 0.0
        %953 = vmatmul.mubr.f32.gmra.mrb[0].mxu0 %v734
        %v954 = vpop.f32.mrb[0].mxu0
        %v955 = vadd.f32 %v666, %v954
        %v956 = vpop.f32.mrb[0].mxu0
        %957 = vmatprep.mubr.f32.mxu0 0.0
        %958 = vmatmul.mubr.f32.gmra.mrb[0].mxu0 %v736
        %v959 = vpop.f32.mrb[0].mxu0
        %v960 = vadd.f32 %v671, %v959
        %v961 = vpop.f32.mrb[0].mxu0
        %962 = vdwg.mxu0
        %vm963 = vcmask 1045504
        %v964 = vrot.slane %v196, 2
        %v965 = vrot.slane %v197, 2
        %v966 = vsel %vm963, %v964, %v965
        %v967 = vrot.slane %v198, 2
        %v968 = vsel %vm963, %v965, %v967
        %v969 = vrot.slane %v199, 2
        %v970 = vrot.slane %v200, 2
        %v971 = vsel %vm963, %v969, %v970
        %v972 = vrot.slane %v201, 2
        %v973 = vsel %vm963, %v970, %v972
        %v974 = vrot.slane %v202, 2
        %v975 = vrot.slane %v203, 2
        %v976 = vsel %vm963, %v974, %v975
        %v977 = vrot.slane %v204, 2
        %v978 = vsel %vm963, %v975, %v977
        %v979 = vrot.slane %v205, 2
        %v980 = vrot.slane %v206, 2
        %v981 = vsel %vm963, %v979, %v980
        %v982 = vrot.slane %v207, 2
        %v983 = vsel %vm963, %v980, %v982
        %v984 = vrot.slane %v208, 2
        %v985 = vrot.slane %v209, 2
        %v986 = vsel %vm963, %v984, %v985
        %v987 = vrot.slane %v210, 2
        %v988 = vsel %vm963, %v985, %v987
        %v989 = vrot.slane %v211, 2
        %v990 = vrot.slane %v212, 2
        %v991 = vsel %vm963, %v989, %v990
        %v992 = vrot.slane %v213, 2
        %v993 = vsel %vm963, %v990, %v992
        %v994 = vrot.slane %v214, 2
        %v995 = vrot.slane %v215, 2
        %v996 = vsel %vm963, %v994, %v995
        %v997 = vrot.slane %v216, 2
        %v998 = vsel %vm963, %v995, %v997
        %v999 = vrot.slane %v217, 2
        %v1000 = vrot.slane %v218, 2
        %v1001 = vsel %vm963, %v999, %v1000
        %v1002 = vrot.slane %v219, 2
        %v1003 = vsel %vm963, %v1000, %v1002
        %v1004 = vrot.slane %v220, 2
        %v1005 = vrot.slane %v221, 2
        %v1006 = vsel %vm963, %v1004, %v1005
        %v1007 = vrot.slane %v222, 2
        %v1008 = vsel %vm963, %v1005, %v1007
        %v1009 = vrot.slane %v223, 2
        %v1010 = vrot.slane %v224, 2
        %v1011 = vsel %vm963, %v1009, %v1010
        %v1012 = vrot.slane %v225, 2
        %v1013 = vsel %vm963, %v1010, %v1012
        %v1014 = vrot.slane %v226, 2
        %v1015 = vrot.slane %v227, 2
        %v1016 = vsel %vm963, %v1014, %v1015
        %v1017 = vrot.slane %v228, 2
        %v1018 = vsel %vm963, %v1015, %v1017
        %v1019 = vrot.slane %v229, 2
        %v1020 = vrot.slane %v230, 2
        %v1021 = vsel %vm963, %v1019, %v1020
        %v1022 = vrot.slane %v231, 2
        %v1023 = vsel %vm963, %v1020, %v1022
        %v1024 = vrot.slane %v232, 2
        %v1025 = vrot.slane %v233, 2
        %v1026 = vsel %vm963, %v1024, %v1025
        %v1027 = vrot.slane %v234, 2
        %v1028 = vsel %vm963, %v1025, %v1027
        %v1029 = vrot.slane %v235, 2
        %v1030 = vrot.slane %v236, 2
        %v1031 = vsel %vm963, %v1029, %v1030
        %v1032 = vrot.slane %v237, 2
        %v1033 = vsel %vm963, %v1030, %v1032
        %v1034 = vrot.slane %v238, 2
        %v1035 = vrot.slane %v239, 2
        %v1036 = vsel %vm963, %v1034, %v1035
        %v1037 = vrot.slane %v240, 2
        %v1038 = vsel %vm963, %v1035, %v1037
        %v1039 = vrot.slane %v241, 2
        %v1040 = vrot.slane %v242, 2
        %v1041 = vsel %vm963, %v1039, %v1040
        %v1042 = vrot.slane %v243, 2
        %v1043 = vsel %vm963, %v1040, %v1042
        %s1044 = scalar_lea.vmem %s1, 32
        %v1045 = vld [vmem:[%s1044] sm:$0xff]
        %v1046 = vld [vmem:[%s1044 + $0x8] sm:$0xff]
        %v1047 = vsel %vm384, %v966, 0
        %v1049 = vsel %vm384, %v968, 0
        %v1051 = vsel %vm384, %v971, 0
        %v1053 = vsel %vm384, %v973, 0
        %v1055 = vsel %vm384, %v976, 0
        %v1057 = vsel %vm384, %v978, 0
        %v1059 = vsel %vm384, %v981, 0
        %v1061 = vsel %vm384, %v983, 0
        %v1063 = vsel %vm384, %v986, 0
        %v1065 = vsel %vm384, %v988, 0
        %v1067 = vsel %vm384, %v991, 0
        %v1069 = vsel %vm384, %v993, 0
        %v1071 = vsel %vm384, %v996, 0
        %v1073 = vsel %vm384, %v998, 0
        %v1075 = vsel %vm384, %v1001, 0
        %v1077 = vsel %vm384, %v1003, 0
        %v1079 = vsel %vm384, %v1006, 0
        %v1081 = vsel %vm384, %v1008, 0
        %v1083 = vsel %vm384, %v1011, 0
        %v1085 = vsel %vm384, %v1013, 0
        %v1087 = vsel %vm384, %v1016, 0
        %v1089 = vsel %vm384, %v1018, 0
        %v1091 = vsel %vm384, %v1021, 0
        %v1093 = vsel %vm384, %v1023, 0
        %v1095 = vsel %vm384, %v1026, 0
        %v1097 = vsel %vm384, %v1028, 0
        %v1099 = vsel %vm384, %v1031, 0
        %v1101 = vsel %vm384, %v1033, 0
        %v1103 = vsel %vm384, %v1036, 0
        %v1105 = vsel %vm384, %v1038, 0
        %v1107 = vsel %vm384, %v1041, 0
        %v1109 = vsel %vm384, %v1043, 0
        %1111 = vmatprep.subr.mxu0 0.0
        %1112 = vmatpush1.msra.mxu0 %v1045
        %1113 = vmatprep.subr.mxu0 0.0
        %1114 = vmatpush1.msra.mxu0 %v1046
        %1115 = vmatprep.subr.mxu0 0.0
        %1116 = vmatpush1.msra.mxu0 0.0
        %1117 = vmatprep.subr.mxu0 0.0
        %1118 = vmatpush1.msra.mxu0 0.0
        %1119 = vmatprep.subr.mxu0 0.0
        %1120 = vmatpush1.msra.mxu0 0.0
        %1121 = vmatprep.subr.mxu0 0.0
        %1122 = vmatpush1.msra.mxu0 0.0
        %1123 = vmatprep.subr.mxu0 0.0
        %1124 = vmatpush1.msra.mxu0 0.0
        %1125 = vmatprep.subr.mxu0 0.0
        %1126 = vmatpush1.msra.mxu0 0.0
        %1127 = vmatprep.subr.mxu0 0.0
        %1128 = vmatpush1.msra.mxu0 0.0
        %1129 = vmatprep.subr.mxu0 0.0
        %1130 = vmatpush1.msra.mxu0 0.0
        %1131 = vmatprep.subr.mxu0 0.0
        %1132 = vmatpush1.msra.mxu0 0.0
        %1133 = vmatprep.subr.mxu0 0.0
        %1134 = vmatpush1.msra.mxu0 0.0
        %1135 = vmatprep.subr.mxu0 0.0
        %1136 = vmatpush1.msra.mxu0 0.0
        %1137 = vmatprep.subr.mxu0 0.0
        %1138 = vmatpush1.msra.mxu0 0.0
        %1139 = vmatprep.subr.mxu0 0.0
        %1140 = vmatpush1.msra.mxu0 0.0
        %1141 = vmatprep.subr.mxu0 0.0
        %1142 = vmatpush1.msra.mxu0 0.0
        %1143 = vmatprep.subr.mxu0 0.0
        %1144 = vmatpush1.msra.mxu0 0.0
        %1145 = vmatprep.subr.mxu0 0.0
        %1146 = vmatpush1.msra.mxu0 0.0
        %1147 = vmatprep.subr.mxu0 0.0
        %1148 = vmatpush1.msra.mxu0 0.0
        %1149 = vmatprep.subr.mxu0 0.0
        %1150 = vmatpush1.msra.mxu0 0.0
        %1151 = vmatprep.subr.mxu0 0.0
        %1152 = vmatpush1.msra.mxu0 0.0
        %1153 = vmatprep.subr.mxu0 0.0
        %1154 = vmatpush1.msra.mxu0 0.0
        %1155 = vmatprep.subr.mxu0 0.0
        %1156 = vmatpush1.msra.mxu0 0.0
        %1157 = vmatprep.subr.mxu0 0.0
        %1158 = vmatpush1.msra.mxu0 0.0
        %1159 = vmatprep.subr.mxu0 0.0
        %1160 = vmatpush1.msra.mxu0 0.0
        %1161 = vmatprep.subr.mxu0 0.0
        %1162 = vmatpush1.msra.mxu0 0.0
        %1163 = vmatprep.subr.mxu0 0.0
        %1164 = vmatpush1.msra.mxu0 0.0
        %1165 = vmatprep.subr.mxu0 0.0
        %1166 = vmatpush1.msra.mxu0 0.0
        %1167 = vmatprep.subr.mxu0 0.0
        %1168 = vmatpush1.msra.mxu0 0.0
        %1169 = vmatprep.subr.mxu0 0.0
        %1170 = vmatpush1.msra.mxu0 0.0
        %1171 = vmatprep.subr.mxu0 0.0
        %1172 = vmatpush1.msra.mxu0 0.0
        %1173 = vmatprep.subr.mxu0 0.0
        %1174 = vmatpush1.msra.mxu0 0.0
        %1175 = vmatprep.mubr.f32.mxu0 0.0
        %1176 = vmatmul.mubr.f32.gmra.mrb[0].mxu0 %v1047
        %v1177 = vpop.f32.mrb[0].mxu0
        %v1178 = vadd.f32 0.0, %v1177
        %v1179 = vpop.f32.mrb[0].mxu0
        %1180 = vmatprep.mubr.f32.mxu0 0.0
        %1181 = vmatmul.mubr.f32.gmra.mrb[0].mxu0 %v1049
        %v1182 = vpop.f32.mrb[0].mxu0
        %v1183 = vadd.f32 0.0, %v1182
        %v1184 = vpop.f32.mrb[0].mxu0
        %1185 = vmatprep.mubr.f32.mxu0 0.0
        %1186 = vmatmul.mubr.f32.gmra.mrb[0].mxu0 %v1051
        %v1187 = vpop.f32.mrb[0].mxu0
        %v1188 = vadd.f32 0.0, %v1187
        %v1189 = vpop.f32.mrb[0].mxu0
        %1190 = vmatprep.mubr.f32.mxu0 0.0
        %1191 = vmatmul.mubr.f32.gmra.mrb[0].mxu0 %v1053
        %v1192 = vpop.f32.mrb[0].mxu0
        %v1193 = vadd.f32 0.0, %v1192
        %v1194 = vpop.f32.mrb[0].mxu0
        %1195 = vmatprep.mubr.f32.mxu0 0.0
        %1196 = vmatmul.mubr.f32.gmra.mrb[0].mxu0 %v1055
        %v1197 = vpop.f32.mrb[0].mxu0
        %v1198 = vadd.f32 0.0, %v1197
        %v1199 = vpop.f32.mrb[0].mxu0
        %1200 = vmatprep.mubr.f32.mxu0 0.0
        %1201 = vmatmul.mubr.f32.gmra.mrb[0].mxu0 %v1057
        %v1202 = vpop.f32.mrb[0].mxu0
        %v1203 = vadd.f32 0.0, %v1202
        %v1204 = vpop.f32.mrb[0].mxu0
        %1205 = vmatprep.mubr.f32.mxu0 0.0
        %1206 = vmatmul.mubr.f32.gmra.mrb[0].mxu0 %v1059
        %v1207 = vpop.f32.mrb[0].mxu0
        %v1208 = vadd.f32 0.0, %v1207
        %v1209 = vpop.f32.mrb[0].mxu0
        %1210 = vmatprep.mubr.f32.mxu0 0.0
        %1211 = vmatmul.mubr.f32.gmra.mrb[0].mxu0 %v1061
        %v1212 = vpop.f32.mrb[0].mxu0
        %v1213 = vadd.f32 0.0, %v1212
        %v1214 = vpop.f32.mrb[0].mxu0
        %1215 = vmatprep.mubr.f32.mxu0 0.0
        %1216 = vmatmul.mubr.f32.gmra.mrb[0].mxu0 %v1063
        %v1217 = vpop.f32.mrb[0].mxu0
        %v1218 = vadd.f32 0.0, %v1217
        %v1219 = vpop.f32.mrb[0].mxu0
        %1220 = vmatprep.mubr.f32.mxu0 0.0
        %1221 = vmatmul.mubr.f32.gmra.mrb[0].mxu0 %v1065
        %v1222 = vpop.f32.mrb[0].mxu0
        %v1223 = vadd.f32 0.0, %v1222
        %v1224 = vpop.f32.mrb[0].mxu0
        %1225 = vmatprep.mubr.f32.mxu0 0.0
        %1226 = vmatmul.mubr.f32.gmra.mrb[0].mxu0 %v1067
        %v1227 = vpop.f32.mrb[0].mxu0
        %v1228 = vadd.f32 0.0, %v1227
        %v1229 = vpop.f32.mrb[0].mxu0
        %1230 = vmatprep.mubr.f32.mxu0 0.0
        %1231 = vmatmul.mubr.f32.gmra.mrb[0].mxu0 %v1069
        %v1232 = vpop.f32.mrb[0].mxu0
        %v1233 = vadd.f32 0.0, %v1232
        %v1234 = vpop.f32.mrb[0].mxu0
        %1235 = vmatprep.mubr.f32.mxu0 0.0
        %1236 = vmatmul.mubr.f32.gmra.mrb[0].mxu0 %v1071
        %v1237 = vpop.f32.mrb[0].mxu0
        %v1238 = vadd.f32 0.0, %v1237
        %v1239 = vpop.f32.mrb[0].mxu0
        %1240 = vmatprep.mubr.f32.mxu0 0.0
        %1241 = vmatmul.mubr.f32.gmra.mrb[0].mxu0 %v1073
        %v1242 = vpop.f32.mrb[0].mxu0
        %v1243 = vadd.f32 0.0, %v1242
        %v1244 = vpop.f32.mrb[0].mxu0
        %1245 = vmatprep.mubr.f32.mxu0 0.0
        %1246 = vmatmul.mubr.f32.gmra.mrb[0].mxu0 %v1075
        %v1247 = vpop.f32.mrb[0].mxu0
        %v1248 = vadd.f32 0.0, %v1247
        %v1249 = vpop.f32.mrb[0].mxu0
        %1250 = vmatprep.mubr.f32.mxu0 0.0
        %1251 = vmatmul.mubr.f32.gmra.mrb[0].mxu0 %v1077
        %v1252 = vpop.f32.mrb[0].mxu0
        %v1253 = vadd.f32 0.0, %v1252
        %v1254 = vpop.f32.mrb[0].mxu0
        %1255 = vmatprep.mubr.f32.mxu0 0.0
        %1256 = vmatmul.mubr.f32.gmra.mrb[0].mxu0 %v1079
        %v1257 = vpop.f32.mrb[0].mxu0
        %v1258 = vadd.f32 0.0, %v1257
        %v1259 = vpop.f32.mrb[0].mxu0
        %1260 = vmatprep.mubr.f32.mxu0 0.0
        %1261 = vmatmul.mubr.f32.gmra.mrb[0].mxu0 %v1081
        %v1262 = vpop.f32.mrb[0].mxu0
        %v1263 = vadd.f32 0.0, %v1262
        %v1264 = vpop.f32.mrb[0].mxu0
        %1265 = vmatprep.mubr.f32.mxu0 0.0
        %1266 = vmatmul.mubr.f32.gmra.mrb[0].mxu0 %v1083
        %v1267 = vpop.f32.mrb[0].mxu0
        %v1268 = vadd.f32 0.0, %v1267
        %v1269 = vpop.f32.mrb[0].mxu0
        %1270 = vmatprep.mubr.f32.mxu0 0.0
        %1271 = vmatmul.mubr.f32.gmra.mrb[0].mxu0 %v1085
        %v1272 = vpop.f32.mrb[0].mxu0
        %v1273 = vadd.f32 0.0, %v1272
        %v1274 = vpop.f32.mrb[0].mxu0
        %1275 = vmatprep.mubr.f32.mxu0 0.0
        %1276 = vmatmul.mubr.f32.gmra.mrb[0].mxu0 %v1087
        %v1277 = vpop.f32.mrb[0].mxu0
        %v1278 = vadd.f32 0.0, %v1277
        %v1279 = vpop.f32.mrb[0].mxu0
        %1280 = vmatprep.mubr.f32.mxu0 0.0
        %1281 = vmatmul.mubr.f32.gmra.mrb[0].mxu0 %v1089
        %v1282 = vpop.f32.mrb[0].mxu0
        %v1283 = vadd.f32 0.0, %v1282
        %v1284 = vpop.f32.mrb[0].mxu0
        %1285 = vmatprep.mubr.f32.mxu0 0.0
        %1286 = vmatmul.mubr.f32.gmra.mrb[0].mxu0 %v1091
        %v1287 = vpop.f32.mrb[0].mxu0
        %v1288 = vadd.f32 0.0, %v1287
        %v1289 = vpop.f32.mrb[0].mxu0
        %1290 = vmatprep.mubr.f32.mxu0 0.0
        %1291 = vmatmul.mubr.f32.gmra.mrb[0].mxu0 %v1093
        %v1292 = vpop.f32.mrb[0].mxu0
        %v1293 = vadd.f32 0.0, %v1292
        %v1294 = vpop.f32.mrb[0].mxu0
        %1295 = vmatprep.mubr.f32.mxu0 0.0
        %1296 = vmatmul.mubr.f32.gmra.mrb[0].mxu0 %v1095
        %v1297 = vpop.f32.mrb[0].mxu0
        %v1298 = vadd.f32 0.0, %v1297
        %v1299 = vpop.f32.mrb[0].mxu0
        %1300 = vmatprep.mubr.f32.mxu0 0.0
        %1301 = vmatmul.mubr.f32.gmra.mrb[0].mxu0 %v1097
        %v1302 = vpop.f32.mrb[0].mxu0
        %v1303 = vadd.f32 0.0, %v1302
        %v1304 = vpop.f32.mrb[0].mxu0
        %1305 = vmatprep.mubr.f32.mxu0 0.0
        %1306 = vmatmul.mubr.f32.gmra.mrb[0].mxu0 %v1099
        %v1307 = vpop.f32.mrb[0].mxu0
        %v1308 = vadd.f32 0.0, %v1307
        %v1309 = vpop.f32.mrb[0].mxu0
        %1310 = vmatprep.mubr.f32.mxu0 0.0
        %1311 = vmatmul.mubr.f32.gmra.mrb[0].mxu0 %v1101
        %v1312 = vpop.f32.mrb[0].mxu0
        %v1313 = vadd.f32 0.0, %v1312
        %v1314 = vpop.f32.mrb[0].mxu0
        %1315 = vmatprep.mubr.f32.mxu0 0.0
        %1316 = vmatmul.mubr.f32.gmra.mrb[0].mxu0 %v1103
        %v1317 = vpop.f32.mrb[0].mxu0
        %v1318 = vadd.f32 0.0, %v1317
        %v1319 = vpop.f32.mrb[0].mxu0
        %1320 = vmatprep.mubr.f32.mxu0 0.0
        %1321 = vmatmul.mubr.f32.gmra.mrb[0].mxu0 %v1105
        %v1322 = vpop.f32.mrb[0].mxu0
        %v1323 = vadd.f32 0.0, %v1322
        %v1324 = vpop.f32.mrb[0].mxu0
        %1325 = vmatprep.mubr.f32.mxu0 0.0
        %1326 = vmatmul.mubr.f32.gmra.mrb[0].mxu0 %v1107
        %v1327 = vpop.f32.mrb[0].mxu0
        %v1328 = vadd.f32 0.0, %v1327
        %v1329 = vpop.f32.mrb[0].mxu0
        %1330 = vmatprep.mubr.f32.mxu0 0.0
        %1331 = vmatmul.mubr.f32.gmra.mrb[0].mxu0 %v1109
        %v1332 = vpop.f32.mrb[0].mxu0
        %v1333 = vadd.f32 0.0, %v1332
        %v1334 = vpop.f32.mrb[0].mxu0
        %1335 = vdwg.mxu0
        %v1336 = vadd.f32 %v805, %v1178
        %v1337 = vadd.f32 %v810, %v1183
        %v1338 = vadd.f32 %v815, %v1188
        %v1339 = vadd.f32 %v820, %v1193
        %v1340 = vadd.f32 %v825, %v1198
        %v1341 = vadd.f32 %v830, %v1203
        %v1342 = vadd.f32 %v835, %v1208
        %v1343 = vadd.f32 %v840, %v1213
        %v1344 = vadd.f32 %v845, %v1218
        %v1345 = vadd.f32 %v850, %v1223
        %v1346 = vadd.f32 %v855, %v1228
        %v1347 = vadd.f32 %v860, %v1233
        %v1348 = vadd.f32 %v865, %v1238
        %v1349 = vadd.f32 %v870, %v1243
        %v1350 = vadd.f32 %v875, %v1248
        %v1351 = vadd.f32 %v880, %v1253
        %v1352 = vadd.f32 %v885, %v1258
        %v1353 = vadd.f32 %v890, %v1263
        %v1354 = vadd.f32 %v895, %v1268
        %v1355 = vadd.f32 %v900, %v1273
        %v1356 = vadd.f32 %v905, %v1278
        %v1357 = vadd.f32 %v910, %v1283
        %v1358 = vadd.f32 %v915, %v1288
        %v1359 = vadd.f32 %v920, %v1293
        %v1360 = vadd.f32 %v925, %v1298
        %v1361 = vadd.f32 %v930, %v1303
        %v1362 = vadd.f32 %v935, %v1308
        %v1363 = vadd.f32 %v940, %v1313
        %v1364 = vadd.f32 %v945, %v1318
        %v1365 = vadd.f32 %v950, %v1323
        %v1366 = vadd.f32 %v955, %v1328
        %v1367 = vadd.f32 %v960, %v1333
        %s1368 = scalar_lea.vmem %s1, 48
        %v1369 = vld [vmem:[%s1368] sm:$0xff]
        %v1370 = vld [vmem:[%s1368 + $0x8] sm:$0xff]
        %v1372 = vsel %vm384, %v244, 0
        %v1375 = vsel %vm384, %v245, 0
        %1377 = vmatprep.subr.mxu0 0.0
        %1378 = vmatpush1.msra.mxu0 %v1369
        %1379 = vmatprep.subr.mxu0 0.0
        %1380 = vmatpush1.msra.mxu0 %v1370
        %1381 = vmatprep.subr.mxu0 0.0
        %1382 = vmatpush1.msra.mxu0 0.0
        %1383 = vmatprep.subr.mxu0 0.0
        %1384 = vmatpush1.msra.mxu0 0.0
        %1385 = vmatprep.subr.mxu0 0.0
        %1386 = vmatpush1.msra.mxu0 0.0
        %1387 = vmatprep.subr.mxu0 0.0
        %1388 = vmatpush1.msra.mxu0 0.0
        %1389 = vmatprep.subr.mxu0 0.0
        %1390 = vmatpush1.msra.mxu0 0.0
        %1391 = vmatprep.subr.mxu0 0.0
        %1392 = vmatpush1.msra.mxu0 0.0
        %1393 = vmatprep.subr.mxu0 0.0
        %1394 = vmatpush1.msra.mxu0 0.0
        %1395 = vmatprep.subr.mxu0 0.0
        %1396 = vmatpush1.msra.mxu0 0.0
        %1397 = vmatprep.subr.mxu0 0.0
        %1398 = vmatpush1.msra.mxu0 0.0
        %1399 = vmatprep.subr.mxu0 0.0
        %1400 = vmatpush1.msra.mxu0 0.0
        %1401 = vmatprep.subr.mxu0 0.0
        %1402 = vmatpush1.msra.mxu0 0.0
        %1403 = vmatprep.subr.mxu0 0.0
        %1404 = vmatpush1.msra.mxu0 0.0
        %1405 = vmatprep.subr.mxu0 0.0
        %1406 = vmatpush1.msra.mxu0 0.0
        %1407 = vmatprep.subr.mxu0 0.0
        %1408 = vmatpush1.msra.mxu0 0.0
        %1409 = vmatprep.subr.mxu0 0.0
        %1410 = vmatpush1.msra.mxu0 0.0
        %1411 = vmatprep.subr.mxu0 0.0
        %1412 = vmatpush1.msra.mxu0 0.0
        %1413 = vmatprep.subr.mxu0 0.0
        %1414 = vmatpush1.msra.mxu0 0.0
        %1415 = vmatprep.subr.mxu0 0.0
        %1416 = vmatpush1.msra.mxu0 0.0
        %1417 = vmatprep.subr.mxu0 0.0
        %1418 = vmatpush1.msra.mxu0 0.0
        %1419 = vmatprep.subr.mxu0 0.0
        %1420 = vmatpush1.msra.mxu0 0.0
        %1421 = vmatprep.subr.mxu0 0.0
        %1422 = vmatpush1.msra.mxu0 0.0
        %1423 = vmatprep.subr.mxu0 0.0
        %1424 = vmatpush1.msra.mxu0 0.0
        %1425 = vmatprep.subr.mxu0 0.0
        %1426 = vmatpush1.msra.mxu0 0.0
        %1427 = vmatprep.subr.mxu0 0.0
        %1428 = vmatpush1.msra.mxu0 0.0
        %1429 = vmatprep.subr.mxu0 0.0
        %1430 = vmatpush1.msra.mxu0 0.0
        %1431 = vmatprep.subr.mxu0 0.0
        %1432 = vmatpush1.msra.mxu0 0.0
        %1433 = vmatprep.subr.mxu0 0.0
        %1434 = vmatpush1.msra.mxu0 0.0
        %1435 = vmatprep.subr.mxu0 0.0
        %1436 = vmatpush1.msra.mxu0 0.0
        %1437 = vmatprep.subr.mxu0 0.0
        %1438 = vmatpush1.msra.mxu0 0.0
        %1439 = vmatprep.subr.mxu0 0.0
        %1440 = vmatpush1.msra.mxu0 0.0
        %1441 = vmatprep.mubr.f32.mxu0 0.0
        %1442 = vmatmul.mubr.f32.gmra.mrb[0].mxu0 %v678
        %v1443 = vpop.f32.mrb[0].mxu0
        %v1444 = vadd.f32 0.0, %v1443
        %v1445 = vpop.f32.mrb[0].mxu0
        %1446 = vmatprep.mubr.f32.mxu0 0.0
        %1447 = vmatmul.mubr.f32.gmra.mrb[0].mxu0 %v680
        %v1448 = vpop.f32.mrb[0].mxu0
        %v1449 = vadd.f32 0.0, %v1448
        %v1450 = vpop.f32.mrb[0].mxu0
        %1451 = vmatprep.mubr.f32.mxu0 0.0
        %1452 = vmatmul.mubr.f32.gmra.mrb[0].mxu0 %v682
        %v1453 = vpop.f32.mrb[0].mxu0
        %v1454 = vadd.f32 0.0, %v1453
        %v1455 = vpop.f32.mrb[0].mxu0
        %1456 = vmatprep.mubr.f32.mxu0 0.0
        %1457 = vmatmul.mubr.f32.gmra.mrb[0].mxu0 %v684
        %v1458 = vpop.f32.mrb[0].mxu0
        %v1459 = vadd.f32 0.0, %v1458
        %v1460 = vpop.f32.mrb[0].mxu0
        %1461 = vmatprep.mubr.f32.mxu0 0.0
        %1462 = vmatmul.mubr.f32.gmra.mrb[0].mxu0 %v686
        %v1463 = vpop.f32.mrb[0].mxu0
        %v1464 = vadd.f32 0.0, %v1463
        %v1465 = vpop.f32.mrb[0].mxu0
        %1466 = vmatprep.mubr.f32.mxu0 0.0
        %1467 = vmatmul.mubr.f32.gmra.mrb[0].mxu0 %v688
        %v1468 = vpop.f32.mrb[0].mxu0
        %v1469 = vadd.f32 0.0, %v1468
        %v1470 = vpop.f32.mrb[0].mxu0
        %1471 = vmatprep.mubr.f32.mxu0 0.0
        %1472 = vmatmul.mubr.f32.gmra.mrb[0].mxu0 %v690
        %v1473 = vpop.f32.mrb[0].mxu0
        %v1474 = vadd.f32 0.0, %v1473
        %v1475 = vpop.f32.mrb[0].mxu0
        %1476 = vmatprep.mubr.f32.mxu0 0.0
        %1477 = vmatmul.mubr.f32.gmra.mrb[0].mxu0 %v692
        %v1478 = vpop.f32.mrb[0].mxu0
        %v1479 = vadd.f32 0.0, %v1478
        %v1480 = vpop.f32.mrb[0].mxu0
        %1481 = vmatprep.mubr.f32.mxu0 0.0
        %1482 = vmatmul.mubr.f32.gmra.mrb[0].mxu0 %v694
        %v1483 = vpop.f32.mrb[0].mxu0
        %v1484 = vadd.f32 0.0, %v1483
        %v1485 = vpop.f32.mrb[0].mxu0
        %1486 = vmatprep.mubr.f32.mxu0 0.0
        %1487 = vmatmul.mubr.f32.gmra.mrb[0].mxu0 %v696
        %v1488 = vpop.f32.mrb[0].mxu0
        %v1489 = vadd.f32 0.0, %v1488
        %v1490 = vpop.f32.mrb[0].mxu0
        %1491 = vmatprep.mubr.f32.mxu0 0.0
        %1492 = vmatmul.mubr.f32.gmra.mrb[0].mxu0 %v698
        %v1493 = vpop.f32.mrb[0].mxu0
        %v1494 = vadd.f32 0.0, %v1493
        %v1495 = vpop.f32.mrb[0].mxu0
        %1496 = vmatprep.mubr.f32.mxu0 0.0
        %1497 = vmatmul.mubr.f32.gmra.mrb[0].mxu0 %v700
        %v1498 = vpop.f32.mrb[0].mxu0
        %v1499 = vadd.f32 0.0, %v1498
        %v1500 = vpop.f32.mrb[0].mxu0
        %1501 = vmatprep.mubr.f32.mxu0 0.0
        %1502 = vmatmul.mubr.f32.gmra.mrb[0].mxu0 %v702
        %v1503 = vpop.f32.mrb[0].mxu0
        %v1504 = vadd.f32 0.0, %v1503
        %v1505 = vpop.f32.mrb[0].mxu0
        %1506 = vmatprep.mubr.f32.mxu0 0.0
        %1507 = vmatmul.mubr.f32.gmra.mrb[0].mxu0 %v704
        %v1508 = vpop.f32.mrb[0].mxu0
        %v1509 = vadd.f32 0.0, %v1508
        %v1510 = vpop.f32.mrb[0].mxu0
        %1511 = vmatprep.mubr.f32.mxu0 0.0
        %1512 = vmatmul.mubr.f32.gmra.mrb[0].mxu0 %v706
        %v1513 = vpop.f32.mrb[0].mxu0
        %v1514 = vadd.f32 0.0, %v1513
        %v1515 = vpop.f32.mrb[0].mxu0
        %1516 = vmatprep.mubr.f32.mxu0 0.0
        %1517 = vmatmul.mubr.f32.gmra.mrb[0].mxu0 %v708
        %v1518 = vpop.f32.mrb[0].mxu0
        %v1519 = vadd.f32 0.0, %v1518
        %v1520 = vpop.f32.mrb[0].mxu0
        %1521 = vmatprep.mubr.f32.mxu0 0.0
        %1522 = vmatmul.mubr.f32.gmra.mrb[0].mxu0 %v710
        %v1523 = vpop.f32.mrb[0].mxu0
        %v1524 = vadd.f32 0.0, %v1523
        %v1525 = vpop.f32.mrb[0].mxu0
        %1526 = vmatprep.mubr.f32.mxu0 0.0
        %1527 = vmatmul.mubr.f32.gmra.mrb[0].mxu0 %v712
        %v1528 = vpop.f32.mrb[0].mxu0
        %v1529 = vadd.f32 0.0, %v1528
        %v1530 = vpop.f32.mrb[0].mxu0
        %1531 = vmatprep.mubr.f32.mxu0 0.0
        %1532 = vmatmul.mubr.f32.gmra.mrb[0].mxu0 %v714
        %v1533 = vpop.f32.mrb[0].mxu0
        %v1534 = vadd.f32 0.0, %v1533
        %v1535 = vpop.f32.mrb[0].mxu0
        %1536 = vmatprep.mubr.f32.mxu0 0.0
        %1537 = vmatmul.mubr.f32.gmra.mrb[0].mxu0 %v716
        %v1538 = vpop.f32.mrb[0].mxu0
        %v1539 = vadd.f32 0.0, %v1538
        %v1540 = vpop.f32.mrb[0].mxu0
        %1541 = vmatprep.mubr.f32.mxu0 0.0
        %1542 = vmatmul.mubr.f32.gmra.mrb[0].mxu0 %v718
        %v1543 = vpop.f32.mrb[0].mxu0
        %v1544 = vadd.f32 0.0, %v1543
        %v1545 = vpop.f32.mrb[0].mxu0
        %1546 = vmatprep.mubr.f32.mxu0 0.0
        %1547 = vmatmul.mubr.f32.gmra.mrb[0].mxu0 %v720
        %v1548 = vpop.f32.mrb[0].mxu0
        %v1549 = vadd.f32 0.0, %v1548
        %v1550 = vpop.f32.mrb[0].mxu0
        %1551 = vmatprep.mubr.f32.mxu0 0.0
        %1552 = vmatmul.mubr.f32.gmra.mrb[0].mxu0 %v722
        %v1553 = vpop.f32.mrb[0].mxu0
        %v1554 = vadd.f32 0.0, %v1553
        %v1555 = vpop.f32.mrb[0].mxu0
        %1556 = vmatprep.mubr.f32.mxu0 0.0
        %1557 = vmatmul.mubr.f32.gmra.mrb[0].mxu0 %v724
        %v1558 = vpop.f32.mrb[0].mxu0
        %v1559 = vadd.f32 0.0, %v1558
        %v1560 = vpop.f32.mrb[0].mxu0
        %1561 = vmatprep.mubr.f32.mxu0 0.0
        %1562 = vmatmul.mubr.f32.gmra.mrb[0].mxu0 %v726
        %v1563 = vpop.f32.mrb[0].mxu0
        %v1564 = vadd.f32 0.0, %v1563
        %v1565 = vpop.f32.mrb[0].mxu0
        %1566 = vmatprep.mubr.f32.mxu0 0.0
        %1567 = vmatmul.mubr.f32.gmra.mrb[0].mxu0 %v728
        %v1568 = vpop.f32.mrb[0].mxu0
        %v1569 = vadd.f32 0.0, %v1568
        %v1570 = vpop.f32.mrb[0].mxu0
        %1571 = vmatprep.mubr.f32.mxu0 0.0
        %1572 = vmatmul.mubr.f32.gmra.mrb[0].mxu0 %v730
        %v1573 = vpop.f32.mrb[0].mxu0
        %v1574 = vadd.f32 0.0, %v1573
        %v1575 = vpop.f32.mrb[0].mxu0
        %1576 = vmatprep.mubr.f32.mxu0 0.0
        %1577 = vmatmul.mubr.f32.gmra.mrb[0].mxu0 %v732
        %v1578 = vpop.f32.mrb[0].mxu0
        %v1579 = vadd.f32 0.0, %v1578
        %v1580 = vpop.f32.mrb[0].mxu0
        %1581 = vmatprep.mubr.f32.mxu0 0.0
        %1582 = vmatmul.mubr.f32.gmra.mrb[0].mxu0 %v734
        %v1583 = vpop.f32.mrb[0].mxu0
        %v1584 = vadd.f32 0.0, %v1583
        %v1585 = vpop.f32.mrb[0].mxu0
        %1586 = vmatprep.mubr.f32.mxu0 0.0
        %1587 = vmatmul.mubr.f32.gmra.mrb[0].mxu0 %v736
        %v1588 = vpop.f32.mrb[0].mxu0
        %v1589 = vadd.f32 0.0, %v1588
        %v1590 = vpop.f32.mrb[0].mxu0
        %1591 = vmatprep.mubr.f32.mxu0 0.0
        %1592 = vmatmul.mubr.f32.gmra.mrb[0].mxu0 %v1372
        %v1593 = vpop.f32.mrb[0].mxu0
        %v1594 = vadd.f32 0.0, %v1593
        %v1595 = vpop.f32.mrb[0].mxu0
        %1596 = vmatprep.mubr.f32.mxu0 0.0
        %1597 = vmatmul.mubr.f32.gmra.mrb[0].mxu0 %v1375
        %v1598 = vpop.f32.mrb[0].mxu0
        %v1599 = vadd.f32 0.0, %v1598
        %v1600 = vpop.f32.mrb[0].mxu0
        %1601 = vdwg.mxu0
        %v1602 = vadd.f32 %v1336, %v1444
        %v1603 = vadd.f32 %v1337, %v1449
        %v1604 = vadd.f32 %v1338, %v1454
        %v1605 = vadd.f32 %v1339, %v1459
        %v1606 = vadd.f32 %v1340, %v1464
        %v1607 = vadd.f32 %v1341, %v1469
        %v1608 = vadd.f32 %v1342, %v1474
        %v1609 = vadd.f32 %v1343, %v1479
        %v1610 = vadd.f32 %v1344, %v1484
        %v1611 = vadd.f32 %v1345, %v1489
        %v1612 = vadd.f32 %v1346, %v1494
        %v1613 = vadd.f32 %v1347, %v1499
        %v1614 = vadd.f32 %v1348, %v1504
        %v1615 = vadd.f32 %v1349, %v1509
        %v1616 = vadd.f32 %v1350, %v1514
        %v1617 = vadd.f32 %v1351, %v1519
        %v1618 = vadd.f32 %v1352, %v1524
        %v1619 = vadd.f32 %v1353, %v1529
        %v1620 = vadd.f32 %v1354, %v1534
        %v1621 = vadd.f32 %v1355, %v1539
        %v1622 = vadd.f32 %v1356, %v1544
        %v1623 = vadd.f32 %v1357, %v1549
        %v1624 = vadd.f32 %v1358, %v1554
        %v1625 = vadd.f32 %v1359, %v1559
        %v1626 = vadd.f32 %v1360, %v1564
        %v1627 = vadd.f32 %v1361, %v1569
        %v1628 = vadd.f32 %v1362, %v1574
        %v1629 = vadd.f32 %v1363, %v1579
        %v1630 = vadd.f32 %v1364, %v1584
        %v1631 = vadd.f32 %v1365, %v1589
        %v1632 = vadd.f32 %v1366, %v1594
        %v1633 = vadd.f32 %v1367, %v1599
        %v1635 = vrot.slane %v244, 1
        %v1636 = vrot.slane %v245, 1
        %v1637 = vsel %vm300, %v1635, %v1636
        %v1638 = vrot.slane %v246, 1
        %v1639 = vsel %vm300, %v1636, %v1638
        %s1640 = scalar_lea.vmem %s1, 64
        %v1641 = vld [vmem:[%s1640] sm:$0xff]
        %v1642 = vld [vmem:[%s1640 + $0x8] sm:$0xff]
        %v1643 = vsel %vm384, %v1637, 0
        %v1645 = vsel %vm384, %v1639, 0
        %1647 = vmatprep.subr.mxu0 0.0
        %1648 = vmatpush1.msra.mxu0 %v1641
        %1649 = vmatprep.subr.mxu0 0.0
        %1650 = vmatpush1.msra.mxu0 %v1642
        %1651 = vmatprep.subr.mxu0 0.0
        %1652 = vmatpush1.msra.mxu0 0.0
        %1653 = vmatprep.subr.mxu0 0.0
        %1654 = vmatpush1.msra.mxu0 0.0
        %1655 = vmatprep.subr.mxu0 0.0
        %1656 = vmatpush1.msra.mxu0 0.0
        %1657 = vmatprep.subr.mxu0 0.0
        %1658 = vmatpush1.msra.mxu0 0.0
        %1659 = vmatprep.subr.mxu0 0.0
        %1660 = vmatpush1.msra.mxu0 0.0
        %1661 = vmatprep.subr.mxu0 0.0
        %1662 = vmatpush1.msra.mxu0 0.0
        %1663 = vmatprep.subr.mxu0 0.0
        %1664 = vmatpush1.msra.mxu0 0.0
        %1665 = vmatprep.subr.mxu0 0.0
        %1666 = vmatpush1.msra.mxu0 0.0
        %1667 = vmatprep.subr.mxu0 0.0
        %1668 = vmatpush1.msra.mxu0 0.0
        %1669 = vmatprep.subr.mxu0 0.0
        %1670 = vmatpush1.msra.mxu0 0.0
        %1671 = vmatprep.subr.mxu0 0.0
        %1672 = vmatpush1.msra.mxu0 0.0
        %1673 = vmatprep.subr.mxu0 0.0
        %1674 = vmatpush1.msra.mxu0 0.0
        %1675 = vmatprep.subr.mxu0 0.0
        %1676 = vmatpush1.msra.mxu0 0.0
        %1677 = vmatprep.subr.mxu0 0.0
        %1678 = vmatpush1.msra.mxu0 0.0
        %1679 = vmatprep.subr.mxu0 0.0
        %1680 = vmatpush1.msra.mxu0 0.0
        %1681 = vmatprep.subr.mxu0 0.0
        %1682 = vmatpush1.msra.mxu0 0.0
        %1683 = vmatprep.subr.mxu0 0.0
        %1684 = vmatpush1.msra.mxu0 0.0
        %1685 = vmatprep.subr.mxu0 0.0
        %1686 = vmatpush1.msra.mxu0 0.0
        %1687 = vmatprep.subr.mxu0 0.0
        %1688 = vmatpush1.msra.mxu0 0.0
        %1689 = vmatprep.subr.mxu0 0.0
        %1690 = vmatpush1.msra.mxu0 0.0
        %1691 = vmatprep.subr.mxu0 0.0
        %1692 = vmatpush1.msra.mxu0 0.0
        %1693 = vmatprep.subr.mxu0 0.0
        %1694 = vmatpush1.msra.mxu0 0.0
        %1695 = vmatprep.subr.mxu0 0.0
        %1696 = vmatpush1.msra.mxu0 0.0
        %1697 = vmatprep.subr.mxu0 0.0
        %1698 = vmatpush1.msra.mxu0 0.0
        %1699 = vmatprep.subr.mxu0 0.0
        %1700 = vmatpush1.msra.mxu0 0.0
        %1701 = vmatprep.subr.mxu0 0.0
        %1702 = vmatpush1.msra.mxu0 0.0
        %1703 = vmatprep.subr.mxu0 0.0
        %1704 = vmatpush1.msra.mxu0 0.0
        %1705 = vmatprep.subr.mxu0 0.0
        %1706 = vmatpush1.msra.mxu0 0.0
        %1707 = vmatprep.subr.mxu0 0.0
        %1708 = vmatpush1.msra.mxu0 0.0
        %1709 = vmatprep.subr.mxu0 0.0
        %1710 = vmatpush1.msra.mxu0 0.0
        %1711 = vmatprep.mubr.f32.mxu0 0.0
        %1712 = vmatmul.mubr.f32.gmra.mrb[0].mxu0 %v389
        %v1713 = vpop.f32.mrb[0].mxu0
        %v1714 = vadd.f32 0.0, %v1713
        %v1715 = vpop.f32.mrb[0].mxu0
        %1716 = vmatprep.mubr.f32.mxu0 0.0
        %1717 = vmatmul.mubr.f32.gmra.mrb[0].mxu0 %v391
        %v1718 = vpop.f32.mrb[0].mxu0
        %v1719 = vadd.f32 0.0, %v1718
        %v1720 = vpop.f32.mrb[0].mxu0
        %1721 = vmatprep.mubr.f32.mxu0 0.0
        %1722 = vmatmul.mubr.f32.gmra.mrb[0].mxu0 %v393
        %v1723 = vpop.f32.mrb[0].mxu0
        %v1724 = vadd.f32 0.0, %v1723
        %v1725 = vpop.f32.mrb[0].mxu0
        %1726 = vmatprep.mubr.f32.mxu0 0.0
        %1727 = vmatmul.mubr.f32.gmra.mrb[0].mxu0 %v395
        %v1728 = vpop.f32.mrb[0].mxu0
        %v1729 = vadd.f32 0.0, %v1728
        %v1730 = vpop.f32.mrb[0].mxu0
        %1731 = vmatprep.mubr.f32.mxu0 0.0
        %1732 = vmatmul.mubr.f32.gmra.mrb[0].mxu0 %v397
        %v1733 = vpop.f32.mrb[0].mxu0
        %v1734 = vadd.f32 0.0, %v1733
        %v1735 = vpop.f32.mrb[0].mxu0
        %1736 = vmatprep.mubr.f32.mxu0 0.0
        %1737 = vmatmul.mubr.f32.gmra.mrb[0].mxu0 %v399
        %v1738 = vpop.f32.mrb[0].mxu0
        %v1739 = vadd.f32 0.0, %v1738
        %v1740 = vpop.f32.mrb[0].mxu0
        %1741 = vmatprep.mubr.f32.mxu0 0.0
        %1742 = vmatmul.mubr.f32.gmra.mrb[0].mxu0 %v401
        %v1743 = vpop.f32.mrb[0].mxu0
        %v1744 = vadd.f32 0.0, %v1743
        %v1745 = vpop.f32.mrb[0].mxu0
        %1746 = vmatprep.mubr.f32.mxu0 0.0
        %1747 = vmatmul.mubr.f32.gmra.mrb[0].mxu0 %v403
        %v1748 = vpop.f32.mrb[0].mxu0
        %v1749 = vadd.f32 0.0, %v1748
        %v1750 = vpop.f32.mrb[0].mxu0
        %1751 = vmatprep.mubr.f32.mxu0 0.0
        %1752 = vmatmul.mubr.f32.gmra.mrb[0].mxu0 %v405
        %v1753 = vpop.f32.mrb[0].mxu0
        %v1754 = vadd.f32 0.0, %v1753
        %v1755 = vpop.f32.mrb[0].mxu0
        %1756 = vmatprep.mubr.f32.mxu0 0.0
        %1757 = vmatmul.mubr.f32.gmra.mrb[0].mxu0 %v407
        %v1758 = vpop.f32.mrb[0].mxu0
        %v1759 = vadd.f32 0.0, %v1758
        %v1760 = vpop.f32.mrb[0].mxu0
        %1761 = vmatprep.mubr.f32.mxu0 0.0
        %1762 = vmatmul.mubr.f32.gmra.mrb[0].mxu0 %v409
        %v1763 = vpop.f32.mrb[0].mxu0
        %v1764 = vadd.f32 0.0, %v1763
        %v1765 = vpop.f32.mrb[0].mxu0
        %1766 = vmatprep.mubr.f32.mxu0 0.0
        %1767 = vmatmul.mubr.f32.gmra.mrb[0].mxu0 %v411
        %v1768 = vpop.f32.mrb[0].mxu0
        %v1769 = vadd.f32 0.0, %v1768
        %v1770 = vpop.f32.mrb[0].mxu0
        %1771 = vmatprep.mubr.f32.mxu0 0.0
        %1772 = vmatmul.mubr.f32.gmra.mrb[0].mxu0 %v413
        %v1773 = vpop.f32.mrb[0].mxu0
        %v1774 = vadd.f32 0.0, %v1773
        %v1775 = vpop.f32.mrb[0].mxu0
        %1776 = vmatprep.mubr.f32.mxu0 0.0
        %1777 = vmatmul.mubr.f32.gmra.mrb[0].mxu0 %v415
        %v1778 = vpop.f32.mrb[0].mxu0
        %v1779 = vadd.f32 0.0, %v1778
        %v1780 = vpop.f32.mrb[0].mxu0
        %1781 = vmatprep.mubr.f32.mxu0 0.0
        %1782 = vmatmul.mubr.f32.gmra.mrb[0].mxu0 %v417
        %v1783 = vpop.f32.mrb[0].mxu0
        %v1784 = vadd.f32 0.0, %v1783
        %v1785 = vpop.f32.mrb[0].mxu0
        %1786 = vmatprep.mubr.f32.mxu0 0.0
        %1787 = vmatmul.mubr.f32.gmra.mrb[0].mxu0 %v419
        %v1788 = vpop.f32.mrb[0].mxu0
        %v1789 = vadd.f32 0.0, %v1788
        %v1790 = vpop.f32.mrb[0].mxu0
        %1791 = vmatprep.mubr.f32.mxu0 0.0
        %1792 = vmatmul.mubr.f32.gmra.mrb[0].mxu0 %v421
        %v1793 = vpop.f32.mrb[0].mxu0
        %v1794 = vadd.f32 0.0, %v1793
        %v1795 = vpop.f32.mrb[0].mxu0
        %1796 = vmatprep.mubr.f32.mxu0 0.0
        %1797 = vmatmul.mubr.f32.gmra.mrb[0].mxu0 %v423
        %v1798 = vpop.f32.mrb[0].mxu0
        %v1799 = vadd.f32 0.0, %v1798
        %v1800 = vpop.f32.mrb[0].mxu0
        %1801 = vmatprep.mubr.f32.mxu0 0.0
        %1802 = vmatmul.mubr.f32.gmra.mrb[0].mxu0 %v425
        %v1803 = vpop.f32.mrb[0].mxu0
        %v1804 = vadd.f32 0.0, %v1803
        %v1805 = vpop.f32.mrb[0].mxu0
        %1806 = vmatprep.mubr.f32.mxu0 0.0
        %1807 = vmatmul.mubr.f32.gmra.mrb[0].mxu0 %v427
        %v1808 = vpop.f32.mrb[0].mxu0
        %v1809 = vadd.f32 0.0, %v1808
        %v1810 = vpop.f32.mrb[0].mxu0
        %1811 = vmatprep.mubr.f32.mxu0 0.0
        %1812 = vmatmul.mubr.f32.gmra.mrb[0].mxu0 %v429
        %v1813 = vpop.f32.mrb[0].mxu0
        %v1814 = vadd.f32 0.0, %v1813
        %v1815 = vpop.f32.mrb[0].mxu0
        %1816 = vmatprep.mubr.f32.mxu0 0.0
        %1817 = vmatmul.mubr.f32.gmra.mrb[0].mxu0 %v431
        %v1818 = vpop.f32.mrb[0].mxu0
        %v1819 = vadd.f32 0.0, %v1818
        %v1820 = vpop.f32.mrb[0].mxu0
        %1821 = vmatprep.mubr.f32.mxu0 0.0
        %1822 = vmatmul.mubr.f32.gmra.mrb[0].mxu0 %v433
        %v1823 = vpop.f32.mrb[0].mxu0
        %v1824 = vadd.f32 0.0, %v1823
        %v1825 = vpop.f32.mrb[0].mxu0
        %1826 = vmatprep.mubr.f32.mxu0 0.0
        %1827 = vmatmul.mubr.f32.gmra.mrb[0].mxu0 %v435
        %v1828 = vpop.f32.mrb[0].mxu0
        %v1829 = vadd.f32 0.0, %v1828
        %v1830 = vpop.f32.mrb[0].mxu0
        %1831 = vmatprep.mubr.f32.mxu0 0.0
        %1832 = vmatmul.mubr.f32.gmra.mrb[0].mxu0 %v437
        %v1833 = vpop.f32.mrb[0].mxu0
        %v1834 = vadd.f32 0.0, %v1833
        %v1835 = vpop.f32.mrb[0].mxu0
        %1836 = vmatprep.mubr.f32.mxu0 0.0
        %1837 = vmatmul.mubr.f32.gmra.mrb[0].mxu0 %v439
        %v1838 = vpop.f32.mrb[0].mxu0
        %v1839 = vadd.f32 0.0, %v1838
        %v1840 = vpop.f32.mrb[0].mxu0
        %1841 = vmatprep.mubr.f32.mxu0 0.0
        %1842 = vmatmul.mubr.f32.gmra.mrb[0].mxu0 %v441
        %v1843 = vpop.f32.mrb[0].mxu0
        %v1844 = vadd.f32 0.0, %v1843
        %v1845 = vpop.f32.mrb[0].mxu0
        %1846 = vmatprep.mubr.f32.mxu0 0.0
        %1847 = vmatmul.mubr.f32.gmra.mrb[0].mxu0 %v443
        %v1848 = vpop.f32.mrb[0].mxu0
        %v1849 = vadd.f32 0.0, %v1848
        %v1850 = vpop.f32.mrb[0].mxu0
        %1851 = vmatprep.mubr.f32.mxu0 0.0
        %1852 = vmatmul.mubr.f32.gmra.mrb[0].mxu0 %v445
        %v1853 = vpop.f32.mrb[0].mxu0
        %v1854 = vadd.f32 0.0, %v1853
        %v1855 = vpop.f32.mrb[0].mxu0
        %1856 = vmatprep.mubr.f32.mxu0 0.0
        %1857 = vmatmul.mubr.f32.gmra.mrb[0].mxu0 %v447
        %v1858 = vpop.f32.mrb[0].mxu0
        %v1859 = vadd.f32 0.0, %v1858
        %v1860 = vpop.f32.mrb[0].mxu0
        %1861 = vmatprep.mubr.f32.mxu0 0.0
        %1862 = vmatmul.mubr.f32.gmra.mrb[0].mxu0 %v1643
        %v1863 = vpop.f32.mrb[0].mxu0
        %v1864 = vadd.f32 0.0, %v1863
        %v1865 = vpop.f32.mrb[0].mxu0
        %1866 = vmatprep.mubr.f32.mxu0 0.0
        %1867 = vmatmul.mubr.f32.gmra.mrb[0].mxu0 %v1645
        %v1868 = vpop.f32.mrb[0].mxu0
        %v1869 = vadd.f32 0.0, %v1868
        %v1870 = vpop.f32.mrb[0].mxu0
        %1871 = vdwg.mxu0
        %v1872 = vadd.f32 %v1602, %v1714
        %v1873 = vadd.f32 %v1603, %v1719
        %v1874 = vadd.f32 %v1604, %v1724
        %v1875 = vadd.f32 %v1605, %v1729
        %v1876 = vadd.f32 %v1606, %v1734
        %v1877 = vadd.f32 %v1607, %v1739
        %v1878 = vadd.f32 %v1608, %v1744
        %v1879 = vadd.f32 %v1609, %v1749
        %v1880 = vadd.f32 %v1610, %v1754
        %v1881 = vadd.f32 %v1611, %v1759
        %v1882 = vadd.f32 %v1612, %v1764
        %v1883 = vadd.f32 %v1613, %v1769
        %v1884 = vadd.f32 %v1614, %v1774
        %v1885 = vadd.f32 %v1615, %v1779
        %v1886 = vadd.f32 %v1616, %v1784
        %v1887 = vadd.f32 %v1617, %v1789
        %v1888 = vadd.f32 %v1618, %v1794
        %v1889 = vadd.f32 %v1619, %v1799
        %v1890 = vadd.f32 %v1620, %v1804
        %v1891 = vadd.f32 %v1621, %v1809
        %v1892 = vadd.f32 %v1622, %v1814
        %v1893 = vadd.f32 %v1623, %v1819
        %v1894 = vadd.f32 %v1624, %v1824
        %v1895 = vadd.f32 %v1625, %v1829
        %v1896 = vadd.f32 %v1626, %v1834
        %v1897 = vadd.f32 %v1627, %v1839
        %v1898 = vadd.f32 %v1628, %v1844
        %v1899 = vadd.f32 %v1629, %v1849
        %v1900 = vadd.f32 %v1630, %v1854
        %v1901 = vadd.f32 %v1631, %v1859
        %v1902 = vadd.f32 %v1632, %v1864
        %v1903 = vadd.f32 %v1633, %v1869
        %v1904 = vrot.slane %v244, 2
        %v1905 = vrot.slane %v245, 2
        %v1906 = vsel %vm963, %v1904, %v1905
        %v1907 = vrot.slane %v246, 2
        %v1908 = vsel %vm963, %v1905, %v1907
        %s1909 = scalar_lea.vmem %s1, 80
        %v1910 = vld [vmem:[%s1909] sm:$0xff]
        %v1911 = vld [vmem:[%s1909 + $0x8] sm:$0xff]
        %v1912 = vsel %vm384, %v1906, 0
        %v1914 = vsel %vm384, %v1908, 0
        %1916 = vmatprep.subr.mxu0 0.0
        %1917 = vmatpush1.msra.mxu0 %v1910
        %1918 = vmatprep.subr.mxu0 0.0
        %1919 = vmatpush1.msra.mxu0 %v1911
        %1920 = vmatprep.subr.mxu0 0.0
        %1921 = vmatpush1.msra.mxu0 0.0
        %1922 = vmatprep.subr.mxu0 0.0
        %1923 = vmatpush1.msra.mxu0 0.0
        %1924 = vmatprep.subr.mxu0 0.0
        %1925 = vmatpush1.msra.mxu0 0.0
        %1926 = vmatprep.subr.mxu0 0.0
        %1927 = vmatpush1.msra.mxu0 0.0
        %1928 = vmatprep.subr.mxu0 0.0
        %1929 = vmatpush1.msra.mxu0 0.0
        %1930 = vmatprep.subr.mxu0 0.0
        %1931 = vmatpush1.msra.mxu0 0.0
        %1932 = vmatprep.subr.mxu0 0.0
        %1933 = vmatpush1.msra.mxu0 0.0
        %1934 = vmatprep.subr.mxu0 0.0
        %1935 = vmatpush1.msra.mxu0 0.0
        %1936 = vmatprep.subr.mxu0 0.0
        %1937 = vmatpush1.msra.mxu0 0.0
        %1938 = vmatprep.subr.mxu0 0.0
        %1939 = vmatpush1.msra.mxu0 0.0
        %1940 = vmatprep.subr.mxu0 0.0
        %1941 = vmatpush1.msra.mxu0 0.0
        %1942 = vmatprep.subr.mxu0 0.0
        %1943 = vmatpush1.msra.mxu0 0.0
        %1944 = vmatprep.subr.mxu0 0.0
        %1945 = vmatpush1.msra.mxu0 0.0
        %1946 = vmatprep.subr.mxu0 0.0
        %1947 = vmatpush1.msra.mxu0 0.0
        %1948 = vmatprep.subr.mxu0 0.0
        %1949 = vmatpush1.msra.mxu0 0.0
        %1950 = vmatprep.subr.mxu0 0.0
        %1951 = vmatpush1.msra.mxu0 0.0
        %1952 = vmatprep.subr.mxu0 0.0
        %1953 = vmatpush1.msra.mxu0 0.0
        %1954 = vmatprep.subr.mxu0 0.0
        %1955 = vmatpush1.msra.mxu0 0.0
        %1956 = vmatprep.subr.mxu0 0.0
        %1957 = vmatpush1.msra.mxu0 0.0
        %1958 = vmatprep.subr.mxu0 0.0
        %1959 = vmatpush1.msra.mxu0 0.0
        %1960 = vmatprep.subr.mxu0 0.0
        %1961 = vmatpush1.msra.mxu0 0.0
        %1962 = vmatprep.subr.mxu0 0.0
        %1963 = vmatpush1.msra.mxu0 0.0
        %1964 = vmatprep.subr.mxu0 0.0
        %1965 = vmatpush1.msra.mxu0 0.0
        %1966 = vmatprep.subr.mxu0 0.0
        %1967 = vmatpush1.msra.mxu0 0.0
        %1968 = vmatprep.subr.mxu0 0.0
        %1969 = vmatpush1.msra.mxu0 0.0
        %1970 = vmatprep.subr.mxu0 0.0
        %1971 = vmatpush1.msra.mxu0 0.0
        %1972 = vmatprep.subr.mxu0 0.0
        %1973 = vmatpush1.msra.mxu0 0.0
        %1974 = vmatprep.subr.mxu0 0.0
        %1975 = vmatpush1.msra.mxu0 0.0
        %1976 = vmatprep.subr.mxu0 0.0
        %1977 = vmatpush1.msra.mxu0 0.0
        %1978 = vmatprep.subr.mxu0 0.0
        %1979 = vmatpush1.msra.mxu0 0.0
        %1980 = vmatprep.mubr.f32.mxu0 0.0
        %1981 = vmatmul.mubr.f32.gmra.mrb[0].mxu0 %v1051
        %v1982 = vpop.f32.mrb[0].mxu0
        %v1983 = vadd.f32 0.0, %v1982
        %v1984 = vpop.f32.mrb[0].mxu0
        %1985 = vmatprep.mubr.f32.mxu0 0.0
        %1986 = vmatmul.mubr.f32.gmra.mrb[0].mxu0 %v1053
        %v1987 = vpop.f32.mrb[0].mxu0
        %v1988 = vadd.f32 0.0, %v1987
        %v1989 = vpop.f32.mrb[0].mxu0
        %1990 = vmatprep.mubr.f32.mxu0 0.0
        %1991 = vmatmul.mubr.f32.gmra.mrb[0].mxu0 %v1055
        %v1992 = vpop.f32.mrb[0].mxu0
        %v1993 = vadd.f32 0.0, %v1992
        %v1994 = vpop.f32.mrb[0].mxu0
        %1995 = vmatprep.mubr.f32.mxu0 0.0
        %1996 = vmatmul.mubr.f32.gmra.mrb[0].mxu0 %v1057
        %v1997 = vpop.f32.mrb[0].mxu0
        %v1998 = vadd.f32 0.0, %v1997
        %v1999 = vpop.f32.mrb[0].mxu0
        %2000 = vmatprep.mubr.f32.mxu0 0.0
        %2001 = vmatmul.mubr.f32.gmra.mrb[0].mxu0 %v1059
        %v2002 = vpop.f32.mrb[0].mxu0
        %v2003 = vadd.f32 0.0, %v2002
        %v2004 = vpop.f32.mrb[0].mxu0
        %2005 = vmatprep.mubr.f32.mxu0 0.0
        %2006 = vmatmul.mubr.f32.gmra.mrb[0].mxu0 %v1061
        %v2007 = vpop.f32.mrb[0].mxu0
        %v2008 = vadd.f32 0.0, %v2007
        %v2009 = vpop.f32.mrb[0].mxu0
        %2010 = vmatprep.mubr.f32.mxu0 0.0
        %2011 = vmatmul.mubr.f32.gmra.mrb[0].mxu0 %v1063
        %v2012 = vpop.f32.mrb[0].mxu0
        %v2013 = vadd.f32 0.0, %v2012
        %v2014 = vpop.f32.mrb[0].mxu0
        %2015 = vmatprep.mubr.f32.mxu0 0.0
        %2016 = vmatmul.mubr.f32.gmra.mrb[0].mxu0 %v1065
        %v2017 = vpop.f32.mrb[0].mxu0
        %v2018 = vadd.f32 0.0, %v2017
        %v2019 = vpop.f32.mrb[0].mxu0
        %2020 = vmatprep.mubr.f32.mxu0 0.0
        %2021 = vmatmul.mubr.f32.gmra.mrb[0].mxu0 %v1067
        %v2022 = vpop.f32.mrb[0].mxu0
        %v2023 = vadd.f32 0.0, %v2022
        %v2024 = vpop.f32.mrb[0].mxu0
        %2025 = vmatprep.mubr.f32.mxu0 0.0
        %2026 = vmatmul.mubr.f32.gmra.mrb[0].mxu0 %v1069
        %v2027 = vpop.f32.mrb[0].mxu0
        %v2028 = vadd.f32 0.0, %v2027
        %v2029 = vpop.f32.mrb[0].mxu0
        %2030 = vmatprep.mubr.f32.mxu0 0.0
        %2031 = vmatmul.mubr.f32.gmra.mrb[0].mxu0 %v1071
        %v2032 = vpop.f32.mrb[0].mxu0
        %v2033 = vadd.f32 0.0, %v2032
        %v2034 = vpop.f32.mrb[0].mxu0
        %2035 = vmatprep.mubr.f32.mxu0 0.0
        %2036 = vmatmul.mubr.f32.gmra.mrb[0].mxu0 %v1073
        %v2037 = vpop.f32.mrb[0].mxu0
        %v2038 = vadd.f32 0.0, %v2037
        %v2039 = vpop.f32.mrb[0].mxu0
        %2040 = vmatprep.mubr.f32.mxu0 0.0
        %2041 = vmatmul.mubr.f32.gmra.mrb[0].mxu0 %v1075
        %v2042 = vpop.f32.mrb[0].mxu0
        %v2043 = vadd.f32 0.0, %v2042
        %v2044 = vpop.f32.mrb[0].mxu0
        %2045 = vmatprep.mubr.f32.mxu0 0.0
        %2046 = vmatmul.mubr.f32.gmra.mrb[0].mxu0 %v1077
        %v2047 = vpop.f32.mrb[0].mxu0
        %v2048 = vadd.f32 0.0, %v2047
        %v2049 = vpop.f32.mrb[0].mxu0
        %2050 = vmatprep.mubr.f32.mxu0 0.0
        %2051 = vmatmul.mubr.f32.gmra.mrb[0].mxu0 %v1079
        %v2052 = vpop.f32.mrb[0].mxu0
        %v2053 = vadd.f32 0.0, %v2052
        %v2054 = vpop.f32.mrb[0].mxu0
        %2055 = vmatprep.mubr.f32.mxu0 0.0
        %2056 = vmatmul.mubr.f32.gmra.mrb[0].mxu0 %v1081
        %v2057 = vpop.f32.mrb[0].mxu0
        %v2058 = vadd.f32 0.0, %v2057
        %v2059 = vpop.f32.mrb[0].mxu0
        %2060 = vmatprep.mubr.f32.mxu0 0.0
        %2061 = vmatmul.mubr.f32.gmra.mrb[0].mxu0 %v1083
        %v2062 = vpop.f32.mrb[0].mxu0
        %v2063 = vadd.f32 0.0, %v2062
        %v2064 = vpop.f32.mrb[0].mxu0
        %2065 = vmatprep.mubr.f32.mxu0 0.0
        %2066 = vmatmul.mubr.f32.gmra.mrb[0].mxu0 %v1085
        %v2067 = vpop.f32.mrb[0].mxu0
        %v2068 = vadd.f32 0.0, %v2067
        %v2069 = vpop.f32.mrb[0].mxu0
        %2070 = vmatprep.mubr.f32.mxu0 0.0
        %2071 = vmatmul.mubr.f32.gmra.mrb[0].mxu0 %v1087
        %v2072 = vpop.f32.mrb[0].mxu0
        %v2073 = vadd.f32 0.0, %v2072
        %v2074 = vpop.f32.mrb[0].mxu0
        %2075 = vmatprep.mubr.f32.mxu0 0.0
        %2076 = vmatmul.mubr.f32.gmra.mrb[0].mxu0 %v1089
        %v2077 = vpop.f32.mrb[0].mxu0
        %v2078 = vadd.f32 0.0, %v2077
        %v2079 = vpop.f32.mrb[0].mxu0
        %2080 = vmatprep.mubr.f32.mxu0 0.0
        %2081 = vmatmul.mubr.f32.gmra.mrb[0].mxu0 %v1091
        %v2082 = vpop.f32.mrb[0].mxu0
        %v2083 = vadd.f32 0.0, %v2082
        %v2084 = vpop.f32.mrb[0].mxu0
        %2085 = vmatprep.mubr.f32.mxu0 0.0
        %2086 = vmatmul.mubr.f32.gmra.mrb[0].mxu0 %v1093
        %v2087 = vpop.f32.mrb[0].mxu0
        %v2088 = vadd.f32 0.0, %v2087
        %v2089 = vpop.f32.mrb[0].mxu0
        %2090 = vmatprep.mubr.f32.mxu0 0.0
        %2091 = vmatmul.mubr.f32.gmra.mrb[0].mxu0 %v1095
        %v2092 = vpop.f32.mrb[0].mxu0
        %v2093 = vadd.f32 0.0, %v2092
        %v2094 = vpop.f32.mrb[0].mxu0
        %2095 = vmatprep.mubr.f32.mxu0 0.0
        %2096 = vmatmul.mubr.f32.gmra.mrb[0].mxu0 %v1097
        %v2097 = vpop.f32.mrb[0].mxu0
        %v2098 = vadd.f32 0.0, %v2097
        %v2099 = vpop.f32.mrb[0].mxu0
        %2100 = vmatprep.mubr.f32.mxu0 0.0
        %2101 = vmatmul.mubr.f32.gmra.mrb[0].mxu0 %v1099
        %v2102 = vpop.f32.mrb[0].mxu0
        %v2103 = vadd.f32 0.0, %v2102
        %v2104 = vpop.f32.mrb[0].mxu0
        %2105 = vmatprep.mubr.f32.mxu0 0.0
        %2106 = vmatmul.mubr.f32.gmra.mrb[0].mxu0 %v1101
        %v2107 = vpop.f32.mrb[0].mxu0
        %v2108 = vadd.f32 0.0, %v2107
        %v2109 = vpop.f32.mrb[0].mxu0
        %2110 = vmatprep.mubr.f32.mxu0 0.0
        %2111 = vmatmul.mubr.f32.gmra.mrb[0].mxu0 %v1103
        %v2112 = vpop.f32.mrb[0].mxu0
        %v2113 = vadd.f32 0.0, %v2112
        %v2114 = vpop.f32.mrb[0].mxu0
        %2115 = vmatprep.mubr.f32.mxu0 0.0
        %2116 = vmatmul.mubr.f32.gmra.mrb[0].mxu0 %v1105
        %v2117 = vpop.f32.mrb[0].mxu0
        %v2118 = vadd.f32 0.0, %v2117
        %v2119 = vpop.f32.mrb[0].mxu0
        %2120 = vmatprep.mubr.f32.mxu0 0.0
        %2121 = vmatmul.mubr.f32.gmra.mrb[0].mxu0 %v1107
        %v2122 = vpop.f32.mrb[0].mxu0
        %v2123 = vadd.f32 0.0, %v2122
        %v2124 = vpop.f32.mrb[0].mxu0
        %2125 = vmatprep.mubr.f32.mxu0 0.0
        %2126 = vmatmul.mubr.f32.gmra.mrb[0].mxu0 %v1109
        %v2127 = vpop.f32.mrb[0].mxu0
        %v2128 = vadd.f32 0.0, %v2127
        %v2129 = vpop.f32.mrb[0].mxu0
        %2130 = vmatprep.mubr.f32.mxu0 0.0
        %2131 = vmatmul.mubr.f32.gmra.mrb[0].mxu0 %v1912
        %v2132 = vpop.f32.mrb[0].mxu0
        %v2133 = vadd.f32 0.0, %v2132
        %v2134 = vpop.f32.mrb[0].mxu0
        %2135 = vmatprep.mubr.f32.mxu0 0.0
        %2136 = vmatmul.mubr.f32.gmra.mrb[0].mxu0 %v1914
        %v2137 = vpop.f32.mrb[0].mxu0
        %v2138 = vadd.f32 0.0, %v2137
        %v2139 = vpop.f32.mrb[0].mxu0
        %2140 = vdwg.mxu0
        %v2141 = vadd.f32 %v1872, %v1983
        %v2142 = vadd.f32 %v1873, %v1988
        %v2143 = vadd.f32 %v1874, %v1993
        %v2144 = vadd.f32 %v1875, %v1998
        %v2145 = vadd.f32 %v1876, %v2003
        %v2146 = vadd.f32 %v1877, %v2008
        %v2147 = vadd.f32 %v1878, %v2013
        %v2148 = vadd.f32 %v1879, %v2018
        %v2149 = vadd.f32 %v1880, %v2023
        %v2150 = vadd.f32 %v1881, %v2028
        %v2151 = vadd.f32 %v1882, %v2033
        %v2152 = vadd.f32 %v1883, %v2038
        %v2153 = vadd.f32 %v1884, %v2043
        %v2154 = vadd.f32 %v1885, %v2048
        %v2155 = vadd.f32 %v1886, %v2053
        %v2156 = vadd.f32 %v1887, %v2058
        %v2157 = vadd.f32 %v1888, %v2063
        %v2158 = vadd.f32 %v1889, %v2068
        %v2159 = vadd.f32 %v1890, %v2073
        %v2160 = vadd.f32 %v1891, %v2078
        %v2161 = vadd.f32 %v1892, %v2083
        %v2162 = vadd.f32 %v1893, %v2088
        %v2163 = vadd.f32 %v1894, %v2093
        %v2164 = vadd.f32 %v1895, %v2098
        %v2165 = vadd.f32 %v1896, %v2103
        %v2166 = vadd.f32 %v1897, %v2108
        %v2167 = vadd.f32 %v1898, %v2113
        %v2168 = vadd.f32 %v1899, %v2118
        %v2169 = vadd.f32 %v1900, %v2123
        %v2170 = vadd.f32 %v1901, %v2128
        %v2171 = vadd.f32 %v1902, %v2133
        %v2172 = vadd.f32 %v1903, %v2138
        %s2173 = scalar_lea.vmem %s1, 96
        %v2174 = vld [vmem:[%s2173] sm:$0xff]
        %v2175 = vld [vmem:[%s2173 + $0x8] sm:$0xff]
        %v2177 = vsel %vm384, %v247, 0
        %v2180 = vsel %vm384, %v248, 0
        %2182 = vmatprep.subr.mxu0 0.0
        %2183 = vmatpush1.msra.mxu0 %v2174
        %2184 = vmatprep.subr.mxu0 0.0
        %2185 = vmatpush1.msra.mxu0 %v2175
        %2186 = vmatprep.subr.mxu0 0.0
        %2187 = vmatpush1.msra.mxu0 0.0
        %2188 = vmatprep.subr.mxu0 0.0
        %2189 = vmatpush1.msra.mxu0 0.0
        %2190 = vmatprep.subr.mxu0 0.0
        %2191 = vmatpush1.msra.mxu0 0.0
        %2192 = vmatprep.subr.mxu0 0.0
        %2193 = vmatpush1.msra.mxu0 0.0
        %2194 = vmatprep.subr.mxu0 0.0
        %2195 = vmatpush1.msra.mxu0 0.0
        %2196 = vmatprep.subr.mxu0 0.0
        %2197 = vmatpush1.msra.mxu0 0.0
        %2198 = vmatprep.subr.mxu0 0.0
        %2199 = vmatpush1.msra.mxu0 0.0
        %2200 = vmatprep.subr.mxu0 0.0
        %2201 = vmatpush1.msra.mxu0 0.0
        %2202 = vmatprep.subr.mxu0 0.0
        %2203 = vmatpush1.msra.mxu0 0.0
        %2204 = vmatprep.subr.mxu0 0.0
        %2205 = vmatpush1.msra.mxu0 0.0
        %2206 = vmatprep.subr.mxu0 0.0
        %2207 = vmatpush1.msra.mxu0 0.0
        %2208 = vmatprep.subr.mxu0 0.0
        %2209 = vmatpush1.msra.mxu0 0.0
        %2210 = vmatprep.subr.mxu0 0.0
        %2211 = vmatpush1.msra.mxu0 0.0
        %2212 = vmatprep.subr.mxu0 0.0
        %2213 = vmatpush1.msra.mxu0 0.0
        %2214 = vmatprep.subr.mxu0 0.0
        %2215 = vmatpush1.msra.mxu0 0.0
        %2216 = vmatprep.subr.mxu0 0.0
        %2217 = vmatpush1.msra.mxu0 0.0
        %2218 = vmatprep.subr.mxu0 0.0
        %2219 = vmatpush1.msra.mxu0 0.0
        %2220 = vmatprep.subr.mxu0 0.0
        %2221 = vmatpush1.msra.mxu0 0.0
        %2222 = vmatprep.subr.mxu0 0.0
        %2223 = vmatpush1.msra.mxu0 0.0
        %2224 = vmatprep.subr.mxu0 0.0
        %2225 = vmatpush1.msra.mxu0 0.0
        %2226 = vmatprep.subr.mxu0 0.0
        %2227 = vmatpush1.msra.mxu0 0.0
        %2228 = vmatprep.subr.mxu0 0.0
        %2229 = vmatpush1.msra.mxu0 0.0
        %2230 = vmatprep.subr.mxu0 0.0
        %2231 = vmatpush1.msra.mxu0 0.0
        %2232 = vmatprep.subr.mxu0 0.0
        %2233 = vmatpush1.msra.mxu0 0.0
        %2234 = vmatprep.subr.mxu0 0.0
        %2235 = vmatpush1.msra.mxu0 0.0
        %2236 = vmatprep.subr.mxu0 0.0
        %2237 = vmatpush1.msra.mxu0 0.0
        %2238 = vmatprep.subr.mxu0 0.0
        %2239 = vmatpush1.msra.mxu0 0.0
        %2240 = vmatprep.subr.mxu0 0.0
        %2241 = vmatpush1.msra.mxu0 0.0
        %2242 = vmatprep.subr.mxu0 0.0
        %2243 = vmatpush1.msra.mxu0 0.0
        %2244 = vmatprep.subr.mxu0 0.0
        %2245 = vmatpush1.msra.mxu0 0.0
        %2246 = vmatprep.mubr.f32.mxu0 0.0
        %2247 = vmatmul.mubr.f32.gmra.mrb[0].mxu0 %v682
        %v2248 = vpop.f32.mrb[0].mxu0
        %v2249 = vadd.f32 0.0, %v2248
        %v2250 = vpop.f32.mrb[0].mxu0
        %2251 = vmatprep.mubr.f32.mxu0 0.0
        %2252 = vmatmul.mubr.f32.gmra.mrb[0].mxu0 %v684
        %v2253 = vpop.f32.mrb[0].mxu0
        %v2254 = vadd.f32 0.0, %v2253
        %v2255 = vpop.f32.mrb[0].mxu0
        %2256 = vmatprep.mubr.f32.mxu0 0.0
        %2257 = vmatmul.mubr.f32.gmra.mrb[0].mxu0 %v686
        %v2258 = vpop.f32.mrb[0].mxu0
        %v2259 = vadd.f32 0.0, %v2258
        %v2260 = vpop.f32.mrb[0].mxu0
        %2261 = vmatprep.mubr.f32.mxu0 0.0
        %2262 = vmatmul.mubr.f32.gmra.mrb[0].mxu0 %v688
        %v2263 = vpop.f32.mrb[0].mxu0
        %v2264 = vadd.f32 0.0, %v2263
        %v2265 = vpop.f32.mrb[0].mxu0
        %2266 = vmatprep.mubr.f32.mxu0 0.0
        %2267 = vmatmul.mubr.f32.gmra.mrb[0].mxu0 %v690
        %v2268 = vpop.f32.mrb[0].mxu0
        %v2269 = vadd.f32 0.0, %v2268
        %v2270 = vpop.f32.mrb[0].mxu0
        %2271 = vmatprep.mubr.f32.mxu0 0.0
        %2272 = vmatmul.mubr.f32.gmra.mrb[0].mxu0 %v692
        %v2273 = vpop.f32.mrb[0].mxu0
        %v2274 = vadd.f32 0.0, %v2273
        %v2275 = vpop.f32.mrb[0].mxu0
        %2276 = vmatprep.mubr.f32.mxu0 0.0
        %2277 = vmatmul.mubr.f32.gmra.mrb[0].mxu0 %v694
        %v2278 = vpop.f32.mrb[0].mxu0
        %v2279 = vadd.f32 0.0, %v2278
        %v2280 = vpop.f32.mrb[0].mxu0
        %2281 = vmatprep.mubr.f32.mxu0 0.0
        %2282 = vmatmul.mubr.f32.gmra.mrb[0].mxu0 %v696
        %v2283 = vpop.f32.mrb[0].mxu0
        %v2284 = vadd.f32 0.0, %v2283
        %v2285 = vpop.f32.mrb[0].mxu0
        %2286 = vmatprep.mubr.f32.mxu0 0.0
        %2287 = vmatmul.mubr.f32.gmra.mrb[0].mxu0 %v698
        %v2288 = vpop.f32.mrb[0].mxu0
        %v2289 = vadd.f32 0.0, %v2288
        %v2290 = vpop.f32.mrb[0].mxu0
        %2291 = vmatprep.mubr.f32.mxu0 0.0
        %2292 = vmatmul.mubr.f32.gmra.mrb[0].mxu0 %v700
        %v2293 = vpop.f32.mrb[0].mxu0
        %v2294 = vadd.f32 0.0, %v2293
        %v2295 = vpop.f32.mrb[0].mxu0
        %2296 = vmatprep.mubr.f32.mxu0 0.0
        %2297 = vmatmul.mubr.f32.gmra.mrb[0].mxu0 %v702
        %v2298 = vpop.f32.mrb[0].mxu0
        %v2299 = vadd.f32 0.0, %v2298
        %v2300 = vpop.f32.mrb[0].mxu0
        %2301 = vmatprep.mubr.f32.mxu0 0.0
        %2302 = vmatmul.mubr.f32.gmra.mrb[0].mxu0 %v704
        %v2303 = vpop.f32.mrb[0].mxu0
        %v2304 = vadd.f32 0.0, %v2303
        %v2305 = vpop.f32.mrb[0].mxu0
        %2306 = vmatprep.mubr.f32.mxu0 0.0
        %2307 = vmatmul.mubr.f32.gmra.mrb[0].mxu0 %v706
        %v2308 = vpop.f32.mrb[0].mxu0
        %v2309 = vadd.f32 0.0, %v2308
        %v2310 = vpop.f32.mrb[0].mxu0
        %2311 = vmatprep.mubr.f32.mxu0 0.0
        %2312 = vmatmul.mubr.f32.gmra.mrb[0].mxu0 %v708
        %v2313 = vpop.f32.mrb[0].mxu0
        %v2314 = vadd.f32 0.0, %v2313
        %v2315 = vpop.f32.mrb[0].mxu0
        %2316 = vmatprep.mubr.f32.mxu0 0.0
        %2317 = vmatmul.mubr.f32.gmra.mrb[0].mxu0 %v710
        %v2318 = vpop.f32.mrb[0].mxu0
        %v2319 = vadd.f32 0.0, %v2318
        %v2320 = vpop.f32.mrb[0].mxu0
        %2321 = vmatprep.mubr.f32.mxu0 0.0
        %2322 = vmatmul.mubr.f32.gmra.mrb[0].mxu0 %v712
        %v2323 = vpop.f32.mrb[0].mxu0
        %v2324 = vadd.f32 0.0, %v2323
        %v2325 = vpop.f32.mrb[0].mxu0
        %2326 = vmatprep.mubr.f32.mxu0 0.0
        %2327 = vmatmul.mubr.f32.gmra.mrb[0].mxu0 %v714
        %v2328 = vpop.f32.mrb[0].mxu0
        %v2329 = vadd.f32 0.0, %v2328
        %v2330 = vpop.f32.mrb[0].mxu0
        %2331 = vmatprep.mubr.f32.mxu0 0.0
        %2332 = vmatmul.mubr.f32.gmra.mrb[0].mxu0 %v716
        %v2333 = vpop.f32.mrb[0].mxu0
        %v2334 = vadd.f32 0.0, %v2333
        %v2335 = vpop.f32.mrb[0].mxu0
        %2336 = vmatprep.mubr.f32.mxu0 0.0
        %2337 = vmatmul.mubr.f32.gmra.mrb[0].mxu0 %v718
        %v2338 = vpop.f32.mrb[0].mxu0
        %v2339 = vadd.f32 0.0, %v2338
        %v2340 = vpop.f32.mrb[0].mxu0
        %2341 = vmatprep.mubr.f32.mxu0 0.0
        %2342 = vmatmul.mubr.f32.gmra.mrb[0].mxu0 %v720
        %v2343 = vpop.f32.mrb[0].mxu0
        %v2344 = vadd.f32 0.0, %v2343
        %v2345 = vpop.f32.mrb[0].mxu0
        %2346 = vmatprep.mubr.f32.mxu0 0.0
        %2347 = vmatmul.mubr.f32.gmra.mrb[0].mxu0 %v722
        %v2348 = vpop.f32.mrb[0].mxu0
        %v2349 = vadd.f32 0.0, %v2348
        %v2350 = vpop.f32.mrb[0].mxu0
        %2351 = vmatprep.mubr.f32.mxu0 0.0
        %2352 = vmatmul.mubr.f32.gmra.mrb[0].mxu0 %v724
        %v2353 = vpop.f32.mrb[0].mxu0
        %v2354 = vadd.f32 0.0, %v2353
        %v2355 = vpop.f32.mrb[0].mxu0
        %2356 = vmatprep.mubr.f32.mxu0 0.0
        %2357 = vmatmul.mubr.f32.gmra.mrb[0].mxu0 %v726
        %v2358 = vpop.f32.mrb[0].mxu0
        %v2359 = vadd.f32 0.0, %v2358
        %v2360 = vpop.f32.mrb[0].mxu0
        %2361 = vmatprep.mubr.f32.mxu0 0.0
        %2362 = vmatmul.mubr.f32.gmra.mrb[0].mxu0 %v728
        %v2363 = vpop.f32.mrb[0].mxu0
        %v2364 = vadd.f32 0.0, %v2363
        %v2365 = vpop.f32.mrb[0].mxu0
        %2366 = vmatprep.mubr.f32.mxu0 0.0
        %2367 = vmatmul.mubr.f32.gmra.mrb[0].mxu0 %v730
        %v2368 = vpop.f32.mrb[0].mxu0
        %v2369 = vadd.f32 0.0, %v2368
        %v2370 = vpop.f32.mrb[0].mxu0
        %2371 = vmatprep.mubr.f32.mxu0 0.0
        %2372 = vmatmul.mubr.f32.gmra.mrb[0].mxu0 %v732
        %v2373 = vpop.f32.mrb[0].mxu0
        %v2374 = vadd.f32 0.0, %v2373
        %v2375 = vpop.f32.mrb[0].mxu0
        %2376 = vmatprep.mubr.f32.mxu0 0.0
        %2377 = vmatmul.mubr.f32.gmra.mrb[0].mxu0 %v734
        %v2378 = vpop.f32.mrb[0].mxu0
        %v2379 = vadd.f32 0.0, %v2378
        %v2380 = vpop.f32.mrb[0].mxu0
        %2381 = vmatprep.mubr.f32.mxu0 0.0
        %2382 = vmatmul.mubr.f32.gmra.mrb[0].mxu0 %v736
        %v2383 = vpop.f32.mrb[0].mxu0
        %v2384 = vadd.f32 0.0, %v2383
        %v2385 = vpop.f32.mrb[0].mxu0
        %2386 = vmatprep.mubr.f32.mxu0 0.0
        %2387 = vmatmul.mubr.f32.gmra.mrb[0].mxu0 %v1372
        %v2388 = vpop.f32.mrb[0].mxu0
        %v2389 = vadd.f32 0.0, %v2388
        %v2390 = vpop.f32.mrb[0].mxu0
        %2391 = vmatprep.mubr.f32.mxu0 0.0
        %2392 = vmatmul.mubr.f32.gmra.mrb[0].mxu0 %v1375
        %v2393 = vpop.f32.mrb[0].mxu0
        %v2394 = vadd.f32 0.0, %v2393
        %v2395 = vpop.f32.mrb[0].mxu0
        %2396 = vmatprep.mubr.f32.mxu0 0.0
        %2397 = vmatmul.mubr.f32.gmra.mrb[0].mxu0 %v2177
        %v2398 = vpop.f32.mrb[0].mxu0
        %v2399 = vadd.f32 0.0, %v2398
        %v2400 = vpop.f32.mrb[0].mxu0
        %2401 = vmatprep.mubr.f32.mxu0 0.0
        %2402 = vmatmul.mubr.f32.gmra.mrb[0].mxu0 %v2180
        %v2403 = vpop.f32.mrb[0].mxu0
        %v2404 = vadd.f32 0.0, %v2403
        %v2405 = vpop.f32.mrb[0].mxu0
        %2406 = vdwg.mxu0
        %v2407 = vadd.f32 %v2141, %v2249
        %v2408 = vadd.f32 %v2142, %v2254
        %v2409 = vadd.f32 %v2143, %v2259
        %v2410 = vadd.f32 %v2144, %v2264
        %v2411 = vadd.f32 %v2145, %v2269
        %v2412 = vadd.f32 %v2146, %v2274
        %v2413 = vadd.f32 %v2147, %v2279
        %v2414 = vadd.f32 %v2148, %v2284
        %v2415 = vadd.f32 %v2149, %v2289
        %v2416 = vadd.f32 %v2150, %v2294
        %v2417 = vadd.f32 %v2151, %v2299
        %v2418 = vadd.f32 %v2152, %v2304
        %v2419 = vadd.f32 %v2153, %v2309
        %v2420 = vadd.f32 %v2154, %v2314
        %v2421 = vadd.f32 %v2155, %v2319
        %v2422 = vadd.f32 %v2156, %v2324
        %v2423 = vadd.f32 %v2157, %v2329
        %v2424 = vadd.f32 %v2158, %v2334
        %v2425 = vadd.f32 %v2159, %v2339
        %v2426 = vadd.f32 %v2160, %v2344
        %v2427 = vadd.f32 %v2161, %v2349
        %v2428 = vadd.f32 %v2162, %v2354
        %v2429 = vadd.f32 %v2163, %v2359
        %v2430 = vadd.f32 %v2164, %v2364
        %v2431 = vadd.f32 %v2165, %v2369
        %v2432 = vadd.f32 %v2166, %v2374
        %v2433 = vadd.f32 %v2167, %v2379
        %v2434 = vadd.f32 %v2168, %v2384
        %v2435 = vadd.f32 %v2169, %v2389
        %v2436 = vadd.f32 %v2170, %v2394
        %v2437 = vadd.f32 %v2171, %v2399
        %v2438 = vadd.f32 %v2172, %v2404
        %v2440 = vrot.slane %v247, 1
        %v2441 = vrot.slane %v248, 1
        %v2442 = vsel %vm300, %v2440, %v2441
        %v2443 = vrot.slane %v249, 1
        %v2444 = vsel %vm300, %v2441, %v2443
        %s2445 = scalar_lea.vmem %s1, 112
        %v2446 = vld [vmem:[%s2445] sm:$0xff]
        %v2447 = vld [vmem:[%s2445 + $0x8] sm:$0xff]
        %v2448 = vsel %vm384, %v2442, 0
        %v2450 = vsel %vm384, %v2444, 0
        %2452 = vmatprep.subr.mxu0 0.0
        %2453 = vmatpush1.msra.mxu0 %v2446
        %2454 = vmatprep.subr.mxu0 0.0
        %2455 = vmatpush1.msra.mxu0 %v2447
        %2456 = vmatprep.subr.mxu0 0.0
        %2457 = vmatpush1.msra.mxu0 0.0
        %2458 = vmatprep.subr.mxu0 0.0
        %2459 = vmatpush1.msra.mxu0 0.0
        %2460 = vmatprep.subr.mxu0 0.0
        %2461 = vmatpush1.msra.mxu0 0.0
        %2462 = vmatprep.subr.mxu0 0.0
        %2463 = vmatpush1.msra.mxu0 0.0
        %2464 = vmatprep.subr.mxu0 0.0
        %2465 = vmatpush1.msra.mxu0 0.0
        %2466 = vmatprep.subr.mxu0 0.0
        %2467 = vmatpush1.msra.mxu0 0.0
        %2468 = vmatprep.subr.mxu0 0.0
        %2469 = vmatpush1.msra.mxu0 0.0
        %2470 = vmatprep.subr.mxu0 0.0
        %2471 = vmatpush1.msra.mxu0 0.0
        %2472 = vmatprep.subr.mxu0 0.0
        %2473 = vmatpush1.msra.mxu0 0.0
        %2474 = vmatprep.subr.mxu0 0.0
        %2475 = vmatpush1.msra.mxu0 0.0
        %2476 = vmatprep.subr.mxu0 0.0
        %2477 = vmatpush1.msra.mxu0 0.0
        %2478 = vmatprep.subr.mxu0 0.0
        %2479 = vmatpush1.msra.mxu0 0.0
        %2480 = vmatprep.subr.mxu0 0.0
        %2481 = vmatpush1.msra.mxu0 0.0
        %2482 = vmatprep.subr.mxu0 0.0
        %2483 = vmatpush1.msra.mxu0 0.0
        %2484 = vmatprep.subr.mxu0 0.0
        %2485 = vmatpush1.msra.mxu0 0.0
        %2486 = vmatprep.subr.mxu0 0.0
        %2487 = vmatpush1.msra.mxu0 0.0
        %2488 = vmatprep.subr.mxu0 0.0
        %2489 = vmatpush1.msra.mxu0 0.0
        %2490 = vmatprep.subr.mxu0 0.0
        %2491 = vmatpush1.msra.mxu0 0.0
        %2492 = vmatprep.subr.mxu0 0.0
        %2493 = vmatpush1.msra.mxu0 0.0
        %2494 = vmatprep.subr.mxu0 0.0
        %2495 = vmatpush1.msra.mxu0 0.0
        %2496 = vmatprep.subr.mxu0 0.0
        %2497 = vmatpush1.msra.mxu0 0.0
        %2498 = vmatprep.subr.mxu0 0.0
        %2499 = vmatpush1.msra.mxu0 0.0
        %2500 = vmatprep.subr.mxu0 0.0
        %2501 = vmatpush1.msra.mxu0 0.0
        %2502 = vmatprep.subr.mxu0 0.0
        %2503 = vmatpush1.msra.mxu0 0.0
        %2504 = vmatprep.subr.mxu0 0.0
        %2505 = vmatpush1.msra.mxu0 0.0
        %2506 = vmatprep.subr.mxu0 0.0
        %2507 = vmatpush1.msra.mxu0 0.0
        %2508 = vmatprep.subr.mxu0 0.0
        %2509 = vmatpush1.msra.mxu0 0.0
        %2510 = vmatprep.subr.mxu0 0.0
        %2511 = vmatpush1.msra.mxu0 0.0
        %2512 = vmatprep.subr.mxu0 0.0
        %2513 = vmatpush1.msra.mxu0 0.0
        %2514 = vmatprep.subr.mxu0 0.0
        %2515 = vmatpush1.msra.mxu0 0.0
        %2516 = vmatprep.mubr.f32.mxu0 0.0
        %2517 = vmatmul.mubr.f32.gmra.mrb[0].mxu0 %v393
        %v2518 = vpop.f32.mrb[0].mxu0
        %v2519 = vadd.f32 0.0, %v2518
        %v2520 = vpop.f32.mrb[0].mxu0
        %2521 = vmatprep.mubr.f32.mxu0 0.0
        %2522 = vmatmul.mubr.f32.gmra.mrb[0].mxu0 %v395
        %v2523 = vpop.f32.mrb[0].mxu0
        %v2524 = vadd.f32 0.0, %v2523
        %v2525 = vpop.f32.mrb[0].mxu0
        %2526 = vmatprep.mubr.f32.mxu0 0.0
        %2527 = vmatmul.mubr.f32.gmra.mrb[0].mxu0 %v397
        %v2528 = vpop.f32.mrb[0].mxu0
        %v2529 = vadd.f32 0.0, %v2528
        %v2530 = vpop.f32.mrb[0].mxu0
        %2531 = vmatprep.mubr.f32.mxu0 0.0
        %2532 = vmatmul.mubr.f32.gmra.mrb[0].mxu0 %v399
        %v2533 = vpop.f32.mrb[0].mxu0
        %v2534 = vadd.f32 0.0, %v2533
        %v2535 = vpop.f32.mrb[0].mxu0
        %2536 = vmatprep.mubr.f32.mxu0 0.0
        %2537 = vmatmul.mubr.f32.gmra.mrb[0].mxu0 %v401
        %v2538 = vpop.f32.mrb[0].mxu0
        %v2539 = vadd.f32 0.0, %v2538
        %v2540 = vpop.f32.mrb[0].mxu0
        %2541 = vmatprep.mubr.f32.mxu0 0.0
        %2542 = vmatmul.mubr.f32.gmra.mrb[0].mxu0 %v403
        %v2543 = vpop.f32.mrb[0].mxu0
        %v2544 = vadd.f32 0.0, %v2543
        %v2545 = vpop.f32.mrb[0].mxu0
        %2546 = vmatprep.mubr.f32.mxu0 0.0
        %2547 = vmatmul.mubr.f32.gmra.mrb[0].mxu0 %v405
        %v2548 = vpop.f32.mrb[0].mxu0
        %v2549 = vadd.f32 0.0, %v2548
        %v2550 = vpop.f32.mrb[0].mxu0
        %2551 = vmatprep.mubr.f32.mxu0 0.0
        %2552 = vmatmul.mubr.f32.gmra.mrb[0].mxu0 %v407
        %v2553 = vpop.f32.mrb[0].mxu0
        %v2554 = vadd.f32 0.0, %v2553
        %v2555 = vpop.f32.mrb[0].mxu0
        %2556 = vmatprep.mubr.f32.mxu0 0.0
        %2557 = vmatmul.mubr.f32.gmra.mrb[0].mxu0 %v409
        %v2558 = vpop.f32.mrb[0].mxu0
        %v2559 = vadd.f32 0.0, %v2558
        %v2560 = vpop.f32.mrb[0].mxu0
        %2561 = vmatprep.mubr.f32.mxu0 0.0
        %2562 = vmatmul.mubr.f32.gmra.mrb[0].mxu0 %v411
        %v2563 = vpop.f32.mrb[0].mxu0
        %v2564 = vadd.f32 0.0, %v2563
        %v2565 = vpop.f32.mrb[0].mxu0
        %2566 = vmatprep.mubr.f32.mxu0 0.0
        %2567 = vmatmul.mubr.f32.gmra.mrb[0].mxu0 %v413
        %v2568 = vpop.f32.mrb[0].mxu0
        %v2569 = vadd.f32 0.0, %v2568
        %v2570 = vpop.f32.mrb[0].mxu0
        %2571 = vmatprep.mubr.f32.mxu0 0.0
        %2572 = vmatmul.mubr.f32.gmra.mrb[0].mxu0 %v415
        %v2573 = vpop.f32.mrb[0].mxu0
        %v2574 = vadd.f32 0.0, %v2573
        %v2575 = vpop.f32.mrb[0].mxu0
        %2576 = vmatprep.mubr.f32.mxu0 0.0
        %2577 = vmatmul.mubr.f32.gmra.mrb[0].mxu0 %v417
        %v2578 = vpop.f32.mrb[0].mxu0
        %v2579 = vadd.f32 0.0, %v2578
        %v2580 = vpop.f32.mrb[0].mxu0
        %2581 = vmatprep.mubr.f32.mxu0 0.0
        %2582 = vmatmul.mubr.f32.gmra.mrb[0].mxu0 %v419
        %v2583 = vpop.f32.mrb[0].mxu0
        %v2584 = vadd.f32 0.0, %v2583
        %v2585 = vpop.f32.mrb[0].mxu0
        %2586 = vmatprep.mubr.f32.mxu0 0.0
        %2587 = vmatmul.mubr.f32.gmra.mrb[0].mxu0 %v421
        %v2588 = vpop.f32.mrb[0].mxu0
        %v2589 = vadd.f32 0.0, %v2588
        %v2590 = vpop.f32.mrb[0].mxu0
        %2591 = vmatprep.mubr.f32.mxu0 0.0
        %2592 = vmatmul.mubr.f32.gmra.mrb[0].mxu0 %v423
        %v2593 = vpop.f32.mrb[0].mxu0
        %v2594 = vadd.f32 0.0, %v2593
        %v2595 = vpop.f32.mrb[0].mxu0
        %2596 = vmatprep.mubr.f32.mxu0 0.0
        %2597 = vmatmul.mubr.f32.gmra.mrb[0].mxu0 %v425
        %v2598 = vpop.f32.mrb[0].mxu0
        %v2599 = vadd.f32 0.0, %v2598
        %v2600 = vpop.f32.mrb[0].mxu0
        %2601 = vmatprep.mubr.f32.mxu0 0.0
        %2602 = vmatmul.mubr.f32.gmra.mrb[0].mxu0 %v427
        %v2603 = vpop.f32.mrb[0].mxu0
        %v2604 = vadd.f32 0.0, %v2603
        %v2605 = vpop.f32.mrb[0].mxu0
        %2606 = vmatprep.mubr.f32.mxu0 0.0
        %2607 = vmatmul.mubr.f32.gmra.mrb[0].mxu0 %v429
        %v2608 = vpop.f32.mrb[0].mxu0
        %v2609 = vadd.f32 0.0, %v2608
        %v2610 = vpop.f32.mrb[0].mxu0
        %2611 = vmatprep.mubr.f32.mxu0 0.0
        %2612 = vmatmul.mubr.f32.gmra.mrb[0].mxu0 %v431
        %v2613 = vpop.f32.mrb[0].mxu0
        %v2614 = vadd.f32 0.0, %v2613
        %v2615 = vpop.f32.mrb[0].mxu0
        %2616 = vmatprep.mubr.f32.mxu0 0.0
        %2617 = vmatmul.mubr.f32.gmra.mrb[0].mxu0 %v433
        %v2618 = vpop.f32.mrb[0].mxu0
        %v2619 = vadd.f32 0.0, %v2618
        %v2620 = vpop.f32.mrb[0].mxu0
        %2621 = vmatprep.mubr.f32.mxu0 0.0
        %2622 = vmatmul.mubr.f32.gmra.mrb[0].mxu0 %v435
        %v2623 = vpop.f32.mrb[0].mxu0
        %v2624 = vadd.f32 0.0, %v2623
        %v2625 = vpop.f32.mrb[0].mxu0
        %2626 = vmatprep.mubr.f32.mxu0 0.0
        %2627 = vmatmul.mubr.f32.gmra.mrb[0].mxu0 %v437
        %v2628 = vpop.f32.mrb[0].mxu0
        %v2629 = vadd.f32 0.0, %v2628
        %v2630 = vpop.f32.mrb[0].mxu0
        %2631 = vmatprep.mubr.f32.mxu0 0.0
        %2632 = vmatmul.mubr.f32.gmra.mrb[0].mxu0 %v439
        %v2633 = vpop.f32.mrb[0].mxu0
        %v2634 = vadd.f32 0.0, %v2633
        %v2635 = vpop.f32.mrb[0].mxu0
        %2636 = vmatprep.mubr.f32.mxu0 0.0
        %2637 = vmatmul.mubr.f32.gmra.mrb[0].mxu0 %v441
        %v2638 = vpop.f32.mrb[0].mxu0
        %v2639 = vadd.f32 0.0, %v2638
        %v2640 = vpop.f32.mrb[0].mxu0
        %2641 = vmatprep.mubr.f32.mxu0 0.0
        %2642 = vmatmul.mubr.f32.gmra.mrb[0].mxu0 %v443
        %v2643 = vpop.f32.mrb[0].mxu0
        %v2644 = vadd.f32 0.0, %v2643
        %v2645 = vpop.f32.mrb[0].mxu0
        %2646 = vmatprep.mubr.f32.mxu0 0.0
        %2647 = vmatmul.mubr.f32.gmra.mrb[0].mxu0 %v445
        %v2648 = vpop.f32.mrb[0].mxu0
        %v2649 = vadd.f32 0.0, %v2648
        %v2650 = vpop.f32.mrb[0].mxu0
        %2651 = vmatprep.mubr.f32.mxu0 0.0
        %2652 = vmatmul.mubr.f32.gmra.mrb[0].mxu0 %v447
        %v2653 = vpop.f32.mrb[0].mxu0
        %v2654 = vadd.f32 0.0, %v2653
        %v2655 = vpop.f32.mrb[0].mxu0
        %2656 = vmatprep.mubr.f32.mxu0 0.0
        %2657 = vmatmul.mubr.f32.gmra.mrb[0].mxu0 %v1643
        %v2658 = vpop.f32.mrb[0].mxu0
        %v2659 = vadd.f32 0.0, %v2658
        %v2660 = vpop.f32.mrb[0].mxu0
        %2661 = vmatprep.mubr.f32.mxu0 0.0
        %2662 = vmatmul.mubr.f32.gmra.mrb[0].mxu0 %v1645
        %v2663 = vpop.f32.mrb[0].mxu0
        %v2664 = vadd.f32 0.0, %v2663
        %v2665 = vpop.f32.mrb[0].mxu0
        %2666 = vmatprep.mubr.f32.mxu0 0.0
        %2667 = vmatmul.mubr.f32.gmra.mrb[0].mxu0 %v2448
        %v2668 = vpop.f32.mrb[0].mxu0
        %v2669 = vadd.f32 0.0, %v2668
        %v2670 = vpop.f32.mrb[0].mxu0
        %2671 = vmatprep.mubr.f32.mxu0 0.0
        %2672 = vmatmul.mubr.f32.gmra.mrb[0].mxu0 %v2450
        %v2673 = vpop.f32.mrb[0].mxu0
        %v2674 = vadd.f32 0.0, %v2673
        %v2675 = vpop.f32.mrb[0].mxu0
        %2676 = vdwg.mxu0
        %v2677 = vadd.f32 %v2407, %v2519
        %v2678 = vadd.f32 %v2408, %v2524
        %v2679 = vadd.f32 %v2409, %v2529
        %v2680 = vadd.f32 %v2410, %v2534
        %v2681 = vadd.f32 %v2411, %v2539
        %v2682 = vadd.f32 %v2412, %v2544
        %v2683 = vadd.f32 %v2413, %v2549
        %v2684 = vadd.f32 %v2414, %v2554
        %v2685 = vadd.f32 %v2415, %v2559
        %v2686 = vadd.f32 %v2416, %v2564
        %v2687 = vadd.f32 %v2417, %v2569
        %v2688 = vadd.f32 %v2418, %v2574
        %v2689 = vadd.f32 %v2419, %v2579
        %v2690 = vadd.f32 %v2420, %v2584
        %v2691 = vadd.f32 %v2421, %v2589
        %v2692 = vadd.f32 %v2422, %v2594
        %v2693 = vadd.f32 %v2423, %v2599
        %v2694 = vadd.f32 %v2424, %v2604
        %v2695 = vadd.f32 %v2425, %v2609
        %v2696 = vadd.f32 %v2426, %v2614
        %v2697 = vadd.f32 %v2427, %v2619
        %v2698 = vadd.f32 %v2428, %v2624
        %v2699 = vadd.f32 %v2429, %v2629
        %v2700 = vadd.f32 %v2430, %v2634
        %v2701 = vadd.f32 %v2431, %v2639
        %v2702 = vadd.f32 %v2432, %v2644
        %v2703 = vadd.f32 %v2433, %v2649
        %v2704 = vadd.f32 %v2434, %v2654
        %v2705 = vadd.f32 %v2435, %v2659
        %v2706 = vadd.f32 %v2436, %v2664
        %v2707 = vadd.f32 %v2437, %v2669
        %v2708 = vadd.f32 %v2438, %v2674
        %v2709 = vrot.slane %v247, 2
        %v2710 = vrot.slane %v248, 2
        %v2711 = vsel %vm963, %v2709, %v2710
        %v2712 = vrot.slane %v249, 2
        %v2713 = vsel %vm963, %v2710, %v2712
        %s2714 = scalar_lea.vmem %s1, 128
        %v2715 = vld [vmem:[%s2714] sm:$0xff]
        %v2716 = vld [vmem:[%s2714 + $0x8] sm:$0xff]
        %v2717 = vsel %vm384, %v2711, 0
        %v2719 = vsel %vm384, %v2713, 0
        %2721 = vmatprep.subr.mxu0 0.0
        %2722 = vmatpush1.msra.mxu0 %v2715
        %2723 = vmatprep.subr.mxu0 0.0
        %2724 = vmatpush1.msra.mxu0 %v2716
        %2725 = vmatprep.subr.mxu0 0.0
        %2726 = vmatpush1.msra.mxu0 0.0
        %2727 = vmatprep.subr.mxu0 0.0
        %2728 = vmatpush1.msra.mxu0 0.0
        %2729 = vmatprep.subr.mxu0 0.0
        %2730 = vmatpush1.msra.mxu0 0.0
        %2731 = vmatprep.subr.mxu0 0.0
        %2732 = vmatpush1.msra.mxu0 0.0
        %2733 = vmatprep.subr.mxu0 0.0
        %2734 = vmatpush1.msra.mxu0 0.0
        %2735 = vmatprep.subr.mxu0 0.0
        %2736 = vmatpush1.msra.mxu0 0.0
        %2737 = vmatprep.subr.mxu0 0.0
        %2738 = vmatpush1.msra.mxu0 0.0
        %2739 = vmatprep.subr.mxu0 0.0
        %2740 = vmatpush1.msra.mxu0 0.0
        %2741 = vmatprep.subr.mxu0 0.0
        %2742 = vmatpush1.msra.mxu0 0.0
        %2743 = vmatprep.subr.mxu0 0.0
        %2744 = vmatpush1.msra.mxu0 0.0
        %2745 = vmatprep.subr.mxu0 0.0
        %2746 = vmatpush1.msra.mxu0 0.0
        %2747 = vmatprep.subr.mxu0 0.0
        %2748 = vmatpush1.msra.mxu0 0.0
        %2749 = vmatprep.subr.mxu0 0.0
        %2750 = vmatpush1.msra.mxu0 0.0
        %2751 = vmatprep.subr.mxu0 0.0
        %2752 = vmatpush1.msra.mxu0 0.0
        %2753 = vmatprep.subr.mxu0 0.0
        %2754 = vmatpush1.msra.mxu0 0.0
        %2755 = vmatprep.subr.mxu0 0.0
        %2756 = vmatpush1.msra.mxu0 0.0
        %2757 = vmatprep.subr.mxu0 0.0
        %2758 = vmatpush1.msra.mxu0 0.0
        %2759 = vmatprep.subr.mxu0 0.0
        %2760 = vmatpush1.msra.mxu0 0.0
        %2761 = vmatprep.subr.mxu0 0.0
        %2762 = vmatpush1.msra.mxu0 0.0
        %2763 = vmatprep.subr.mxu0 0.0
        %2764 = vmatpush1.msra.mxu0 0.0
        %2765 = vmatprep.subr.mxu0 0.0
        %2766 = vmatpush1.msra.mxu0 0.0
        %2767 = vmatprep.subr.mxu0 0.0
        %2768 = vmatpush1.msra.mxu0 0.0
        %2769 = vmatprep.subr.mxu0 0.0
        %2770 = vmatpush1.msra.mxu0 0.0
        %2771 = vmatprep.subr.mxu0 0.0
        %2772 = vmatpush1.msra.mxu0 0.0
        %2773 = vmatprep.subr.mxu0 0.0
        %2774 = vmatpush1.msra.mxu0 0.0
        %2775 = vmatprep.subr.mxu0 0.0
        %2776 = vmatpush1.msra.mxu0 0.0
        %2777 = vmatprep.subr.mxu0 0.0
        %2778 = vmatpush1.msra.mxu0 0.0
        %2779 = vmatprep.subr.mxu0 0.0
        %2780 = vmatpush1.msra.mxu0 0.0
        %2781 = vmatprep.subr.mxu0 0.0
        %2782 = vmatpush1.msra.mxu0 0.0
        %2783 = vmatprep.subr.mxu0 0.0
        %2784 = vmatpush1.msra.mxu0 0.0
        %2785 = vmatprep.mubr.f32.mxu0 0.0
        %2786 = vmatmul.mubr.f32.gmra.mrb[0].mxu0 %v1055
        %v2787 = vpop.f32.mrb[0].mxu0
        %v2788 = vadd.f32 0.0, %v2787
        %v2789 = vpop.f32.mrb[0].mxu0
        %2790 = vmatprep.mubr.f32.mxu0 0.0
        %2791 = vmatmul.mubr.f32.gmra.mrb[0].mxu0 %v1057
        %v2792 = vpop.f32.mrb[0].mxu0
        %v2793 = vadd.f32 0.0, %v2792
        %v2794 = vpop.f32.mrb[0].mxu0
        %2795 = vmatprep.mubr.f32.mxu0 0.0
        %2796 = vmatmul.mubr.f32.gmra.mrb[0].mxu0 %v1059
        %v2797 = vpop.f32.mrb[0].mxu0
        %v2798 = vadd.f32 0.0, %v2797
        %v2799 = vpop.f32.mrb[0].mxu0
        %2800 = vmatprep.mubr.f32.mxu0 0.0
        %2801 = vmatmul.mubr.f32.gmra.mrb[0].mxu0 %v1061
        %v2802 = vpop.f32.mrb[0].mxu0
        %v2803 = vadd.f32 0.0, %v2802
        %v2804 = vpop.f32.mrb[0].mxu0
        %2805 = vmatprep.mubr.f32.mxu0 0.0
        %2806 = vmatmul.mubr.f32.gmra.mrb[0].mxu0 %v1063
        %v2807 = vpop.f32.mrb[0].mxu0
        %v2808 = vadd.f32 0.0, %v2807
        %v2809 = vpop.f32.mrb[0].mxu0
        %2810 = vmatprep.mubr.f32.mxu0 0.0
        %2811 = vmatmul.mubr.f32.gmra.mrb[0].mxu0 %v1065
        %v2812 = vpop.f32.mrb[0].mxu0
        %v2813 = vadd.f32 0.0, %v2812
        %v2814 = vpop.f32.mrb[0].mxu0
        %2815 = vmatprep.mubr.f32.mxu0 0.0
        %2816 = vmatmul.mubr.f32.gmra.mrb[0].mxu0 %v1067
        %v2817 = vpop.f32.mrb[0].mxu0
        %v2818 = vadd.f32 0.0, %v2817
        %v2819 = vpop.f32.mrb[0].mxu0
        %2820 = vmatprep.mubr.f32.mxu0 0.0
        %2821 = vmatmul.mubr.f32.gmra.mrb[0].mxu0 %v1069
        %v2822 = vpop.f32.mrb[0].mxu0
        %v2823 = vadd.f32 0.0, %v2822
        %v2824 = vpop.f32.mrb[0].mxu0
        %2825 = vmatprep.mubr.f32.mxu0 0.0
        %2826 = vmatmul.mubr.f32.gmra.mrb[0].mxu0 %v1071
        %v2827 = vpop.f32.mrb[0].mxu0
        %v2828 = vadd.f32 0.0, %v2827
        %v2829 = vpop.f32.mrb[0].mxu0
        %2830 = vmatprep.mubr.f32.mxu0 0.0
        %2831 = vmatmul.mubr.f32.gmra.mrb[0].mxu0 %v1073
        %v2832 = vpop.f32.mrb[0].mxu0
        %v2833 = vadd.f32 0.0, %v2832
        %v2834 = vpop.f32.mrb[0].mxu0
        %2835 = vmatprep.mubr.f32.mxu0 0.0
        %2836 = vmatmul.mubr.f32.gmra.mrb[0].mxu0 %v1075
        %v2837 = vpop.f32.mrb[0].mxu0
        %v2838 = vadd.f32 0.0, %v2837
        %v2839 = vpop.f32.mrb[0].mxu0
        %2840 = vmatprep.mubr.f32.mxu0 0.0
        %2841 = vmatmul.mubr.f32.gmra.mrb[0].mxu0 %v1077
        %v2842 = vpop.f32.mrb[0].mxu0
        %v2843 = vadd.f32 0.0, %v2842
        %v2844 = vpop.f32.mrb[0].mxu0
        %2845 = vmatprep.mubr.f32.mxu0 0.0
        %2846 = vmatmul.mubr.f32.gmra.mrb[0].mxu0 %v1079
        %v2847 = vpop.f32.mrb[0].mxu0
        %v2848 = vadd.f32 0.0, %v2847
        %v2849 = vpop.f32.mrb[0].mxu0
        %2850 = vmatprep.mubr.f32.mxu0 0.0
        %2851 = vmatmul.mubr.f32.gmra.mrb[0].mxu0 %v1081
        %v2852 = vpop.f32.mrb[0].mxu0
        %v2853 = vadd.f32 0.0, %v2852
        %v2854 = vpop.f32.mrb[0].mxu0
        %2855 = vmatprep.mubr.f32.mxu0 0.0
        %2856 = vmatmul.mubr.f32.gmra.mrb[0].mxu0 %v1083
        %v2857 = vpop.f32.mrb[0].mxu0
        %v2858 = vadd.f32 0.0, %v2857
        %v2859 = vpop.f32.mrb[0].mxu0
        %2860 = vmatprep.mubr.f32.mxu0 0.0
        %2861 = vmatmul.mubr.f32.gmra.mrb[0].mxu0 %v1085
        %v2862 = vpop.f32.mrb[0].mxu0
        %v2863 = vadd.f32 0.0, %v2862
        %v2864 = vpop.f32.mrb[0].mxu0
        %2865 = vmatprep.mubr.f32.mxu0 0.0
        %2866 = vmatmul.mubr.f32.gmra.mrb[0].mxu0 %v1087
        %v2867 = vpop.f32.mrb[0].mxu0
        %v2868 = vadd.f32 0.0, %v2867
        %v2869 = vpop.f32.mrb[0].mxu0
        %2870 = vmatprep.mubr.f32.mxu0 0.0
        %2871 = vmatmul.mubr.f32.gmra.mrb[0].mxu0 %v1089
        %v2872 = vpop.f32.mrb[0].mxu0
        %v2873 = vadd.f32 0.0, %v2872
        %v2874 = vpop.f32.mrb[0].mxu0
        %2875 = vmatprep.mubr.f32.mxu0 0.0
        %2876 = vmatmul.mubr.f32.gmra.mrb[0].mxu0 %v1091
        %v2877 = vpop.f32.mrb[0].mxu0
        %v2878 = vadd.f32 0.0, %v2877
        %v2879 = vpop.f32.mrb[0].mxu0
        %2880 = vmatprep.mubr.f32.mxu0 0.0
        %2881 = vmatmul.mubr.f32.gmra.mrb[0].mxu0 %v1093
        %v2882 = vpop.f32.mrb[0].mxu0
        %v2883 = vadd.f32 0.0, %v2882
        %v2884 = vpop.f32.mrb[0].mxu0
        %2885 = vmatprep.mubr.f32.mxu0 0.0
        %2886 = vmatmul.mubr.f32.gmra.mrb[0].mxu0 %v1095
        %v2887 = vpop.f32.mrb[0].mxu0
        %v2888 = vadd.f32 0.0, %v2887
        %v2889 = vpop.f32.mrb[0].mxu0
        %2890 = vmatprep.mubr.f32.mxu0 0.0
        %2891 = vmatmul.mubr.f32.gmra.mrb[0].mxu0 %v1097
        %v2892 = vpop.f32.mrb[0].mxu0
        %v2893 = vadd.f32 0.0, %v2892
        %v2894 = vpop.f32.mrb[0].mxu0
        %2895 = vmatprep.mubr.f32.mxu0 0.0
        %2896 = vmatmul.mubr.f32.gmra.mrb[0].mxu0 %v1099
        %v2897 = vpop.f32.mrb[0].mxu0
        %v2898 = vadd.f32 0.0, %v2897
        %v2899 = vpop.f32.mrb[0].mxu0
        %2900 = vmatprep.mubr.f32.mxu0 0.0
        %2901 = vmatmul.mubr.f32.gmra.mrb[0].mxu0 %v1101
        %v2902 = vpop.f32.mrb[0].mxu0
        %v2903 = vadd.f32 0.0, %v2902
        %v2904 = vpop.f32.mrb[0].mxu0
        %2905 = vmatprep.mubr.f32.mxu0 0.0
        %2906 = vmatmul.mubr.f32.gmra.mrb[0].mxu0 %v1103
        %v2907 = vpop.f32.mrb[0].mxu0
        %v2908 = vadd.f32 0.0, %v2907
        %v2909 = vpop.f32.mrb[0].mxu0
        %2910 = vmatprep.mubr.f32.mxu0 0.0
        %2911 = vmatmul.mubr.f32.gmra.mrb[0].mxu0 %v1105
        %v2912 = vpop.f32.mrb[0].mxu0
        %v2913 = vadd.f32 0.0, %v2912
        %v2914 = vpop.f32.mrb[0].mxu0
        %2915 = vmatprep.mubr.f32.mxu0 0.0
        %2916 = vmatmul.mubr.f32.gmra.mrb[0].mxu0 %v1107
        %v2917 = vpop.f32.mrb[0].mxu0
        %v2918 = vadd.f32 0.0, %v2917
        %v2919 = vpop.f32.mrb[0].mxu0
        %2920 = vmatprep.mubr.f32.mxu0 0.0
        %2921 = vmatmul.mubr.f32.gmra.mrb[0].mxu0 %v1109
        %v2922 = vpop.f32.mrb[0].mxu0
        %v2923 = vadd.f32 0.0, %v2922
        %v2924 = vpop.f32.mrb[0].mxu0
        %2925 = vmatprep.mubr.f32.mxu0 0.0
        %2926 = vmatmul.mubr.f32.gmra.mrb[0].mxu0 %v1912
        %v2927 = vpop.f32.mrb[0].mxu0
        %v2928 = vadd.f32 0.0, %v2927
        %v2929 = vpop.f32.mrb[0].mxu0
        %2930 = vmatprep.mubr.f32.mxu0 0.0
        %2931 = vmatmul.mubr.f32.gmra.mrb[0].mxu0 %v1914
        %v2932 = vpop.f32.mrb[0].mxu0
        %v2933 = vadd.f32 0.0, %v2932
        %v2934 = vpop.f32.mrb[0].mxu0
        %2935 = vmatprep.mubr.f32.mxu0 0.0
        %2936 = vmatmul.mubr.f32.gmra.mrb[0].mxu0 %v2717
        %v2937 = vpop.f32.mrb[0].mxu0
        %v2938 = vadd.f32 0.0, %v2937
        %v2939 = vpop.f32.mrb[0].mxu0
        %2940 = vmatprep.mubr.f32.mxu0 0.0
        %2941 = vmatmul.mubr.f32.gmra.mrb[0].mxu0 %v2719
        %v2942 = vpop.f32.mrb[0].mxu0
        %v2943 = vadd.f32 0.0, %v2942
        %v2944 = vpop.f32.mrb[0].mxu0
        %2945 = vdwg.mxu0
        %v2946 = vadd.f32 %v2677, %v2788
        %v2947 = vadd.f32 %v2678, %v2793
        %v2948 = vadd.f32 %v2679, %v2798
        %v2949 = vadd.f32 %v2680, %v2803
        %v2950 = vadd.f32 %v2681, %v2808
        %v2951 = vadd.f32 %v2682, %v2813
        %v2952 = vadd.f32 %v2683, %v2818
        %v2953 = vadd.f32 %v2684, %v2823
        %v2954 = vadd.f32 %v2685, %v2828
        %v2955 = vadd.f32 %v2686, %v2833
        %v2956 = vadd.f32 %v2687, %v2838
        %v2957 = vadd.f32 %v2688, %v2843
        %v2958 = vadd.f32 %v2689, %v2848
        %v2959 = vadd.f32 %v2690, %v2853
        %v2960 = vadd.f32 %v2691, %v2858
        %v2961 = vadd.f32 %v2692, %v2863
        %v2962 = vadd.f32 %v2693, %v2868
        %v2963 = vadd.f32 %v2694, %v2873
        %v2964 = vadd.f32 %v2695, %v2878
        %v2965 = vadd.f32 %v2696, %v2883
        %v2966 = vadd.f32 %v2697, %v2888
        %v2967 = vadd.f32 %v2698, %v2893
        %v2968 = vadd.f32 %v2699, %v2898
        %v2969 = vadd.f32 %v2700, %v2903
        %v2970 = vadd.f32 %v2701, %v2908
        %v2971 = vadd.f32 %v2702, %v2913
        %v2972 = vadd.f32 %v2703, %v2918
        %v2973 = vadd.f32 %v2704, %v2923
        %v2974 = vadd.f32 %v2705, %v2928
        %v2975 = vadd.f32 %v2706, %v2933
        %v2976 = vadd.f32 %v2707, %v2938
        %v2977 = vadd.f32 %v2708, %v2943
        %v2978 = vld [vmem:[%s2] sm:$0x1]
        %v2980 = vlaneseq
        %v2981 = vshrl.u32 %v2980, 7
        %v2982 = vsub.s32 0, %v2981
        %v2983 = vrot.slane %v2978, %v2982
        %v2985 = vmul.f32 %v2946, %v2983
        %v2986 = vmul.f32 %v2947, %v2983
        %v2987 = vmul.f32 %v2948, %v2983
        %v2988 = vmul.f32 %v2949, %v2983
        %v2989 = vmul.f32 %v2950, %v2983
        %v2990 = vmul.f32 %v2951, %v2983
        %v2991 = vmul.f32 %v2952, %v2983
        %v2992 = vmul.f32 %v2953, %v2983
        %v2993 = vmul.f32 %v2954, %v2983
        %v2994 = vmul.f32 %v2955, %v2983
        %v2995 = vmul.f32 %v2956, %v2983
        %v2996 = vmul.f32 %v2957, %v2983
        %v2997 = vmul.f32 %v2958, %v2983
        %v2998 = vmul.f32 %v2959, %v2983
        %v2999 = vmul.f32 %v2960, %v2983
        %v3000 = vmul.f32 %v2961, %v2983
        %v3001 = vmul.f32 %v2962, %v2983
        %v3002 = vmul.f32 %v2963, %v2983
        %v3003 = vmul.f32 %v2964, %v2983
        %v3004 = vmul.f32 %v2965, %v2983
        %v3005 = vmul.f32 %v2966, %v2983
        %v3006 = vmul.f32 %v2967, %v2983
        %v3007 = vmul.f32 %v2968, %v2983
        %v3008 = vmul.f32 %v2969, %v2983
        %v3009 = vmul.f32 %v2970, %v2983
        %v3010 = vmul.f32 %v2971, %v2983
        %v3011 = vmul.f32 %v2972, %v2983
        %v3012 = vmul.f32 %v2973, %v2983
        %v3013 = vmul.f32 %v2974, %v2983
        %v3014 = vmul.f32 %v2975, %v2983
        %v3015 = vmul.f32 %v2976, %v2983
        %v3016 = vmul.f32 %v2977, %v2983
        %v3017 = vld [vmem:[%s3] sm:$0x1]
        %v3019 = vlaneseq
        %v3020 = vshrl.u32 %v3019, 7
        %v3021 = vsub.s32 0, %v3020
        %v3022 = vrot.slane %v3017, %v3021
        %v3024 = vadd.f32 %v2985, %v3022
        %v3025 = vadd.f32 %v2986, %v3022
        %v3026 = vadd.f32 %v2987, %v3022
        %v3027 = vadd.f32 %v2988, %v3022
        %v3028 = vadd.f32 %v2989, %v3022
        %v3029 = vadd.f32 %v2990, %v3022
        %v3030 = vadd.f32 %v2991, %v3022
        %v3031 = vadd.f32 %v2992, %v3022
        %v3032 = vadd.f32 %v2993, %v3022
        %v3033 = vadd.f32 %v2994, %v3022
        %v3034 = vadd.f32 %v2995, %v3022
        %v3035 = vadd.f32 %v2996, %v3022
        %v3036 = vadd.f32 %v2997, %v3022
        %v3037 = vadd.f32 %v2998, %v3022
        %v3038 = vadd.f32 %v2999, %v3022
        %v3039 = vadd.f32 %v3000, %v3022
        %v3040 = vadd.f32 %v3001, %v3022
        %v3041 = vadd.f32 %v3002, %v3022
        %v3042 = vadd.f32 %v3003, %v3022
        %v3043 = vadd.f32 %v3004, %v3022
        %v3044 = vadd.f32 %v3005, %v3022
        %v3045 = vadd.f32 %v3006, %v3022
        %v3046 = vadd.f32 %v3007, %v3022
        %v3047 = vadd.f32 %v3008, %v3022
        %v3048 = vadd.f32 %v3009, %v3022
        %v3049 = vadd.f32 %v3010, %v3022
        %v3050 = vadd.f32 %v3011, %v3022
        %v3051 = vadd.f32 %v3012, %v3022
        %v3052 = vadd.f32 %v3013, %v3022
        %v3053 = vadd.f32 %v3014, %v3022
        %v3054 = vadd.f32 %v3015, %v3022
        %v3055 = vadd.f32 %v3016, %v3022
        %v3056 = vadd.f32 %v3024, 3.0
        %v3057 = vadd.f32 %v3025, 3.0
        %v3058 = vadd.f32 %v3026, 3.0
        %v3059 = vadd.f32 %v3027, 3.0
        %v3060 = vadd.f32 %v3028, 3.0
        %v3061 = vadd.f32 %v3029, 3.0
        %v3062 = vadd.f32 %v3030, 3.0
        %v3063 = vadd.f32 %v3031, 3.0
        %v3064 = vadd.f32 %v3032, 3.0
        %v3065 = vadd.f32 %v3033, 3.0
        %v3066 = vadd.f32 %v3034, 3.0
        %v3067 = vadd.f32 %v3035, 3.0
        %v3068 = vadd.f32 %v3036, 3.0
        %v3069 = vadd.f32 %v3037, 3.0
        %v3070 = vadd.f32 %v3038, 3.0
        %v3071 = vadd.f32 %v3039, 3.0
        %v3072 = vadd.f32 %v3040, 3.0
        %v3073 = vadd.f32 %v3041, 3.0
        %v3074 = vadd.f32 %v3042, 3.0
        %v3075 = vadd.f32 %v3043, 3.0
        %v3076 = vadd.f32 %v3044, 3.0
        %v3077 = vadd.f32 %v3045, 3.0
        %v3078 = vadd.f32 %v3046, 3.0
        %v3079 = vadd.f32 %v3047, 3.0
        %v3080 = vadd.f32 %v3048, 3.0
        %v3081 = vadd.f32 %v3049, 3.0
        %v3082 = vadd.f32 %v3050, 3.0
        %v3083 = vadd.f32 %v3051, 3.0
        %v3084 = vadd.f32 %v3052, 3.0
        %v3085 = vadd.f32 %v3053, 3.0
        %v3086 = vadd.f32 %v3054, 3.0
        %v3087 = vadd.f32 %v3055, 3.0
        %v3088 = vmax.f32 %v3056, 0.0
        %v3089 = vmax.f32 %v3057, 0.0
        %v3090 = vmax.f32 %v3058, 0.0
        %v3091 = vmax.f32 %v3059, 0.0
        %v3092 = vmax.f32 %v3060, 0.0
        %v3093 = vmax.f32 %v3061, 0.0
        %v3094 = vmax.f32 %v3062, 0.0
        %v3095 = vmax.f32 %v3063, 0.0
        %v3096 = vmax.f32 %v3064, 0.0
        %v3097 = vmax.f32 %v3065, 0.0
        %v3098 = vmax.f32 %v3066, 0.0
        %v3099 = vmax.f32 %v3067, 0.0
        %v3100 = vmax.f32 %v3068, 0.0
        %v3101 = vmax.f32 %v3069, 0.0
        %v3102 = vmax.f32 %v3070, 0.0
        %v3103 = vmax.f32 %v3071, 0.0
        %v3104 = vmax.f32 %v3072, 0.0
        %v3105 = vmax.f32 %v3073, 0.0
        %v3106 = vmax.f32 %v3074, 0.0
        %v3107 = vmax.f32 %v3075, 0.0
        %v3108 = vmax.f32 %v3076, 0.0
        %v3109 = vmax.f32 %v3077, 0.0
        %v3110 = vmax.f32 %v3078, 0.0
        %v3111 = vmax.f32 %v3079, 0.0
        %v3112 = vmax.f32 %v3080, 0.0
        %v3113 = vmax.f32 %v3081, 0.0
        %v3114 = vmax.f32 %v3082, 0.0
        %v3115 = vmax.f32 %v3083, 0.0
        %v3116 = vmax.f32 %v3084, 0.0
        %v3117 = vmax.f32 %v3085, 0.0
        %v3118 = vmax.f32 %v3086, 0.0
        %v3119 = vmax.f32 %v3087, 0.0
        %v3120 = vmin.f32 %v3088, 6.0
        %v3121 = vmin.f32 %v3089, 6.0
        %v3122 = vmin.f32 %v3090, 6.0
        %v3123 = vmin.f32 %v3091, 6.0
        %v3124 = vmin.f32 %v3092, 6.0
        %v3125 = vmin.f32 %v3093, 6.0
        %v3126 = vmin.f32 %v3094, 6.0
        %v3127 = vmin.f32 %v3095, 6.0
        %v3128 = vmin.f32 %v3096, 6.0
        %v3129 = vmin.f32 %v3097, 6.0
        %v3130 = vmin.f32 %v3098, 6.0
        %v3131 = vmin.f32 %v3099, 6.0
        %v3132 = vmin.f32 %v3100, 6.0
        %v3133 = vmin.f32 %v3101, 6.0
        %v3134 = vmin.f32 %v3102, 6.0
        %v3135 = vmin.f32 %v3103, 6.0
        %v3136 = vmin.f32 %v3104, 6.0
        %v3137 = vmin.f32 %v3105, 6.0
        %v3138 = vmin.f32 %v3106, 6.0
        %v3139 = vmin.f32 %v3107, 6.0
        %v3140 = vmin.f32 %v3108, 6.0
        %v3141 = vmin.f32 %v3109, 6.0
        %v3142 = vmin.f32 %v3110, 6.0
        %v3143 = vmin.f32 %v3111, 6.0
        %v3144 = vmin.f32 %v3112, 6.0
        %v3145 = vmin.f32 %v3113, 6.0
        %v3146 = vmin.f32 %v3114, 6.0
        %v3147 = vmin.f32 %v3115, 6.0
        %v3148 = vmin.f32 %v3116, 6.0
        %v3149 = vmin.f32 %v3117, 6.0
        %v3150 = vmin.f32 %v3118, 6.0
        %v3151 = vmin.f32 %v3119, 6.0
        %v3152 = vmul.f32 %v3024, %v3120
        %v3153 = vmul.f32 %v3025, %v3121
        %v3154 = vmul.f32 %v3026, %v3122
        %v3155 = vmul.f32 %v3027, %v3123
        %v3156 = vmul.f32 %v3028, %v3124
        %v3157 = vmul.f32 %v3029, %v3125
        %v3158 = vmul.f32 %v3030, %v3126
        %v3159 = vmul.f32 %v3031, %v3127
        %v3160 = vmul.f32 %v3032, %v3128
        %v3161 = vmul.f32 %v3033, %v3129
        %v3162 = vmul.f32 %v3034, %v3130
        %v3163 = vmul.f32 %v3035, %v3131
        %v3164 = vmul.f32 %v3036, %v3132
        %v3165 = vmul.f32 %v3037, %v3133
        %v3166 = vmul.f32 %v3038, %v3134
        %v3167 = vmul.f32 %v3039, %v3135
        %v3168 = vmul.f32 %v3040, %v3136
        %v3169 = vmul.f32 %v3041, %v3137
        %v3170 = vmul.f32 %v3042, %v3138
        %v3171 = vmul.f32 %v3043, %v3139
        %v3172 = vmul.f32 %v3044, %v3140
        %v3173 = vmul.f32 %v3045, %v3141
        %v3174 = vmul.f32 %v3046, %v3142
        %v3175 = vmul.f32 %v3047, %v3143
        %v3176 = vmul.f32 %v3048, %v3144
        %v3177 = vmul.f32 %v3049, %v3145
        %v3178 = vmul.f32 %v3050, %v3146
        %v3179 = vmul.f32 %v3051, %v3147
        %v3180 = vmul.f32 %v3052, %v3148
        %v3181 = vmul.f32 %v3053, %v3149
        %v3182 = vmul.f32 %v3054, %v3150
        %v3183 = vmul.f32 %v3055, %v3151
        %v3184 = vmul.f32 %v3152, 0.16666667
        %v3185 = vmul.f32 %v3153, 0.16666667
        %v3186 = vmul.f32 %v3154, 0.16666667
        %v3187 = vmul.f32 %v3155, 0.16666667
        %v3188 = vmul.f32 %v3156, 0.16666667
        %v3189 = vmul.f32 %v3157, 0.16666667
        %v3190 = vmul.f32 %v3158, 0.16666667
        %v3191 = vmul.f32 %v3159, 0.16666667
        %v3192 = vmul.f32 %v3160, 0.16666667
        %v3193 = vmul.f32 %v3161, 0.16666667
        %v3194 = vmul.f32 %v3162, 0.16666667
        %v3195 = vmul.f32 %v3163, 0.16666667
        %v3196 = vmul.f32 %v3164, 0.16666667
        %v3197 = vmul.f32 %v3165, 0.16666667
        %v3198 = vmul.f32 %v3166, 0.16666667
        %v3199 = vmul.f32 %v3167, 0.16666667
        %v3200 = vmul.f32 %v3168, 0.16666667
        %v3201 = vmul.f32 %v3169, 0.16666667
        %v3202 = vmul.f32 %v3170, 0.16666667
        %v3203 = vmul.f32 %v3171, 0.16666667
        %v3204 = vmul.f32 %v3172, 0.16666667
        %v3205 = vmul.f32 %v3173, 0.16666667
        %v3206 = vmul.f32 %v3174, 0.16666667
        %v3207 = vmul.f32 %v3175, 0.16666667
        %v3208 = vmul.f32 %v3176, 0.16666667
        %v3209 = vmul.f32 %v3177, 0.16666667
        %v3210 = vmul.f32 %v3178, 0.16666667
        %v3211 = vmul.f32 %v3179, 0.16666667
        %v3212 = vmul.f32 %v3180, 0.16666667
        %v3213 = vmul.f32 %v3181, 0.16666667
        %v3214 = vmul.f32 %v3182, 0.16666667
        %v3215 = vmul.f32 %v3183, 0.16666667
        %vm3216 = vcmask 261120
        %3217 = vst.msk [vmem:[%s190] sm:$0xff] %vm3216, %v3184
        %3218 = vst.msk [vmem:[%s190 + $0x8] sm:$0xff] %vm3216, %v3185
        %3219 = vst.msk [vmem:[%s190 + $0x10] sm:$0xff] %vm3216, %v3186
        %3220 = vst.msk [vmem:[%s190 + $0x18] sm:$0xff] %vm3216, %v3187
        %3221 = vst.msk [vmem:[%s190 + $0x20] sm:$0xff] %vm3216, %v3188
        %3222 = vst.msk [vmem:[%s190 + $0x28] sm:$0xff] %vm3216, %v3189
        %3223 = vst.msk [vmem:[%s190 + $0x30] sm:$0xff] %vm3216, %v3190
        %3224 = vst.msk [vmem:[%s190 + $0x38] sm:$0xff] %vm3216, %v3191
        %3225 = vst.msk [vmem:[%s190 + $0x40] sm:$0xff] %vm3216, %v3192
        %3226 = vst.msk [vmem:[%s190 + $0x48] sm:$0xff] %vm3216, %v3193
        %3227 = vst.msk [vmem:[%s190 + $0x50] sm:$0xff] %vm3216, %v3194
        %3228 = vst.msk [vmem:[%s190 + $0x58] sm:$0xff] %vm3216, %v3195
        %3229 = vst.msk [vmem:[%s190 + $0x60] sm:$0xff] %vm3216, %v3196
        %3230 = vst.msk [vmem:[%s190 + $0x68] sm:$0xff] %vm3216, %v3197
        %3231 = vst.msk [vmem:[%s190 + $0x70] sm:$0xff] %vm3216, %v3198
        %3232 = vst.msk [vmem:[%s190 + $0x78] sm:$0xff] %vm3216, %v3199
        %3233 = vst.msk [vmem:[%s190 + $0x80] sm:$0xff] %vm3216, %v3200
        %3234 = vst.msk [vmem:[%s190 + $0x88] sm:$0xff] %vm3216, %v3201
        %3235 = vst.msk [vmem:[%s190 + $0x90] sm:$0xff] %vm3216, %v3202
        %3236 = vst.msk [vmem:[%s190 + $0x98] sm:$0xff] %vm3216, %v3203
        %3237 = vst.msk [vmem:[%s190 + $0xa0] sm:$0xff] %vm3216, %v3204
        %3238 = vst.msk [vmem:[%s190 + $0xa8] sm:$0xff] %vm3216, %v3205
        %3239 = vst.msk [vmem:[%s190 + $0xb0] sm:$0xff] %vm3216, %v3206
        %3240 = vst.msk [vmem:[%s190 + $0xb8] sm:$0xff] %vm3216, %v3207
        %3241 = vst.msk [vmem:[%s190 + $0xc0] sm:$0xff] %vm3216, %v3208
        %3242 = vst.msk [vmem:[%s190 + $0xc8] sm:$0xff] %vm3216, %v3209
        %3243 = vst.msk [vmem:[%s190 + $0xd0] sm:$0xff] %vm3216, %v3210
        %3244 = vst.msk [vmem:[%s190 + $0xd8] sm:$0xff] %vm3216, %v3211
        %3245 = vst.msk [vmem:[%s190 + $0xe0] sm:$0xff] %vm3216, %v3212
        %3246 = vst.msk [vmem:[%s190 + $0xe8] sm:$0xff] %vm3216, %v3213
        %3247 = vst.msk [vmem:[%s190 + $0xf0] sm:$0xff] %vm3216, %v3214
        %3248 = vst.msk [vmem:[%s190 + $0xf8] sm:$0xff] %vm3216, %v3215
        %s3249 = sand.u32 %s115, 1
        %s3250 = scalar_lea.sflag [#allocation3], %s3249
        %s3251 = sand.u32 %s115, 1
        %s3252 = smul.addr %s3251, 256
        %s3253 = scalar_lea.vmem [#allocation2], %s3252
        // Predicated region
        $region37: #{tpu_custom_call.1} parent=35 // pred_check
          %p3254 = pneg %p125
        $region38: #{tpu_custom_call.1} parent=35 // pred_check_branch
          %3256 = sbr.rel (%p3254) target = $region40
        $region39: #{tpu_custom_call.1} parent=35 // pred_region
          %s3258 = ssub.s32 4096, 4096
          %3259 = vsyncadd %s3250, %s3258
          %s3260 = smul.addr %s18, 32
          %s3261 = smul.addr %s3260, 128
          %s3262 = scalar_lea.hbm %s4, %s3261
          %s3263 = sshll.u32 %s3253, 4
          %s3264 = int_to_ptr.vmem [resolvable:$true] %s3263
          %3269 = dma.vmem_to_hbm [thread:$0]  %s3264, 4096, %s3262, %s3250, 128, 128, 8
        $region40: #{tpu_custom_call.1} parent=35 // pred_fallthru
          _
      $region36: #{tpu_custom_call.1} parent=5 // pred_fallthru
        _
      %p3270 = scmp.le.s32.totalorder 2, %s13
      // Predicated region
      $region41: #{tpu_custom_call.1} parent=5 // pred_check
        %p3271 = pneg %p3270
      $region42: #{tpu_custom_call.1} parent=5 // pred_check_branch
        %3273 = sbr.rel (%p3271) target = $region44
      $region43: #{tpu_custom_call.1} parent=5 // pred_region
        %s3274 = ssub.s32 %s13, 2
        // Predicated region
        $region45: #{tpu_custom_call.1} parent=43 // pred_check
          %p3275 = pneg %p131
        $region46: #{tpu_custom_call.1} parent=43 // pred_check_branch
          %3277 = sbr.rel (%p3275) target = $region48
        $region47: #{tpu_custom_call.1} parent=43 // pred_region
          %s3278 = sand.u32 %s116, 1
          %s3279 = scalar_lea.sflag [#allocation3], %s3278
          %s3280 = sand.u32 %s116, 1
          %s3281 = smul.addr %s3280, 256
          %s3282 = scalar_lea.vmem [#allocation2], %s3281
          %3283 = dma.done %s3279, 4096
        $region48: #{tpu_custom_call.1} parent=43 // pred_fallthru
          _
      $region44: #{tpu_custom_call.1} parent=5 // pred_fallthru
        _
    $region6: #{tpu_custom_call.1} parent=1 // loop_footer
      %s17 = sadd.s32 1, %s13
    $region7: #{tpu_custom_call.1} parent=1 // loop_footer_branch
      %12 = sbr.rel target = $region3
    $region8: #{tpu_custom_call.1} parent=1 // loop_exit
      _
    %3284 = vsyncpa [#allocation3], 1
    %s3285 = scalar_lea.sflag [#allocation3], 1
    %3286 = vsyncpa %s3285, 1

</llo_original>
